<compile_context>
chip_gen: v5e
topology: v5e:2x2
jax: 0.10.0
libtpu: 0.0.40
codegen_flags: <defaults>
</compile_context>

<pallas_src>
import functools
import math

import jax
import jax.numpy as jnp
from jax import lax
from jax.experimental import pallas as pl
from jax.experimental.pallas import tpu as pltpu


def _lrba_kernel(x1_ref, w1t_ref, x2_ref, w2t_ref, v_ref,
                 alpha_ref, rep_ref, u1_scr, u2_scr,
                 *, lt, lc, tanh_dtype):
    """One (batch b, label-tile j) grid step.

    x1_ref : [P, d1]   pixel features of batch b (resident across j)
    w1t_ref: [d1, A]   linear1 weight, transposed (grid-constant)
    x2_ref : [Lt, d2]  label features of this tile
    w2t_ref: [d2, A]   linear2 weight, transposed (grid-constant)
    v_ref  : [1, A]    collapsed target_linear @ hidden_linear weight
    alpha_ref: [Lt, P] attention output tile
    rep_ref  : [Lt, d1] label_repr output tile
    u1_scr : [P, A]    f32 VMEM scratch holding the pixel projection of batch b
    u2_scr : [Lt, A]   f32 VMEM scratch holding the label projection of tile j
    """
    j = pl.program_id(1)

    # The pixel projection is shared by every label tile of this batch
    # element: compute it once (j == 0) and keep it resident in VMEM.
    @pl.when(j == 0)
    def _():
        u1_scr[...] = jnp.dot(x1_ref[...], w1t_ref[...],
                              preferred_element_type=jnp.float32)

    # Label projection for this tile, one full-height matmul:
    # [Lt, d2] @ [d2, A] -> [Lt, A] (f32).
    u2_scr[...] = jnp.dot(x2_ref[...], w2t_ref[...],
                          preferred_element_type=jnp.float32)

    # Logits + softmax, chunked over labels so the [lc, P, A] temporaries of
    # the multiply -> tanh -> (*v) -> reduce chain stay small regardless of Lt.
    # Softmax is row-wise over pixels, so each chunk is fully independent and
    # its alpha rows are stored directly into the output block.
    def chunk_body(c):
        off = pl.multiple_of(c * lc, lc)
        u1 = u1_scr[...]                              # [P, A]  f32
        v = v_ref[...]                                # [1, A]  f32
        u2_c = u2_scr[pl.ds(off, lc), :]              # [lc, A] f32
        prod = u2_c[:, None, :] * u1[None, :, :]      # [lc, P, A]
        th = jnp.tanh(prod.astype(tanh_dtype)).astype(jnp.float32)
        # t[l, p] = sum_a tanh(u1[p,a] * u2[l,a]) * v[a]
        # (bias contributions are constant per softmax row and cancel).
        t_c = jnp.sum(th * v[None, :, :], axis=-1)    # [lc, P]
        # Numerically-stable softmax over pixels (lane axis), in f32.
        m = jnp.max(t_c, axis=-1, keepdims=True)
        e = jnp.exp(t_c - m)
        s = jnp.sum(e, axis=-1, keepdims=True)
        alpha_ref[pl.ds(off, lc), :] = (e / s).astype(alpha_ref.dtype)

    n_chunks = lt // lc
    if n_chunks == 1:
        chunk_body(0)
    else:
        def body(c, carry):
            chunk_body(c)
            return carry
        lax.fori_loop(0, n_chunks, body, 0, unroll=(n_chunks <= 8))

    # label_repr tile = alpha @ x1 : [Lt, P] @ [P, d1] -> [Lt, d1] on the MXU,
    # done once at full tile height (alpha read back from the VMEM out block).
    alpha = alpha_ref[...]
    rep = jnp.dot(alpha.astype(x1_ref.dtype), x1_ref[...],
                  preferred_element_type=jnp.float32)
    rep_ref[...] = rep.astype(rep_ref.dtype)


@functools.partial(jax.jit,
                   static_argnames=("label_tile", "label_chunk", "tanh_in_bf16"))
def low_rank_bilinear_attention(x1, x2, w1, w2, wh, bh, wt, bt, *,
                                label_tile=128, label_chunk=8,
                                tanh_in_bf16=False):
    """Matches LowRankBilinearAttention.forward: returns (label_repr, alpha).

    x1: (B, P, dim1)   x2: (B, L, dim2)
    w1: (A, dim1)  w2: (A, dim2)  wh: (A, A)  bh: (A,)  wt: (1, A)  bt: (1,)
    """
    B, P, d1 = x1.shape
    Bx2, L, d2 = x2.shape
    A = w1.shape[0]
    assert Bx2 == B
    assert w1.shape == (A, d1)
    assert w2.shape == (A, d2)
    assert wh.shape == (A, A)
    assert wt.shape == (1, A)

    Lt = min(label_tile, L)
    assert L % Lt == 0, "num_labels must be divisible by the label tile"
    assert Lt % 8 == 0 or Lt == L, "label tile must be sublane aligned"

    Lc = min(label_chunk, Lt)
    assert Lt % Lc == 0, "label tile must be divisible by the label chunk"

    # Collapse target_linear ∘ hidden_linear (both affine in tanh(.)):
    #   t = tanh(.) @ (Wh.T @ wt.T) + (bh @ wt.T + bt)
    # The constant term shifts every logit of a softmax row equally, so it
    # does not change alpha (nor label_repr) and is dropped.
    v = (wt.astype(jnp.float32) @ wh.astype(jnp.float32)).reshape(1, A)

    w1t = w1.T      # (d1, A): kernel computes x1 @ w1t directly
    w2t = w2.T      # (d2, A)

    grid = (B, L // Lt)

    tanh_dtype = jnp.bfloat16 if tanh_in_bf16 else jnp.float32

    # VMEM budget: double-buffered inputs/outputs + persistent scratches +
    # headroom for the per-chunk temporaries.  Clamp to [32 MiB, 64 MiB] so it
    # is always within v7x's 64 MiB physical VMEM (v5e/v6e could go higher).
    resident_bytes = 4 * (
        2 * P * d1          # x1 block
        + 2 * d1 * A        # W1^T
        + 2 * Lt * d2       # x2 tile
        + 2 * d2 * A        # W2^T
        + 2 * A             # v
        + P * A             # u1 scratch
        + Lt * A            # u2 scratch
        + 2 * Lt * P        # alpha out block
        + 2 * Lt * d1       # rep out block
        + 4 * Lc * P * A    # chunk temporaries (headroom)
    )
    vmem_limit = int(min(max(32 * 1024 * 1024, 2 * resident_bytes),
                         64 * 1024 * 1024))

    # Advisory cost hint so XLA schedules surrounding ops sensibly.
    flops = int(2 * B * P * d1 * A + 2 * B * L * d2 * A
                + 3 * B * L * P * A + 2 * B * L * P * d1)
    transcendentals = int(B * L * P * A + B * L * P)
    bytes_accessed = int(4 * (x1.size + x2.size + w1t.size + w2t.size + v.size
                              + B * L * P + B * L * d1))

    kernel = functools.partial(_lrba_kernel, lt=Lt, lc=Lc,
                               tanh_dtype=tanh_dtype)

    alpha, label_repr = pl.pallas_call(
        kernel,
        out_shape=(
            jax.ShapeDtypeStruct((B, L, P), jnp.float32),    # alpha
            jax.ShapeDtypeStruct((B, L, d1), x1.dtype),      # label_repr
        ),
        grid_spec=pltpu.PrefetchScalarGridSpec(
            num_scalar_prefetch=0,
            grid=grid,
            in_specs=[
                pl.BlockSpec((None, P, d1), lambda b, j: (b, 0, 0)),   # x1
                pl.BlockSpec((d1, A), lambda b, j: (0, 0)),            # W1^T
                pl.BlockSpec((None, Lt, d2), lambda b, j: (b, j, 0)),  # x2 tile
                pl.BlockSpec((d2, A), lambda b, j: (0, 0)),            # W2^T
                pl.BlockSpec((1, A), lambda b, j: (0, 0)),             # v
            ],
            out_specs=(
                pl.BlockSpec((None, Lt, P), lambda b, j: (b, j, 0)),   # alpha
                pl.BlockSpec((None, Lt, d1), lambda b, j: (b, j, 0)),  # repr
            ),
            scratch_shapes=[
                pltpu.VMEM((P, A), jnp.float32),    # u1 (per-batch resident)
                pltpu.VMEM((Lt, A), jnp.float32),   # u2 (per-tile)
            ],
        ),
        compiler_params=pltpu.CompilerParams(
            dimension_semantics=("parallel", "arbitrary"),
            vmem_limit_bytes=vmem_limit,
        ),
        cost_estimate=pl.CostEstimate(
            flops=flops,
            transcendentals=transcendentals,
            bytes_accessed=bytes_accessed,
        ),
    )(x1, w1t, x2, w2t, v)

    return label_repr, alpha


def _reference(x1, x2, w1, w2, wh, bh, wt, bt):
    """Plain-JAX replica of the PyTorch module (full, un-collapsed math)."""
    hp = jax.lax.Precision.HIGHEST
    u1 = jnp.einsum("bpd,ad->bpa", x1, w1, precision=hp)           # linear1
    u2 = jnp.einsum("bld,ad->bla", x2, w2, precision=hp)           # linear2
    h = jnp.tanh(u1[:, None, :, :] * u2[:, :, None, :])            # (B,L,P,A)
    y = jnp.einsum("blpa,ka->blpk", h, wh, precision=hp) + bh      # hidden
    t = jnp.einsum("blpa,ka->blpk", y, wt, precision=hp)[..., 0] + bt[0]
    alpha = jax.nn.softmax(t, axis=-1)
    label_repr = jnp.einsum("blp,bpd->bld", alpha, x1, precision=hp)
    return label_repr, alpha


if __name__ == "__main__":
    # Small, lane-aligned shapes: batch=2, num_pixels=128, num_labels=16,
    # dim1=dim2=att_dim=128.
    B, P, L = 2, 128, 16
    dim1, dim2, att_dim = 128, 128, 128

    key = jax.random.PRNGKey(0)
    ks = jax.random.split(key, 8)
    x1 = jax.random.normal(ks[0], (B, P, dim1), dtype=jnp.float32)
    x2 = jax.random.normal(ks[1], (B, L, dim2), dtype=jnp.float32)
    w1 = jax.random.normal(ks[2], (att_dim, dim1), dtype=jnp.float32) / math.sqrt(dim1)
    w2 = jax.random.normal(ks[3], (att_dim, dim2), dtype=jnp.float32) / math.sqrt(dim2)
    wh = jax.random.normal(ks[4], (att_dim, att_dim), dtype=jnp.float32) / math.sqrt(att_dim)
    bh = jax.random.normal(ks[5], (att_dim,), dtype=jnp.float32) * 0.1
    wt = jax.random.normal(ks[6], (1, att_dim), dtype=jnp.float32) / math.sqrt(att_dim)
    bt = jax.random.normal(ks[7], (1,), dtype=jnp.float32) * 0.1

    label_repr, alpha = low_rank_bilinear_attention(x1, x2, w1, w2, wh, bh, wt, bt)
    label_repr, alpha = jax.block_until_ready((label_repr, alpha))

    ref_repr, ref_alpha = _reference(x1, x2, w1, w2, wh, bh, wt, bt)

    assert alpha.shape == (B, L, P) and label_repr.shape == (B, L, dim1)
    assert jnp.allclose(jnp.sum(alpha, axis=-1), 1.0, atol=1e-5)
    assert jnp.allclose(alpha, ref_alpha, atol=2e-4, rtol=2e-4), (
        "alpha max abs err", float(jnp.max(jnp.abs(alpha - ref_alpha))))
    assert jnp.allclose(label_repr, ref_repr, atol=2e-4, rtol=2e-4), (
        "repr max abs err", float(jnp.max(jnp.abs(label_repr - ref_repr))))

    print("KERNEL_OK")
</pallas_src>

<mosaic_0001>
module attributes {stable_mosaic.version = 11 : i64} {
  func.func @_lrba_kernel(%arg0: i32, %arg1: i32, %arg2: memref<1x128x128xf32, #tpu.memory_space<vmem>>, %arg3: memref<128x128xf32, #tpu.memory_space<vmem>>, %arg4: memref<1x16x128xf32, #tpu.memory_space<vmem>>, %arg5: memref<128x128xf32, #tpu.memory_space<vmem>>, %arg6: memref<1x128xf32, #tpu.memory_space<vmem>>, %arg7: memref<1x16x128xf32, #tpu.memory_space<vmem>>, %arg8: memref<1x16x128xf32, #tpu.memory_space<vmem>>, %arg9: memref<128x128xf32, #tpu.memory_space<vmem>>, %arg10: memref<16x128xf32, #tpu.memory_space<vmem>>) attributes {dimension_semantics = [#tpu.dimension_semantics<parallel>, #tpu.dimension_semantics<arbitrary>], iteration_bounds = array<i64: 2, 1>, scalar_prefetch = 0 : i64, scratch_operands = 2 : i64, tpu.core_type = #tpu.core_type<tc>, window_params = [{transform_indices = @transform_0, window_bounds = array<i64: 1, 128, 128>}, {pipeline_mode = #tpu.pipeline_mode<synchronous>, transform_indices = @transform_1, window_bounds = array<i64: 128, 128>}, {transform_indices = @transform_2, window_bounds = array<i64: 1, 16, 128>}, {pipeline_mode = #tpu.pipeline_mode<synchronous>, transform_indices = @transform_3, window_bounds = array<i64: 128, 128>}, {pipeline_mode = #tpu.pipeline_mode<synchronous>, transform_indices = @transform_4, window_bounds = array<i64: 1, 128>}, {transform_indices = @transform_5, window_bounds = array<i64: 1, 16, 128>}, {transform_indices = @transform_6, window_bounds = array<i64: 1, 16, 128>}]} {
    %c0_i32 = arith.constant 0 : i32
    %0 = arith.cmpi eq, %arg1, %c0_i32 : i32
    %1 = arith.extui %0 : i1 to i32
    %c0_i32_0 = arith.constant 0 : i32
    %2 = arith.cmpi ne, %1, %c0_i32_0 : i32
    scf.if %2 {
      %c0_39 = arith.constant 0 : index
      %c0_40 = arith.constant 0 : index
      %c0_41 = arith.constant 0 : index
      %74 = vector.load %arg2[%c0_39, %c0_40, %c0_41] : memref<1x128x128xf32, #tpu.memory_space<vmem>>, vector<1x128x128xf32>
      %75 = vector.shape_cast %74 : vector<1x128x128xf32> to vector<128x128xf32>
      %c0_42 = arith.constant 0 : index
      %c0_43 = arith.constant 0 : index
      %76 = vector.load %arg3[%c0_42, %c0_43] : memref<128x128xf32, #tpu.memory_space<vmem>>, vector<128x128xf32>
      %cst_44 = arith.constant dense<0.000000e+00> : vector<128x128xf32>
      %77 = tpu.matmul %75, %76, %cst_44 {dimension_numbers = #tpu.dot_dimension_numbers<[1], [0], [0], [1], [0, 0, 1, 1], [], []>} : vector<128x128xf32>, vector<128x128xf32>, vector<128x128xf32> -> vector<128x128xf32>
      %c0_45 = arith.constant 0 : index
      %c0_46 = arith.constant 0 : index
      %78 = vector.load %arg9[%c0_45, %c0_46] : memref<128x128xf32, #tpu.memory_space<vmem>>, vector<128x128xf32>
      tpu.vector_store %arg9[%c0_45, %c0_46], %77 {strides = array<i32>} : memref<128x128xf32, #tpu.memory_space<vmem>>, vector<128x128xf32>,
    } else {
    }
    %c0 = arith.constant 0 : index
    %c0_1 = arith.constant 0 : index
    %c0_2 = arith.constant 0 : index
    %3 = vector.load %arg4[%c0, %c0_1, %c0_2] : memref<1x16x128xf32, #tpu.memory_space<vmem>>, vector<1x16x128xf32>
    %4 = vector.shape_cast %3 : vector<1x16x128xf32> to vector<16x128xf32>
    %c0_3 = arith.constant 0 : index
    %c0_4 = arith.constant 0 : index
    %5 = vector.load %arg5[%c0_3, %c0_4] : memref<128x128xf32, #tpu.memory_space<vmem>>, vector<128x128xf32>
    %cst = arith.constant dense<0.000000e+00> : vector<16x128xf32>
    %6 = tpu.matmul %4, %5, %cst {dimension_numbers = #tpu.dot_dimension_numbers<[1], [0], [0], [1], [0, 0, 1, 1], [], []>} : vector<16x128xf32>, vector<128x128xf32>, vector<16x128xf32> -> vector<16x128xf32>
    %c0_5 = arith.constant 0 : index
    %c0_6 = arith.constant 0 : index
    %7 = vector.load %arg10[%c0_5, %c0_6] : memref<16x128xf32, #tpu.memory_space<vmem>>, vector<16x128xf32>
    tpu.vector_store %arg10[%c0_5, %c0_6], %6 {strides = array<i32>} : memref<16x128xf32, #tpu.memory_space<vmem>>, vector<16x128xf32>,
    %c0_i32_7 = arith.constant 0 : i32
    %c8_i32 = arith.constant 8 : i32
    %8 = arith.muli %c0_i32_7, %c8_i32 : i32
    %9 = tpu.assume_multiple %8, 8 : i32
    %c0_8 = arith.constant 0 : index
    %c0_9 = arith.constant 0 : index
    %10 = vector.load %arg9[%c0_8, %c0_9] : memref<128x128xf32, #tpu.memory_space<vmem>>, vector<128x128xf32>
    %c0_10 = arith.constant 0 : index
    %c0_11 = arith.constant 0 : index
    %11 = vector.load %arg6[%c0_10, %c0_11] : memref<1x128xf32, #tpu.memory_space<vmem>>, vector<1x128xf32>
    %12 = arith.index_cast %9 : i32 to index
    %c0_12 = arith.constant 0 : index
    %13 = vector.load %arg10[%12, %c0_12] : memref<16x128xf32, #tpu.memory_space<vmem>>, vector<8x128xf32>
    %14 = vector.shape_cast %13 : vector<8x128xf32> to vector<8x1x128xf32>
    %15 = vector.shape_cast %10 : vector<128x128xf32> to vector<1x128x128xf32>
    %16 = vector.broadcast %14 : vector<8x1x128xf32> to vector<8x128x128xf32>
    %17 = vector.broadcast %15 : vector<1x128x128xf32> to vector<8x128x128xf32>
    %18 = arith.mulf %16, %17 : vector<8x128x128xf32>
    %19 = math.tanh %18 : vector<8x128x128xf32>
    %20 = vector.shape_cast %11 : vector<1x128xf32> to vector<1x1x128xf32>
    %21 = vector.broadcast %20 : vector<1x1x128xf32> to vector<8x128x128xf32>
    %22 = arith.mulf %19, %21 : vector<8x128x128xf32>
    %cst_13 = arith.constant dense<0.000000e+00> : vector<8x128xf32>
    %23 = vector.multi_reduction <add>, %22, %cst_13 [2] : vector<8x128x128xf32> to vector<8x128xf32>
    %cst_14 = arith.constant dense<0xFF800000> : vector<8xf32>
    %24 = vector.multi_reduction <maximumf>, %23, %cst_14 [1] : vector<8x128xf32> to vector<8xf32>
    %25 = vector.shape_cast %24 : vector<8xf32> to vector<8x1xf32>
    %26 = vector.broadcast %25 : vector<8x1xf32> to vector<8x128xf32>
    %27 = arith.subf %23, %26 : vector<8x128xf32>
    %28 = math.exp %27 : vector<8x128xf32>
    %cst_15 = arith.constant dense<0.000000e+00> : vector<8xf32>
    %29 = vector.multi_reduction <add>, %28, %cst_15 [1] : vector<8x128xf32> to vector<8xf32>
    %30 = vector.shape_cast %29 : vector<8xf32> to vector<8x1xf32>
    %31 = vector.broadcast %30 : vector<8x1xf32> to vector<8x128xf32>
    %32 = arith.divf %28, %31 : vector<8x128xf32>
    %c0_16 = arith.constant 0 : index
    %33 = arith.index_cast %9 : i32 to index
    %c0_17 = arith.constant 0 : index
    %34 = vector.load %arg7[%c0_16, %33, %c0_17] : memref<1x16x128xf32, #tpu.memory_space<vmem>>, vector<1x8x128xf32>
    %35 = vector.shape_cast %34 : vector<1x8x128xf32> to vector<8x128xf32>
    %36 = vector.shape_cast %32 : vector<8x128xf32> to vector<1x8x128xf32>
    tpu.vector_store %arg7[%c0_16, %33, %c0_17], %36 {strides = array<i32>} : memref<1x16x128xf32, #tpu.memory_space<vmem>>, vector<1x8x128xf32>,
    %c1_i32 = arith.constant 1 : i32
    %c8_i32_18 = arith.constant 8 : i32
    %37 = arith.muli %c1_i32, %c8_i32_18 : i32
    %38 = tpu.assume_multiple %37, 8 : i32
    %c0_19 = arith.constant 0 : index
    %c0_20 = arith.constant 0 : index
    %39 = vector.load %arg9[%c0_19, %c0_20] : memref<128x128xf32, #tpu.memory_space<vmem>>, vector<128x128xf32>
    %c0_21 = arith.constant 0 : index
    %c0_22 = arith.constant 0 : index
    %40 = vector.load %arg6[%c0_21, %c0_22] : memref<1x128xf32, #tpu.memory_space<vmem>>, vector<1x128xf32>
    %41 = arith.index_cast %38 : i32 to index
    %c0_23 = arith.constant 0 : index
    %42 = vector.load %arg10[%41, %c0_23] : memref<16x128xf32, #tpu.memory_space<vmem>>, vector<8x128xf32>
    %43 = vector.shape_cast %42 : vector<8x128xf32> to vector<8x1x128xf32>
    %44 = vector.shape_cast %39 : vector<128x128xf32> to vector<1x128x128xf32>
    %45 = vector.broadcast %43 : vector<8x1x128xf32> to vector<8x128x128xf32>
    %46 = vector.broadcast %44 : vector<1x128x128xf32> to vector<8x128x128xf32>
    %47 = arith.mulf %45, %46 : vector<8x128x128xf32>
    %48 = math.tanh %47 : vector<8x128x128xf32>
    %49 = vector.shape_cast %40 : vector<1x128xf32> to vector<1x1x128xf32>
    %50 = vector.broadcast %49 : vector<1x1x128xf32> to vector<8x128x128xf32>
    %51 = arith.mulf %48, %50 : vector<8x128x128xf32>
    %cst_24 = arith.constant dense<0.000000e+00> : vector<8x128xf32>
    %52 = vector.multi_reduction <add>, %51, %cst_24 [2] : vector<8x128x128xf32> to vector<8x128xf32>
    %cst_25 = arith.constant dense<0xFF800000> : vector<8xf32>
    %53 = vector.multi_reduction <maximumf>, %52, %cst_25 [1] : vector<8x128xf32> to vector<8xf32>
    %54 = vector.shape_cast %53 : vector<8xf32> to vector<8x1xf32>
    %55 = vector.broadcast %54 : vector<8x1xf32> to vector<8x128xf32>
    %56 = arith.subf %52, %55 : vector<8x128xf32>
    %57 = math.exp %56 : vector<8x128xf32>
    %cst_26 = arith.constant dense<0.000000e+00> : vector<8xf32>
    %58 = vector.multi_reduction <add>, %57, %cst_26 [1] : vector<8x128xf32> to vector<8xf32>
    %59 = vector.shape_cast %58 : vector<8xf32> to vector<8x1xf32>
    %60 = vector.broadcast %59 : vector<8x1xf32> to vector<8x128xf32>
    %61 = arith.divf %57, %60 : vector<8x128xf32>
    %c0_27 = arith.constant 0 : index
    %62 = arith.index_cast %38 : i32 to index
    %c0_28 = arith.constant 0 : index
    %63 = vector.load %arg7[%c0_27, %62, %c0_28] : memref<1x16x128xf32, #tpu.memory_space<vmem>>, vector<1x8x128xf32>
    %64 = vector.shape_cast %63 : vector<1x8x128xf32> to vector<8x128xf32>
    %65 = vector.shape_cast %61 : vector<8x128xf32> to vector<1x8x128xf32>
    tpu.vector_store %arg7[%c0_27, %62, %c0_28], %65 {strides = array<i32>} : memref<1x16x128xf32, #tpu.memory_space<vmem>>, vector<1x8x128xf32>,
    %c2_i32 = arith.constant 2 : i32
    %c0_29 = arith.constant 0 : index
    %c0_30 = arith.constant 0 : index
    %c0_31 = arith.constant 0 : index
    %66 = vector.load %arg7[%c0_29, %c0_30, %c0_31] : memref<1x16x128xf32, #tpu.memory_space<vmem>>, vector<1x16x128xf32>
    %67 = vector.shape_cast %66 : vector<1x16x128xf32> to vector<16x128xf32>
    %c0_32 = arith.constant 0 : index
    %c0_33 = arith.constant 0 : index
    %c0_34 = arith.constant 0 : index
    %68 = vector.load %arg2[%c0_32, %c0_33, %c0_34] : memref<1x128x128xf32, #tpu.memory_space<vmem>>, vector<1x128x128xf32>
    %69 = vector.shape_cast %68 : vector<1x128x128xf32> to vector<128x128xf32>
    %cst_35 = arith.constant dense<0.000000e+00> : vector<16x128xf32>
    %70 = tpu.matmul %67, %69, %cst_35 {dimension_numbers = #tpu.dot_dimension_numbers<[1], [0], [0], [1], [0, 0, 1, 1], [], []>} : vector<16x128xf32>, vector<128x128xf32>, vector<16x128xf32> -> vector<16x128xf32>
    %c0_36 = arith.constant 0 : index
    %c0_37 = arith.constant 0 : index
    %c0_38 = arith.constant 0 : index
    %71 = vector.load %arg8[%c0_36, %c0_37, %c0_38] : memref<1x16x128xf32, #tpu.memory_space<vmem>>, vector<1x16x128xf32>
    %72 = vector.shape_cast %71 : vector<1x16x128xf32> to vector<16x128xf32>
    %73 = vector.shape_cast %70 : vector<16x128xf32> to vector<1x16x128xf32>
    tpu.vector_store %arg8[%c0_36, %c0_37, %c0_38], %73 {strides = array<i32>} : memref<1x16x128xf32, #tpu.memory_space<vmem>>, vector<1x16x128xf32>,
    return
  }
  func.func @transform_0(%arg0: i32, %arg1: i32) -> (i32, i32, i32) {
    %c0_i32 = arith.constant 0 : i32
    %c0_i32_0 = arith.constant 0 : i32
    %c0_i32_1 = arith.constant 0 : i32
    return %arg0, %c0_i32, %c0_i32_0 : i32, i32, i32
  }
  func.func @transform_1(%arg0: i32, %arg1: i32) -> (i32, i32) {
    %c0_i32 = arith.constant 0 : i32
    %c0_i32_0 = arith.constant 0 : i32
    %c0_i32_1 = arith.constant 0 : i32
    return %c0_i32, %c0_i32_0 : i32, i32
  }
  func.func @transform_2(%arg0: i32, %arg1: i32) -> (i32, i32, i32) {
    %c0_i32 = arith.constant 0 : i32
    %c0_i32_0 = arith.constant 0 : i32
    return %arg0, %arg1, %c0_i32 : i32, i32, i32
  }
  func.func @transform_3(%arg0: i32, %arg1: i32) -> (i32, i32) {
    %c0_i32 = arith.constant 0 : i32
    %c0_i32_0 = arith.constant 0 : i32
    %c0_i32_1 = arith.constant 0 : i32
    return %c0_i32, %c0_i32_0 : i32, i32
  }
  func.func @transform_4(%arg0: i32, %arg1: i32) -> (i32, i32) {
    %c0_i32 = arith.constant 0 : i32
    %c0_i32_0 = arith.constant 0 : i32
    %c0_i32_1 = arith.constant 0 : i32
    return %c0_i32, %c0_i32_0 : i32, i32
  }
  func.func @transform_5(%arg0: i32, %arg1: i32) -> (i32, i32, i32) {
    %c0_i32 = arith.constant 0 : i32
    %c0_i32_0 = arith.constant 0 : i32
    return %arg0, %arg1, %c0_i32 : i32, i32, i32
  }
  func.func @transform_6(%arg0: i32, %arg1: i32) -> (i32, i32, i32) {
    %c0_i32 = arith.constant 0 : i32
    %c0_i32_0 = arith.constant 0 : i32
    return %arg0, %arg1, %c0_i32 : i32, i32, i32
  }
}

</mosaic_0001>

<llo_original>
// kernel: low_rank_bilinear_attention.1
$region0: #{low_rank_bilinear_attention.1}
  #allocation0 [shape = 'u32[]', space=smem, size = 0x4, offset = 0x4, fixed_abs, tag = 'smem constant byte address 0x4 - core index']
  #allocation1 [shape = 'u32[72,128]{1,0:T(1,128)}', space=vmem, size = 0x9000, scoped, tag = 'internal scratch']
  #allocation2 [shape = 'f32[128,128]{1,0:T(8,128)}', space=vmem, size = 0x10000, scoped, tag = 'scratch operand']
  #allocation3 [shape = 'f32[16,128]{1,0:T(8,128)}', space=vmem, size = 0x2000, scoped, tag = 'scratch operand']
  %s0 = inlined_call_operand.vmem [shape: f32[2,128,128], index: 0, kind: input, shape index: {}]
  %s1 = inlined_call_operand.vmem [shape: f32[128,128], index: 1, kind: input, shape index: {}]
  %s2 = inlined_call_operand.vmem [shape: f32[2,16,128], index: 2, kind: input, shape index: {}]
  %s3 = inlined_call_operand.vmem [shape: f32[128,128], index: 3, kind: input, shape index: {}]
  %s4 = inlined_call_operand.vmem [shape: f32[1,128], index: 4, kind: input, shape index: {}]
  %s5 = inlined_call_operand.hbm [shape: f32[2,16,128], index: 5, kind: output, shape index: {0}]
  %s6 = inlined_call_operand.hbm [shape: f32[2,16,128], index: 6, kind: output, shape index: {1}]
  %7 = xla_tuple %s5, %s6
  %s8 = sld [smem:[#allocation0]]
  $region65: #{low_rank_bilinear_attention.1} parent=0
    _
  %s10 = ssub.s32 1, %s8
  %s11 = scalar_select 0, %s10, %s8
  $region1: #{low_rank_bilinear_attention.1} parent=0
    #allocation4 [shape = 'u8[16384]{0}', space=vmem, size = 0x4000, scoped, tag = 'output window, operand 0']
    #allocation5 [shape = 's32[2]{0}', space=sflag, size = 0x8, scoped, tag = 'scoped memory for low_rank_bilinear_attention.1']
    #allocation6 [shape = 'u8[16384]{0}', space=vmem, size = 0x4000, scoped, tag = 'output window, operand 1']
    #allocation7 [shape = 's32[2]{0}', space=sflag, size = 0x8, scoped, tag = 'scoped memory for low_rank_bilinear_attention.1']
    %12 = vsyncpa [#allocation5], 0
    %s13 = scalar_lea.sflag [#allocation5], 1
    %14 = vsyncpa %s13, 0
    %15 = vsyncpa [#allocation7], 0
    %s16 = scalar_lea.sflag [#allocation7], 1
    %17 = vsyncpa %s16, 0
    loop: start=0, step=1, limit=4
    $region2: #{low_rank_bilinear_attention.1} parent=1 // loop_pre_header
      _
    $region3: #{low_rank_bilinear_attention.1} parent=1 // loop_header
      %s19 = sphi 0, %s23
      %p20 = scmp.ge.s32.totalorder %s19, 4
      %s26 = sphi 0, %s38
      %s27 = sphi 0, %s34
      %s28 = sphi 0, %s26
      %s29 = sphi 0, %s27
      %s30 = sphi 0, %s28
      %s31 = sphi 0, %s29
      %s41 = sphi 0, %s43
      %s44 = sphi 0, %s41
      %s45 = sphi 0, %s44
      %s61 = sphi 0, %s45
      %s65 = sphi 0, %s65
      %s67 = sphi 0, %s65
      %s68 = sphi 0, %s67
      %s82 = sphi 0, %s68
      %s90 = sphi 0, %s92
      %s93 = sphi 0, %s90
      %s94 = sphi 0, %s93
      %s110 = sphi 0, %s94
      %s114 = sphi 0, %s114
      %s116 = sphi 0, %s114
      %s117 = sphi 0, %s116
      %s131 = sphi 0, %s117
      %s135 = sphi 0, %s135
      %s137 = sphi 0, %s135
      %s138 = sphi 0, %s137
      %s152 = sphi 0, %s138
      %s160 = sphi 0, %s162
      %s163 = sphi 0, %s160
      %s164 = sphi 0, %s163
      %s180 = sphi 0, %s164
      %s188 = sphi 0, %s190
      %s191 = sphi 0, %s188
      %s192 = sphi 0, %s191
      %s208 = sphi 0, %s192
    $region4: #{low_rank_bilinear_attention.1} parent=1 // loop_header_branch
      %22 = sbr.rel (%p20) target = $region8
    $region5: #{low_rank_bilinear_attention.1} parent=1 // loop_body
      %s24 = ssub.s32 %s19, 1
      %s25 = ssub.s32 %s19, 2
      %s32 = sadd.s32 1, %s27
      %p33 = scmp.ge.s32.totalorder %s32, 1
      %s34 = scalar_select %p33, 0, %s32
      %s35 = sadd.s32 1, %s26
      %s36 = scalar_select %p33, %s35, %s26
      %p37 = scmp.ge.s32.totalorder %s36, 2
      %s38 = scalar_select %p37, 0, %s36
      %s39 = ssub.s32 %s26, %s38
      %p40 = scmp.eq.s32.totalorder %s39, 0
      %s42 = sadd.s32 %s41, 1
      %s43 = scalar_select %p40, %s41, %s42
      %p46 = pneg %p40
      %p47 = scmp.eq.s32.totalorder %s19, 1
      %p48 = por %p46, %p47
      %p49 = scmp.ne.s32.totalorder %s41, %s44
      %p50 = scmp.eq.s32.totalorder %s19, 0
      %p51 = por %p49, %p50
      %p52 = scmp.ne.s32.totalorder %s41, %s44
      %p53 = scmp.eq.s32.totalorder %s24, 1
      %p54 = por %p52, %p53
      %p55 = scmp.ne.s32.totalorder %s44, %s45
      %p56 = scmp.eq.s32.totalorder %s24, 0
      %p57 = por %p55, %p56
      %p58 = scmp.ne.s32.totalorder %s44, %s45
      %p59 = scmp.eq.s32.totalorder %s25, 1
      %p60 = por %p58, %p59
      %p62 = scmp.ne.s32.totalorder %s45, %s61
      %p63 = scmp.eq.s32.totalorder %s25, 0
      %p64 = por %p62, %p63
      %s66 = sadd.s32 %s65, 1
      %p69 = scmp.eq.s32.totalorder %s19, 1
      %p70 = scmp.ne.s32.totalorder %s65, %s67
      %p71 = scmp.eq.s32.totalorder %s19, 0
      %p72 = por %p70, %p71
      %p73 = scmp.ne.s32.totalorder %s65, %s67
      %p74 = scmp.eq.s32.totalorder %s24, 1
      %p75 = por %p73, %p74
      %p76 = scmp.ne.s32.totalorder %s67, %s68
      %p77 = scmp.eq.s32.totalorder %s24, 0
      %p78 = por %p76, %p77
      %p79 = scmp.ne.s32.totalorder %s67, %s68
      %p80 = scmp.eq.s32.totalorder %s25, 1
      %p81 = por %p79, %p80
      %p83 = scmp.ne.s32.totalorder %s68, %s82
      %p84 = scmp.eq.s32.totalorder %s25, 0
      %p85 = por %p83, %p84
      %s86 = ssub.s32 %s26, %s38
      %s87 = ssub.s32 %s27, %s34
      %s88 = sor.u32 %s86, %s87
      %p89 = scmp.eq.s32.totalorder %s88, 0
      %s91 = sadd.s32 %s90, 1
      %s92 = scalar_select %p89, %s90, %s91
      %p95 = pneg %p89
      %p96 = scmp.eq.s32.totalorder %s19, 1
      %p97 = por %p95, %p96
      %p98 = scmp.ne.s32.totalorder %s90, %s93
      %p99 = scmp.eq.s32.totalorder %s19, 0
      %p100 = por %p98, %p99
      %p101 = scmp.ne.s32.totalorder %s90, %s93
      %p102 = scmp.eq.s32.totalorder %s24, 1
      %p103 = por %p101, %p102
      %p104 = scmp.ne.s32.totalorder %s93, %s94
      %p105 = scmp.eq.s32.totalorder %s24, 0
      %p106 = por %p104, %p105
      %p107 = scmp.ne.s32.totalorder %s93, %s94
      %p108 = scmp.eq.s32.totalorder %s25, 1
      %p109 = por %p107, %p108
      %p111 = scmp.ne.s32.totalorder %s94, %s110
      %p112 = scmp.eq.s32.totalorder %s25, 0
      %p113 = por %p111, %p112
      %s115 = sadd.s32 %s114, 1
      %p118 = scmp.eq.s32.totalorder %s19, 1
      %p119 = scmp.ne.s32.totalorder %s114, %s116
      %p120 = scmp.eq.s32.totalorder %s19, 0
      %p121 = por %p119, %p120
      %p122 = scmp.ne.s32.totalorder %s114, %s116
      %p123 = scmp.eq.s32.totalorder %s24, 1
      %p124 = por %p122, %p123
      %p125 = scmp.ne.s32.totalorder %s116, %s117
      %p126 = scmp.eq.s32.totalorder %s24, 0
      %p127 = por %p125, %p126
      %p128 = scmp.ne.s32.totalorder %s116, %s117
      %p129 = scmp.eq.s32.totalorder %s25, 1
      %p130 = por %p128, %p129
      %p132 = scmp.ne.s32.totalorder %s117, %s131
      %p133 = scmp.eq.s32.totalorder %s25, 0
      %p134 = por %p132, %p133
      %s136 = sadd.s32 %s135, 1
      %p139 = scmp.eq.s32.totalorder %s19, 1
      %p140 = scmp.ne.s32.totalorder %s135, %s137
      %p141 = scmp.eq.s32.totalorder %s19, 0
      %p142 = por %p140, %p141
      %p143 = scmp.ne.s32.totalorder %s135, %s137
      %p144 = scmp.eq.s32.totalorder %s24, 1
      %p145 = por %p143, %p144
      %p146 = scmp.ne.s32.totalorder %s137, %s138
      %p147 = scmp.eq.s32.totalorder %s24, 0
      %p148 = por %p146, %p147
      %p149 = scmp.ne.s32.totalorder %s137, %s138
      %p150 = scmp.eq.s32.totalorder %s25, 1
      %p151 = por %p149, %p150
      %p153 = scmp.ne.s32.totalorder %s138, %s152
      %p154 = scmp.eq.s32.totalorder %s25, 0
      %p155 = por %p153, %p154
      %s156 = ssub.s32 %s26, %s38
      %s157 = ssub.s32 %s27, %s34
      %s158 = sor.u32 %s156, %s157
      %p159 = scmp.eq.s32.totalorder %s158, 0
      %s161 = sadd.s32 %s160, 1
      %s162 = scalar_select %p159, %s160, %s161
      %p165 = pneg %p159
      %p166 = scmp.eq.s32.totalorder %s19, 1
      %p167 = por %p165, %p166
      %p168 = scmp.ne.s32.totalorder %s160, %s163
      %p169 = scmp.eq.s32.totalorder %s19, 0
      %p170 = por %p168, %p169
      %p171 = scmp.ne.s32.totalorder %s160, %s163
      %p172 = scmp.eq.s32.totalorder %s24, 1
      %p173 = por %p171, %p172
      %p174 = scmp.ne.s32.totalorder %s163, %s164
      %p175 = scmp.eq.s32.totalorder %s24, 0
      %p176 = por %p174, %p175
      %p177 = scmp.ne.s32.totalorder %s163, %s164
      %p178 = scmp.eq.s32.totalorder %s25, 1
      %p179 = por %p177, %p178
      %p181 = scmp.ne.s32.totalorder %s164, %s180
      %p182 = scmp.eq.s32.totalorder %s25, 0
      %p183 = por %p181, %p182
      %s184 = ssub.s32 %s26, %s38
      %s185 = ssub.s32 %s27, %s34
      %s186 = sor.u32 %s184, %s185
      %p187 = scmp.eq.s32.totalorder %s186, 0
      %s189 = sadd.s32 %s188, 1
      %s190 = scalar_select %p187, %s188, %s189
      %p193 = pneg %p187
      %p194 = scmp.eq.s32.totalorder %s19, 1
      %p195 = por %p193, %p194
      %p196 = scmp.ne.s32.totalorder %s188, %s191
      %p197 = scmp.eq.s32.totalorder %s19, 0
      %p198 = por %p196, %p197
      %p199 = scmp.ne.s32.totalorder %s188, %s191
      %p200 = scmp.eq.s32.totalorder %s24, 1
      %p201 = por %p199, %p200
      %p202 = scmp.ne.s32.totalorder %s191, %s192
      %p203 = scmp.eq.s32.totalorder %s24, 0
      %p204 = por %p202, %p203
      %p205 = scmp.ne.s32.totalorder %s191, %s192
      %p206 = scmp.eq.s32.totalorder %s25, 1
      %p207 = por %p205, %p206
      %p209 = scmp.ne.s32.totalorder %s192, %s208
      %p210 = scmp.eq.s32.totalorder %s25, 0
      %p211 = por %p209, %p210
      %p212 = scmp.le.s32.totalorder 1, %s19
      %p213 = scmp.lt.s32.totalorder %s19, 3
      %p214 = pnand %p212, %p213
      %p215 = pneg %p214
      // Predicated region
      $region9: #{low_rank_bilinear_attention.1} parent=5 // pred_check
        _
      $region10: #{low_rank_bilinear_attention.1} parent=5 // pred_check_branch
        %217 = sbr.rel (%p214) target = $region12
      $region11: #{low_rank_bilinear_attention.1} parent=5 // pred_region
        %s218 = ssub.s32 %s19, 1
        // Predicated region
        $region13: #{low_rank_bilinear_attention.1} parent=11 // pred_check
          %p219 = pneg %p78
        $region14: #{low_rank_bilinear_attention.1} parent=11 // pred_check_branch
          %221 = sbr.rel (%p219) target = $region16
        $region15: #{low_rank_bilinear_attention.1} parent=11 // pred_region
          _
        $region16: #{low_rank_bilinear_attention.1} parent=11 // pred_fallthru
          _
        // Predicated region
        $region17: #{low_rank_bilinear_attention.1} parent=11 // pred_check
          %p222 = pneg %p127
        $region18: #{low_rank_bilinear_attention.1} parent=11 // pred_check_branch
          %224 = sbr.rel (%p222) target = $region20
        $region19: #{low_rank_bilinear_attention.1} parent=11 // pred_region
          _
        $region20: #{low_rank_bilinear_attention.1} parent=11 // pred_fallthru
          _
        // Predicated region
        $region21: #{low_rank_bilinear_attention.1} parent=11 // pred_check
          %p225 = pneg %p148
        $region22: #{low_rank_bilinear_attention.1} parent=11 // pred_check_branch
          %227 = sbr.rel (%p225) target = $region24
        $region23: #{low_rank_bilinear_attention.1} parent=11 // pred_region
          _
        $region24: #{low_rank_bilinear_attention.1} parent=11 // pred_fallthru
          _
      $region12: #{low_rank_bilinear_attention.1} parent=5 // pred_fallthru
        _
      %p228 = scmp.lt.s32.totalorder %s19, 2
      // Predicated region
      $region25: #{low_rank_bilinear_attention.1} parent=5 // pred_check
        %p229 = pneg %p228
      $region26: #{low_rank_bilinear_attention.1} parent=5 // pred_check_branch
        %231 = sbr.rel (%p229) target = $region28
      $region27: #{low_rank_bilinear_attention.1} parent=5 // pred_region
        // Predicated region
        $region29: #{low_rank_bilinear_attention.1} parent=27 // pred_check
          %p232 = pneg %p51
        $region30: #{low_rank_bilinear_attention.1} parent=27 // pred_check_branch
          %234 = sbr.rel (%p232) target = $region32
        $region31: #{low_rank_bilinear_attention.1} parent=27 // pred_region
          %p235 = scmp.lt.s32.totalorder %s26, 1
          %s236 = scalar_select %p235, %s26, 1
          %s237 = smul.addr %s236, 16
          %s238 = smul.addr %s237, 8
          %s239 = scalar_lea.vmem %s0, %s238
        $region32: #{low_rank_bilinear_attention.1} parent=27 // pred_fallthru
          _
        // Predicated region
        $region33: #{low_rank_bilinear_attention.1} parent=27 // pred_check
          %p240 = pneg %p100
        $region34: #{low_rank_bilinear_attention.1} parent=27 // pred_check_branch
          %242 = sbr.rel (%p240) target = $region36
        $region35: #{low_rank_bilinear_attention.1} parent=27 // pred_region
          %s243 = smul.u32 2, %s27
          %p244 = scmp.lt.s32.totalorder %s26, 1
          %s245 = scalar_select %p244, %s26, 1
          %p246 = scmp.lt.s32.totalorder %s243, 1
          %s247 = scalar_select %p246, %s243, 1
          %s248 = smul.addr %s245, 2
          %s249 = sadd.s32 %s247, %s248
          %s250 = smul.addr %s249, 8
          %s251 = scalar_lea.vmem %s2, %s250
          %s252 = smul.u32 2, %s27
        $region36: #{low_rank_bilinear_attention.1} parent=27 // pred_fallthru
          _
      $region28: #{low_rank_bilinear_attention.1} parent=5 // pred_fallthru
        _
      %p253 = scmp.le.s32.totalorder 1, %s19
      %p254 = scmp.lt.s32.totalorder %s19, 3
      %p255 = pnand %p253, %p254
      %p256 = pneg %p255
      // Predicated region
      $region37: #{low_rank_bilinear_attention.1} parent=5 // pred_check
        _
      $region38: #{low_rank_bilinear_attention.1} parent=5 // pred_check_branch
        %258 = sbr.rel (%p255) target = $region40
      $region39: #{low_rank_bilinear_attention.1} parent=5 // pred_region
        %s259 = ssub.s32 %s19, 1
        %p260 = scmp.lt.s32.totalorder %s28, 1
        %s261 = scalar_select %p260, %s28, 1
        %s262 = smul.addr %s261, 16
        %s263 = smul.addr %s262, 8
        %s264 = scalar_lea.vmem %s0, %s263
        %p265 = pneg %p57
        %p266 = pneg %p54
        %p267 = pneg %p78
        %p268 = pneg %p75
        %s269 = smul.u32 2, %s29
        %p270 = scmp.lt.s32.totalorder %s28, 1
        %s271 = scalar_select %p270, %s28, 1
        %p272 = scmp.lt.s32.totalorder %s269, 1
        %s273 = scalar_select %p272, %s269, 1
        %s274 = smul.addr %s271, 2
        %s275 = sadd.s32 %s273, %s274
        %s276 = smul.addr %s275, 8
        %s277 = scalar_lea.vmem %s2, %s276
        %p278 = pneg %p106
        %p279 = pneg %p103
        %p280 = pneg %p127
        %p281 = pneg %p124
        %p282 = pneg %p148
        %p283 = pneg %p145
        %p284 = pneg %p176
        %p285 = pneg %p173
        %s286 = sand.u32 %s163, 1
        %s287 = scalar_lea.sflag [#allocation5], %s286
        %s288 = sand.u32 %s163, 1
        %s289 = smul.addr %s288, 16
        %s290 = scalar_lea.vmem [#allocation4], %s289
        %p291 = pneg %p204
        %p292 = pneg %p201
        %s293 = sand.u32 %s191, 1
        %s294 = scalar_lea.sflag [#allocation7], %s293
        %s295 = sand.u32 %s191, 1
        %s296 = smul.addr %s295, 16
        %s297 = scalar_lea.vmem [#allocation6], %s296
        %p298 = scmp.lt.s32.totalorder %s28, 1
        %s299 = scalar_select %p298, %s28, 1
        %s300 = smul.addr %s299, 16
        %s301 = smul.addr %s300, 8
        %s302 = scalar_lea.vmem %s0, %s301
        %s303 = smul.u32 2, %s29
        %p304 = scmp.lt.s32.totalorder %s28, 1
        %s305 = scalar_select %p304, %s28, 1
        %p306 = scmp.lt.s32.totalorder %s303, 1
        %s307 = scalar_select %p306, %s303, 1
        %s308 = smul.addr %s305, 2
        %s309 = sadd.s32 %s307, %s308
        %s310 = smul.addr %s309, 8
        %s311 = scalar_lea.vmem %s2, %s310
        %s312 = smul.u32 2, %s29
        %s313 = smul.u32 2, %s29
        %s314 = smul.u32 2, %s29
        %p315 = scmp.eq.s32.totalorder %s29, 0
        // Predicated region
        $region41: #{low_rank_bilinear_attention.1} parent=39 // pred_check
          %p316 = pneg %p315
        $region42: #{low_rank_bilinear_attention.1} parent=39 // pred_check_branch
          %318 = sbr.rel (%p316) target = $region44
        $region43: #{low_rank_bilinear_attention.1} parent=39 // pred_region
          %v319 = vld [vmem:[%s302] sm:$0xff]
          %v320 = vld [vmem:[%s302 + $0x8] sm:$0xff]
          %v321 = vld [vmem:[%s302 + $0x10] sm:$0xff]
          %v322 = vld [vmem:[%s302 + $0x18] sm:$0xff]
          %v323 = vld [vmem:[%s302 + $0x20] sm:$0xff]
          %v324 = vld [vmem:[%s302 + $0x28] sm:$0xff]
          %v325 = vld [vmem:[%s302 + $0x30] sm:$0xff]
          %v326 = vld [vmem:[%s302 + $0x38] sm:$0xff]
          %v327 = vld [vmem:[%s302 + $0x40] sm:$0xff]
          %v328 = vld [vmem:[%s302 + $0x48] sm:$0xff]
          %v329 = vld [vmem:[%s302 + $0x50] sm:$0xff]
          %v330 = vld [vmem:[%s302 + $0x58] sm:$0xff]
          %v331 = vld [vmem:[%s302 + $0x60] sm:$0xff]
          %v332 = vld [vmem:[%s302 + $0x68] sm:$0xff]
          %v333 = vld [vmem:[%s302 + $0x70] sm:$0xff]
          %v334 = vld [vmem:[%s302 + $0x78] sm:$0xff]
          %v335 = vld [vmem:[%s1] sm:$0xff]
          %v336 = vld [vmem:[%s1 + $0x8] sm:$0xff]
          %v337 = vld [vmem:[%s1 + $0x10] sm:$0xff]
          %v338 = vld [vmem:[%s1 + $0x18] sm:$0xff]
          %v339 = vld [vmem:[%s1 + $0x20] sm:$0xff]
          %v340 = vld [vmem:[%s1 + $0x28] sm:$0xff]
          %v341 = vld [vmem:[%s1 + $0x30] sm:$0xff]
          %v342 = vld [vmem:[%s1 + $0x38] sm:$0xff]
          %v343 = vld [vmem:[%s1 + $0x40] sm:$0xff]
          %v344 = vld [vmem:[%s1 + $0x48] sm:$0xff]
          %v345 = vld [vmem:[%s1 + $0x50] sm:$0xff]
          %v346 = vld [vmem:[%s1 + $0x58] sm:$0xff]
          %v347 = vld [vmem:[%s1 + $0x60] sm:$0xff]
          %v348 = vld [vmem:[%s1 + $0x68] sm:$0xff]
          %v349 = vld [vmem:[%s1 + $0x70] sm:$0xff]
          %v350 = vld [vmem:[%s1 + $0x78] sm:$0xff]
          %351 = vmatpush.msra.mxu0 %v350
          %352 = vmatpush.msra.mxu0 %v349
          %353 = vmatpush.msra.mxu0 %v348
          %354 = vmatpush.msra.mxu0 %v347
          %355 = vmatpush.msra.mxu0 %v346
          %356 = vmatpush.msra.mxu0 %v345
          %357 = vmatpush.msra.mxu0 %v344
          %358 = vmatpush.msra.mxu0 %v343
          %359 = vmatpush.msra.mxu0 %v342
          %360 = vmatpush.msra.mxu0 %v341
          %361 = vmatpush.msra.mxu0 %v340
          %362 = vmatpush.msra.mxu0 %v339
          %363 = vmatpush.msra.mxu0 %v338
          %364 = vmatpush.msra.mxu0 %v337
          %365 = vmatpush.msra.mxu0 %v336
          %366 = vmatpush.msra.mxu0 %v335
          %367 = vmatmul.f32.gmra.mxu0 %v319
          %v368 = vpop.f32.mrf.mxu0
          %v369 = vadd.f32 0.0, %v368
          %370 = vmatmul.f32.gmra.mxu0 %v320
          %v371 = vpop.f32.mrf.mxu0
          %v372 = vadd.f32 0.0, %v371
          %373 = vmatmul.f32.gmra.mxu0 %v321
          %v374 = vpop.f32.mrf.mxu0
          %v375 = vadd.f32 0.0, %v374
          %376 = vmatmul.f32.gmra.mxu0 %v322
          %v377 = vpop.f32.mrf.mxu0
          %v378 = vadd.f32 0.0, %v377
          %379 = vmatmul.f32.gmra.mxu0 %v323
          %v380 = vpop.f32.mrf.mxu0
          %v381 = vadd.f32 0.0, %v380
          %382 = vmatmul.f32.gmra.mxu0 %v324
          %v383 = vpop.f32.mrf.mxu0
          %v384 = vadd.f32 0.0, %v383
          %385 = vmatmul.f32.gmra.mxu0 %v325
          %v386 = vpop.f32.mrf.mxu0
          %v387 = vadd.f32 0.0, %v386
          %388 = vmatmul.f32.gmra.mxu0 %v326
          %v389 = vpop.f32.mrf.mxu0
          %v390 = vadd.f32 0.0, %v389
          %391 = vmatmul.f32.gmra.mxu0 %v327
          %v392 = vpop.f32.mrf.mxu0
          %v393 = vadd.f32 0.0, %v392
          %394 = vmatmul.f32.gmra.mxu0 %v328
          %v395 = vpop.f32.mrf.mxu0
          %v396 = vadd.f32 0.0, %v395
          %397 = vmatmul.f32.gmra.mxu0 %v329
          %v398 = vpop.f32.mrf.mxu0
          %v399 = vadd.f32 0.0, %v398
          %400 = vmatmul.f32.gmra.mxu0 %v330
          %v401 = vpop.f32.mrf.mxu0
          %v402 = vadd.f32 0.0, %v401
          %403 = vmatmul.f32.gmra.mxu0 %v331
          %v404 = vpop.f32.mrf.mxu0
          %v405 = vadd.f32 0.0, %v404
          %406 = vmatmul.f32.gmra.mxu0 %v332
          %v407 = vpop.f32.mrf.mxu0
          %v408 = vadd.f32 0.0, %v407
          %409 = vmatmul.f32.gmra.mxu0 %v333
          %v410 = vpop.f32.mrf.mxu0
          %v411 = vadd.f32 0.0, %v410
          %412 = vmatmul.f32.gmra.mxu0 %v334
          %v413 = vpop.f32.mrf.mxu0
          %v414 = vadd.f32 0.0, %v413
          %415 = vdwg.mxu0
          %416 = vst [vmem:[#allocation2] sm:$0xff] %v369
          %417 = vst [vmem:[#allocation2 + $0x8] sm:$0xff] %v372
          %418 = vst [vmem:[#allocation2 + $0x10] sm:$0xff] %v375
          %419 = vst [vmem:[#allocation2 + $0x18] sm:$0xff] %v378
          %420 = vst [vmem:[#allocation2 + $0x20] sm:$0xff] %v381
          %421 = vst [vmem:[#allocation2 + $0x28] sm:$0xff] %v384
          %422 = vst [vmem:[#allocation2 + $0x30] sm:$0xff] %v387
          %423 = vst [vmem:[#allocation2 + $0x38] sm:$0xff] %v390
          %424 = vst [vmem:[#allocation2 + $0x40] sm:$0xff] %v393
          %425 = vst [vmem:[#allocation2 + $0x48] sm:$0xff] %v396
          %426 = vst [vmem:[#allocation2 + $0x50] sm:$0xff] %v399
          %427 = vst [vmem:[#allocation2 + $0x58] sm:$0xff] %v402
          %428 = vst [vmem:[#allocation2 + $0x60] sm:$0xff] %v405
          %429 = vst [vmem:[#allocation2 + $0x68] sm:$0xff] %v408
          %430 = vst [vmem:[#allocation2 + $0x70] sm:$0xff] %v411
          %431 = vst [vmem:[#allocation2 + $0x78] sm:$0xff] %v414
        $region44: #{low_rank_bilinear_attention.1} parent=39 // pred_fallthru
          _
        %v432 = vld [vmem:[%s311] sm:$0xff]
        %v433 = vld [vmem:[%s311 + $0x8] sm:$0xff]
        %v434 = vld [vmem:[%s3] sm:$0xff]
        %v435 = vld [vmem:[%s3 + $0x8] sm:$0xff]
        %v436 = vld [vmem:[%s3 + $0x10] sm:$0xff]
        %v437 = vld [vmem:[%s3 + $0x18] sm:$0xff]
        %v438 = vld [vmem:[%s3 + $0x20] sm:$0xff]
        %v439 = vld [vmem:[%s3 + $0x28] sm:$0xff]
        %v440 = vld [vmem:[%s3 + $0x30] sm:$0xff]
        %v441 = vld [vmem:[%s3 + $0x38] sm:$0xff]
        %v442 = vld [vmem:[%s3 + $0x40] sm:$0xff]
        %v443 = vld [vmem:[%s3 + $0x48] sm:$0xff]
        %v444 = vld [vmem:[%s3 + $0x50] sm:$0xff]
        %v445 = vld [vmem:[%s3 + $0x58] sm:$0xff]
        %v446 = vld [vmem:[%s3 + $0x60] sm:$0xff]
        %v447 = vld [vmem:[%s3 + $0x68] sm:$0xff]
        %v448 = vld [vmem:[%s3 + $0x70] sm:$0xff]
        %v449 = vld [vmem:[%s3 + $0x78] sm:$0xff]
        %450 = vmatpush.msra.mxu0 %v449
        %451 = vmatpush.msra.mxu0 %v448
        %452 = vmatpush.msra.mxu0 %v447
        %453 = vmatpush.msra.mxu0 %v446
        %454 = vmatpush.msra.mxu0 %v445
        %455 = vmatpush.msra.mxu0 %v444
        %456 = vmatpush.msra.mxu0 %v443
        %457 = vmatpush.msra.mxu0 %v442
        %458 = vmatpush.msra.mxu0 %v441
        %459 = vmatpush.msra.mxu0 %v440
        %460 = vmatpush.msra.mxu0 %v439
        %461 = vmatpush.msra.mxu0 %v438
        %462 = vmatpush.msra.mxu0 %v437
        %463 = vmatpush.msra.mxu0 %v436
        %464 = vmatpush.msra.mxu0 %v435
        %465 = vmatpush.msra.mxu0 %v434
        %466 = vmatmul.f32.gmra.mxu0 %v432
        %v467 = vpop.f32.mrf.mxu0
        %v468 = vadd.f32 0.0, %v467
        %469 = vmatmul.f32.gmra.mxu0 %v433
        %v470 = vpop.f32.mrf.mxu0
        %v471 = vadd.f32 0.0, %v470
        %472 = vdwg.mxu0
        %473 = vst [vmem:[#allocation3] sm:$0xff] %v468
        %474 = vst [vmem:[#allocation3 + $0x8] sm:$0xff] %v471
        %v475 = vld [vmem:[#allocation2] sm:$0xff]
        %v476 = vld [vmem:[#allocation2 + $0x8] sm:$0xff]
        %v477 = vld [vmem:[#allocation2 + $0x10] sm:$0xff]
        %v478 = vld [vmem:[#allocation2 + $0x18] sm:$0xff]
        %v479 = vld [vmem:[#allocation2 + $0x20] sm:$0xff]
        %v480 = vld [vmem:[#allocation2 + $0x28] sm:$0xff]
        %v481 = vld [vmem:[#allocation2 + $0x30] sm:$0xff]
        %v482 = vld [vmem:[#allocation2 + $0x38] sm:$0xff]
        %v483 = vld [vmem:[#allocation2 + $0x40] sm:$0xff]
        %v484 = vld [vmem:[#allocation2 + $0x48] sm:$0xff]
        %v485 = vld [vmem:[#allocation2 + $0x50] sm:$0xff]
        %v486 = vld [vmem:[#allocation2 + $0x58] sm:$0xff]
        %v487 = vld [vmem:[#allocation2 + $0x60] sm:$0xff]
        %v488 = vld [vmem:[#allocation2 + $0x68] sm:$0xff]
        %v489 = vld [vmem:[#allocation2 + $0x70] sm:$0xff]
        %v490 = vld [vmem:[#allocation2 + $0x78] sm:$0xff]
        %v491 = vld [vmem:[%s4] sm:$0x1]
        %v492 = vld [vmem:[#allocation3] sm:$0xff]
        %v494 = vrot.slane %v492, 1
        %v495 = vrot.slane %v492, 2
        %v496 = vrot.slane %v492, 3
        %v497 = vrot.slane %v492, 4
        %v498 = vrot.slane %v492, 5
        %v499 = vrot.slane %v492, 6
        %v500 = vrot.slane %v492, 7
        %v501 = vperm.slane %v492, 0
        %v502 = vperm.slane %v494, 0
        %v503 = vperm.slane %v495, 0
        %v504 = vperm.slane %v496, 0
        %v505 = vperm.slane %v497, 0
        %v506 = vperm.slane %v498, 0
        %v507 = vperm.slane %v499, 0
        %v508 = vperm.slane %v500, 0
        %v517 = vmul.f32 %v501, %v475
        %v518 = vmul.f32 %v501, %v476
        %v519 = vmul.f32 %v501, %v477
        %v520 = vmul.f32 %v501, %v478
        %v521 = vmul.f32 %v501, %v479
        %v522 = vmul.f32 %v501, %v480
        %v523 = vmul.f32 %v501, %v481
        %v524 = vmul.f32 %v501, %v482
        %v525 = vmul.f32 %v501, %v483
        %v526 = vmul.f32 %v501, %v484
        %v527 = vmul.f32 %v501, %v485
        %v528 = vmul.f32 %v501, %v486
        %v529 = vmul.f32 %v501, %v487
        %v530 = vmul.f32 %v501, %v488
        %v531 = vmul.f32 %v501, %v489
        %v532 = vmul.f32 %v501, %v490
        %v533 = vmul.f32 %v502, %v475
        %v534 = vmul.f32 %v502, %v476
        %v535 = vmul.f32 %v502, %v477
        %v536 = vmul.f32 %v502, %v478
        %v537 = vmul.f32 %v502, %v479
        %v538 = vmul.f32 %v502, %v480
        %v539 = vmul.f32 %v502, %v481
        %v540 = vmul.f32 %v502, %v482
        %v541 = vmul.f32 %v502, %v483
        %v542 = vmul.f32 %v502, %v484
        %v543 = vmul.f32 %v502, %v485
        %v544 = vmul.f32 %v502, %v486
        %v545 = vmul.f32 %v502, %v487
        %v546 = vmul.f32 %v502, %v488
        %v547 = vmul.f32 %v502, %v489
        %v548 = vmul.f32 %v502, %v490
        %v549 = vmul.f32 %v503, %v475
        %v550 = vmul.f32 %v503, %v476
        %v551 = vmul.f32 %v503, %v477
        %v552 = vmul.f32 %v503, %v478
        %v553 = vmul.f32 %v503, %v479
        %v554 = vmul.f32 %v503, %v480
        %v555 = vmul.f32 %v503, %v481
        %v556 = vmul.f32 %v503, %v482
        %v557 = vmul.f32 %v503, %v483
        %v558 = vmul.f32 %v503, %v484
        %v559 = vmul.f32 %v503, %v485
        %v560 = vmul.f32 %v503, %v486
        %v561 = vmul.f32 %v503, %v487
        %v562 = vmul.f32 %v503, %v488
        %v563 = vmul.f32 %v503, %v489
        %v564 = vmul.f32 %v503, %v490
        %v565 = vmul.f32 %v504, %v475
        %v566 = vmul.f32 %v504, %v476
        %v567 = vmul.f32 %v504, %v477
        %v568 = vmul.f32 %v504, %v478
        %v569 = vmul.f32 %v504, %v479
        %v570 = vmul.f32 %v504, %v480
        %v571 = vmul.f32 %v504, %v481
        %v572 = vmul.f32 %v504, %v482
        %v573 = vmul.f32 %v504, %v483
        %v574 = vmul.f32 %v504, %v484
        %v575 = vmul.f32 %v504, %v485
        %v576 = vmul.f32 %v504, %v486
        %v577 = vmul.f32 %v504, %v487
        %v578 = vmul.f32 %v504, %v488
        %v579 = vmul.f32 %v504, %v489
        %v580 = vmul.f32 %v504, %v490
        %v581 = vmul.f32 %v505, %v475
        %v582 = vmul.f32 %v505, %v476
        %v583 = vmul.f32 %v505, %v477
        %v584 = vmul.f32 %v505, %v478
        %v585 = vmul.f32 %v505, %v479
        %v586 = vmul.f32 %v505, %v480
        %v587 = vmul.f32 %v505, %v481
        %v588 = vmul.f32 %v505, %v482
        %v589 = vmul.f32 %v505, %v483
        %v590 = vmul.f32 %v505, %v484
        %v591 = vmul.f32 %v505, %v485
        %v592 = vmul.f32 %v505, %v486
        %v593 = vmul.f32 %v505, %v487
        %v594 = vmul.f32 %v505, %v488
        %v595 = vmul.f32 %v505, %v489
        %v596 = vmul.f32 %v505, %v490
        %v597 = vmul.f32 %v506, %v475
        %v598 = vmul.f32 %v506, %v476
        %v599 = vmul.f32 %v506, %v477
        %v600 = vmul.f32 %v506, %v478
        %v601 = vmul.f32 %v506, %v479
        %v602 = vmul.f32 %v506, %v480
        %v603 = vmul.f32 %v506, %v481
        %v604 = vmul.f32 %v506, %v482
        %v605 = vmul.f32 %v506, %v483
        %v606 = vmul.f32 %v506, %v484
        %v607 = vmul.f32 %v506, %v485
        %v608 = vmul.f32 %v506, %v486
        %v609 = vmul.f32 %v506, %v487
        %v610 = vmul.f32 %v506, %v488
        %v611 = vmul.f32 %v506, %v489
        %v612 = vmul.f32 %v506, %v490
        %v613 = vmul.f32 %v507, %v475
        %v614 = vmul.f32 %v507, %v476
        %v615 = vmul.f32 %v507, %v477
        %v616 = vmul.f32 %v507, %v478
        %v617 = vmul.f32 %v507, %v479
        %v618 = vmul.f32 %v507, %v480
        %v619 = vmul.f32 %v507, %v481
        %v620 = vmul.f32 %v507, %v482
        %v621 = vmul.f32 %v507, %v483
        %v622 = vmul.f32 %v507, %v484
        %v623 = vmul.f32 %v507, %v485
        %v624 = vmul.f32 %v507, %v486
        %v625 = vmul.f32 %v507, %v487
        %v626 = vmul.f32 %v507, %v488
        %v627 = vmul.f32 %v507, %v489
        %v628 = vmul.f32 %v507, %v490
        %v629 = vmul.f32 %v508, %v475
        %v630 = vmul.f32 %v508, %v476
        %v631 = vmul.f32 %v508, %v477
        %v632 = vmul.f32 %v508, %v478
        %v633 = vmul.f32 %v508, %v479
        %v634 = vmul.f32 %v508, %v480
        %v635 = vmul.f32 %v508, %v481
        %v636 = vmul.f32 %v508, %v482
        %v637 = vmul.f32 %v508, %v483
        %v638 = vmul.f32 %v508, %v484
        %v639 = vmul.f32 %v508, %v485
        %v640 = vmul.f32 %v508, %v486
        %v641 = vmul.f32 %v508, %v487
        %v642 = vmul.f32 %v508, %v488
        %v643 = vmul.f32 %v508, %v489
        %v644 = vmul.f32 %v508, %v490
        %v645 = vtanh.pop %v517
        %v646 = vtanh.pop %v518
        %v647 = vtanh.pop %v519
        %v648 = vtanh.pop %v520
        %v649 = vtanh.pop %v521
        %v650 = vtanh.pop %v522
        %v651 = vtanh.pop %v523
        %v652 = vtanh.pop %v524
        %v653 = vtanh.pop %v525
        %v654 = vtanh.pop %v526
        %v655 = vtanh.pop %v527
        %v656 = vtanh.pop %v528
        %v657 = vtanh.pop %v529
        %v658 = vtanh.pop %v530
        %v659 = vtanh.pop %v531
        %v660 = vtanh.pop %v532
        %v661 = vtanh.pop %v533
        %v662 = vtanh.pop %v534
        %v663 = vtanh.pop %v535
        %v664 = vtanh.pop %v536
        %v665 = vtanh.pop %v537
        %v666 = vtanh.pop %v538
        %v667 = vtanh.pop %v539
        %v668 = vtanh.pop %v540
        %v669 = vtanh.pop %v541
        %v670 = vtanh.pop %v542
        %v671 = vtanh.pop %v543
        %v672 = vtanh.pop %v544
        %v673 = vtanh.pop %v545
        %v674 = vtanh.pop %v546
        %v675 = vtanh.pop %v547
        %v676 = vtanh.pop %v548
        %v677 = vtanh.pop %v549
        %v678 = vtanh.pop %v550
        %v679 = vtanh.pop %v551
        %v680 = vtanh.pop %v552
        %v681 = vtanh.pop %v553
        %v682 = vtanh.pop %v554
        %v683 = vtanh.pop %v555
        %v684 = vtanh.pop %v556
        %v685 = vtanh.pop %v557
        %v686 = vtanh.pop %v558
        %v687 = vtanh.pop %v559
        %v688 = vtanh.pop %v560
        %v689 = vtanh.pop %v561
        %v690 = vtanh.pop %v562
        %v691 = vtanh.pop %v563
        %v692 = vtanh.pop %v564
        %v693 = vtanh.pop %v565
        %v694 = vtanh.pop %v566
        %v695 = vtanh.pop %v567
        %v696 = vtanh.pop %v568
        %v697 = vtanh.pop %v569
        %v698 = vtanh.pop %v570
        %v699 = vtanh.pop %v571
        %v700 = vtanh.pop %v572
        %v701 = vtanh.pop %v573
        %v702 = vtanh.pop %v574
        %v703 = vtanh.pop %v575
        %v704 = vtanh.pop %v576
        %v705 = vtanh.pop %v577
        %v706 = vtanh.pop %v578
        %v707 = vtanh.pop %v579
        %v708 = vtanh.pop %v580
        %v709 = vtanh.pop %v581
        %v710 = vtanh.pop %v582
        %v711 = vtanh.pop %v583
        %v712 = vtanh.pop %v584
        %v713 = vtanh.pop %v585
        %v714 = vtanh.pop %v586
        %v715 = vtanh.pop %v587
        %v716 = vtanh.pop %v588
        %v717 = vtanh.pop %v589
        %v718 = vtanh.pop %v590
        %v719 = vtanh.pop %v591
        %v720 = vtanh.pop %v592
        %v721 = vtanh.pop %v593
        %v722 = vtanh.pop %v594
        %v723 = vtanh.pop %v595
        %v724 = vtanh.pop %v596
        %v725 = vtanh.pop %v597
        %v726 = vtanh.pop %v598
        %v727 = vtanh.pop %v599
        %v728 = vtanh.pop %v600
        %v729 = vtanh.pop %v601
        %v730 = vtanh.pop %v602
        %v731 = vtanh.pop %v603
        %v732 = vtanh.pop %v604
        %v733 = vtanh.pop %v605
        %v734 = vtanh.pop %v606
        %v735 = vtanh.pop %v607
        %v736 = vtanh.pop %v608
        %v737 = vtanh.pop %v609
        %v738 = vtanh.pop %v610
        %v739 = vtanh.pop %v611
        %v740 = vtanh.pop %v612
        %v741 = vtanh.pop %v613
        %v742 = vtanh.pop %v614
        %v743 = vtanh.pop %v615
        %v744 = vtanh.pop %v616
        %v745 = vtanh.pop %v617
        %v746 = vtanh.pop %v618
        %v747 = vtanh.pop %v619
        %v748 = vtanh.pop %v620
        %v749 = vtanh.pop %v621
        %v750 = vtanh.pop %v622
        %v751 = vtanh.pop %v623
        %v752 = vtanh.pop %v624
        %v753 = vtanh.pop %v625
        %v754 = vtanh.pop %v626
        %v755 = vtanh.pop %v627
        %v756 = vtanh.pop %v628
        %v757 = vtanh.pop %v629
        %v758 = vtanh.pop %v630
        %v759 = vtanh.pop %v631
        %v760 = vtanh.pop %v632
        %v761 = vtanh.pop %v633
        %v762 = vtanh.pop %v634
        %v763 = vtanh.pop %v635
        %v764 = vtanh.pop %v636
        %v765 = vtanh.pop %v637
        %v766 = vtanh.pop %v638
        %v767 = vtanh.pop %v639
        %v768 = vtanh.pop %v640
        %v769 = vtanh.pop %v641
        %v770 = vtanh.pop %v642
        %v771 = vtanh.pop %v643
        %v772 = vtanh.pop %v644
        %v774 = vperm.slane %v491, 0
        %v776 = vmul.f32 %v645, %v774
        %v777 = vmul.f32 %v646, %v774
        %v778 = vmul.f32 %v647, %v774
        %v779 = vmul.f32 %v648, %v774
        %v780 = vmul.f32 %v649, %v774
        %v781 = vmul.f32 %v650, %v774
        %v782 = vmul.f32 %v651, %v774
        %v783 = vmul.f32 %v652, %v774
        %v784 = vmul.f32 %v653, %v774
        %v785 = vmul.f32 %v654, %v774
        %v786 = vmul.f32 %v655, %v774
        %v787 = vmul.f32 %v656, %v774
        %v788 = vmul.f32 %v657, %v774
        %v789 = vmul.f32 %v658, %v774
        %v790 = vmul.f32 %v659, %v774
        %v791 = vmul.f32 %v660, %v774
        %v792 = vmul.f32 %v661, %v774
        %v793 = vmul.f32 %v662, %v774
        %v794 = vmul.f32 %v663, %v774
        %v795 = vmul.f32 %v664, %v774
        %v796 = vmul.f32 %v665, %v774
        %v797 = vmul.f32 %v666, %v774
        %v798 = vmul.f32 %v667, %v774
        %v799 = vmul.f32 %v668, %v774
        %v800 = vmul.f32 %v669, %v774
        %v801 = vmul.f32 %v670, %v774
        %v802 = vmul.f32 %v671, %v774
        %v803 = vmul.f32 %v672, %v774
        %v804 = vmul.f32 %v673, %v774
        %v805 = vmul.f32 %v674, %v774
        %v806 = vmul.f32 %v675, %v774
        %v807 = vmul.f32 %v676, %v774
        %v808 = vmul.f32 %v677, %v774
        %v809 = vmul.f32 %v678, %v774
        %v810 = vmul.f32 %v679, %v774
        %v811 = vmul.f32 %v680, %v774
        %v812 = vmul.f32 %v681, %v774
        %v813 = vmul.f32 %v682, %v774
        %v814 = vmul.f32 %v683, %v774
        %v815 = vmul.f32 %v684, %v774
        %v816 = vmul.f32 %v685, %v774
        %v817 = vmul.f32 %v686, %v774
        %v818 = vmul.f32 %v687, %v774
        %v819 = vmul.f32 %v688, %v774
        %v820 = vmul.f32 %v689, %v774
        %v821 = vmul.f32 %v690, %v774
        %v822 = vmul.f32 %v691, %v774
        %v823 = vmul.f32 %v692, %v774
        %v824 = vmul.f32 %v693, %v774
        %v825 = vmul.f32 %v694, %v774
        %v826 = vmul.f32 %v695, %v774
        %v827 = vmul.f32 %v696, %v774
        %v828 = vmul.f32 %v697, %v774
        %v829 = vmul.f32 %v698, %v774
        %v830 = vmul.f32 %v699, %v774
        %v831 = vmul.f32 %v700, %v774
        %v832 = vmul.f32 %v701, %v774
        %v833 = vmul.f32 %v702, %v774
        %v834 = vmul.f32 %v703, %v774
        %v835 = vmul.f32 %v704, %v774
        %v836 = vmul.f32 %v705, %v774
        %v837 = vmul.f32 %v706, %v774
        %v838 = vmul.f32 %v707, %v774
        %v839 = vmul.f32 %v708, %v774
        %v840 = vmul.f32 %v709, %v774
        %v841 = vmul.f32 %v710, %v774
        %v842 = vmul.f32 %v711, %v774
        %v843 = vmul.f32 %v712, %v774
        %v844 = vmul.f32 %v713, %v774
        %v845 = vmul.f32 %v714, %v774
        %v846 = vmul.f32 %v715, %v774
        %v847 = vmul.f32 %v716, %v774
        %v848 = vmul.f32 %v717, %v774
        %v849 = vmul.f32 %v718, %v774
        %v850 = vmul.f32 %v719, %v774
        %v851 = vmul.f32 %v720, %v774
        %v852 = vmul.f32 %v721, %v774
        %v853 = vmul.f32 %v722, %v774
        %v854 = vmul.f32 %v723, %v774
        %v855 = vmul.f32 %v724, %v774
        %v856 = vmul.f32 %v725, %v774
        %v857 = vmul.f32 %v726, %v774
        %v858 = vmul.f32 %v727, %v774
        %v859 = vmul.f32 %v728, %v774
        %v860 = vmul.f32 %v729, %v774
        %v861 = vmul.f32 %v730, %v774
        %v862 = vmul.f32 %v731, %v774
        %v863 = vmul.f32 %v732, %v774
        %v864 = vmul.f32 %v733, %v774
        %v865 = vmul.f32 %v734, %v774
        %v866 = vmul.f32 %v735, %v774
        %v867 = vmul.f32 %v736, %v774
        %v868 = vmul.f32 %v737, %v774
        %v869 = vmul.f32 %v738, %v774
        %v870 = vmul.f32 %v739, %v774
        %v871 = vmul.f32 %v740, %v774
        %v872 = vmul.f32 %v741, %v774
        %v873 = vmul.f32 %v742, %v774
        %v874 = vmul.f32 %v743, %v774
        %v875 = vmul.f32 %v744, %v774
        %v876 = vmul.f32 %v745, %v774
        %v877 = vmul.f32 %v746, %v774
        %v878 = vmul.f32 %v747, %v774
        %v879 = vmul.f32 %v748, %v774
        %v880 = vmul.f32 %v749, %v774
        %v881 = vmul.f32 %v750, %v774
        %v882 = vmul.f32 %v751, %v774
        %v883 = vmul.f32 %v752, %v774
        %v884 = vmul.f32 %v753, %v774
        %v885 = vmul.f32 %v754, %v774
        %v886 = vmul.f32 %v755, %v774
        %v887 = vmul.f32 %v756, %v774
        %v888 = vmul.f32 %v757, %v774
        %v889 = vmul.f32 %v758, %v774
        %v890 = vmul.f32 %v759, %v774
        %v891 = vmul.f32 %v760, %v774
        %v892 = vmul.f32 %v761, %v774
        %v893 = vmul.f32 %v762, %v774
        %v894 = vmul.f32 %v763, %v774
        %v895 = vmul.f32 %v764, %v774
        %v896 = vmul.f32 %v765, %v774
        %v897 = vmul.f32 %v766, %v774
        %v898 = vmul.f32 %v767, %v774
        %v899 = vmul.f32 %v768, %v774
        %v900 = vmul.f32 %v769, %v774
        %v901 = vmul.f32 %v770, %v774
        %v902 = vmul.f32 %v771, %v774
        %v903 = vmul.f32 %v772, %v774
        %904 = vadd.xlane.f32.xlu0 %v776
        %v905 = vpop.xlane.xlu0 %904
        %906 = vadd.xlane.f32.xlu0 %v777
        %v907 = vpop.xlane.xlu0 %906
        %908 = vadd.xlane.f32.xlu0 %v778
        %v909 = vpop.xlane.xlu0 %908
        %910 = vadd.xlane.f32.xlu0 %v779
        %v911 = vpop.xlane.xlu0 %910
        %912 = vadd.xlane.f32.xlu0 %v780
        %v913 = vpop.xlane.xlu0 %912
        %914 = vadd.xlane.f32.xlu0 %v781
        %v915 = vpop.xlane.xlu0 %914
        %916 = vadd.xlane.f32.xlu0 %v782
        %v917 = vpop.xlane.xlu0 %916
        %918 = vadd.xlane.f32.xlu0 %v783
        %v919 = vpop.xlane.xlu0 %918
        %920 = vadd.xlane.f32.xlu0 %v784
        %v921 = vpop.xlane.xlu0 %920
        %922 = vadd.xlane.f32.xlu0 %v785
        %v923 = vpop.xlane.xlu0 %922
        %924 = vadd.xlane.f32.xlu0 %v786
        %v925 = vpop.xlane.xlu0 %924
        %926 = vadd.xlane.f32.xlu0 %v787
        %v927 = vpop.xlane.xlu0 %926
        %928 = vadd.xlane.f32.xlu0 %v788
        %v929 = vpop.xlane.xlu0 %928
        %930 = vadd.xlane.f32.xlu0 %v789
        %v931 = vpop.xlane.xlu0 %930
        %932 = vadd.xlane.f32.xlu0 %v790
        %v933 = vpop.xlane.xlu0 %932
        %934 = vadd.xlane.f32.xlu0 %v791
        %v935 = vpop.xlane.xlu0 %934
        %936 = vadd.xlane.f32.xlu0 %v792
        %v937 = vpop.xlane.xlu0 %936
        %938 = vadd.xlane.f32.xlu0 %v793
        %v939 = vpop.xlane.xlu0 %938
        %940 = vadd.xlane.f32.xlu0 %v794
        %v941 = vpop.xlane.xlu0 %940
        %942 = vadd.xlane.f32.xlu0 %v795
        %v943 = vpop.xlane.xlu0 %942
        %944 = vadd.xlane.f32.xlu0 %v796
        %v945 = vpop.xlane.xlu0 %944
        %946 = vadd.xlane.f32.xlu0 %v797
        %v947 = vpop.xlane.xlu0 %946
        %948 = vadd.xlane.f32.xlu0 %v798
        %v949 = vpop.xlane.xlu0 %948
        %950 = vadd.xlane.f32.xlu0 %v799
        %v951 = vpop.xlane.xlu0 %950
        %952 = vadd.xlane.f32.xlu0 %v800
        %v953 = vpop.xlane.xlu0 %952
        %954 = vadd.xlane.f32.xlu0 %v801
        %v955 = vpop.xlane.xlu0 %954
        %956 = vadd.xlane.f32.xlu0 %v802
        %v957 = vpop.xlane.xlu0 %956
        %958 = vadd.xlane.f32.xlu0 %v803
        %v959 = vpop.xlane.xlu0 %958
        %960 = vadd.xlane.f32.xlu0 %v804
        %v961 = vpop.xlane.xlu0 %960
        %962 = vadd.xlane.f32.xlu0 %v805
        %v963 = vpop.xlane.xlu0 %962
        %964 = vadd.xlane.f32.xlu0 %v806
        %v965 = vpop.xlane.xlu0 %964
        %966 = vadd.xlane.f32.xlu0 %v807
        %v967 = vpop.xlane.xlu0 %966
        %968 = vadd.xlane.f32.xlu0 %v808
        %v969 = vpop.xlane.xlu0 %968
        %970 = vadd.xlane.f32.xlu0 %v809
        %v971 = vpop.xlane.xlu0 %970
        %972 = vadd.xlane.f32.xlu0 %v810
        %v973 = vpop.xlane.xlu0 %972
        %974 = vadd.xlane.f32.xlu0 %v811
        %v975 = vpop.xlane.xlu0 %974
        %976 = vadd.xlane.f32.xlu0 %v812
        %v977 = vpop.xlane.xlu0 %976
        %978 = vadd.xlane.f32.xlu0 %v813
        %v979 = vpop.xlane.xlu0 %978
        %980 = vadd.xlane.f32.xlu0 %v814
        %v981 = vpop.xlane.xlu0 %980
        %982 = vadd.xlane.f32.xlu0 %v815
        %v983 = vpop.xlane.xlu0 %982
        %984 = vadd.xlane.f32.xlu0 %v816
        %v985 = vpop.xlane.xlu0 %984
        %986 = vadd.xlane.f32.xlu0 %v817
        %v987 = vpop.xlane.xlu0 %986
        %988 = vadd.xlane.f32.xlu0 %v818
        %v989 = vpop.xlane.xlu0 %988
        %990 = vadd.xlane.f32.xlu0 %v819
        %v991 = vpop.xlane.xlu0 %990
        %992 = vadd.xlane.f32.xlu0 %v820
        %v993 = vpop.xlane.xlu0 %992
        %994 = vadd.xlane.f32.xlu0 %v821
        %v995 = vpop.xlane.xlu0 %994
        %996 = vadd.xlane.f32.xlu0 %v822
        %v997 = vpop.xlane.xlu0 %996
        %998 = vadd.xlane.f32.xlu0 %v823
        %v999 = vpop.xlane.xlu0 %998
        %1000 = vadd.xlane.f32.xlu0 %v824
        %v1001 = vpop.xlane.xlu0 %1000
        %1002 = vadd.xlane.f32.xlu0 %v825
        %v1003 = vpop.xlane.xlu0 %1002
        %1004 = vadd.xlane.f32.xlu0 %v826
        %v1005 = vpop.xlane.xlu0 %1004
        %1006 = vadd.xlane.f32.xlu0 %v827
        %v1007 = vpop.xlane.xlu0 %1006
        %1008 = vadd.xlane.f32.xlu0 %v828
        %v1009 = vpop.xlane.xlu0 %1008
        %1010 = vadd.xlane.f32.xlu0 %v829
        %v1011 = vpop.xlane.xlu0 %1010
        %1012 = vadd.xlane.f32.xlu0 %v830
        %v1013 = vpop.xlane.xlu0 %1012
        %1014 = vadd.xlane.f32.xlu0 %v831
        %v1015 = vpop.xlane.xlu0 %1014
        %1016 = vadd.xlane.f32.xlu0 %v832
        %v1017 = vpop.xlane.xlu0 %1016
        %1018 = vadd.xlane.f32.xlu0 %v833
        %v1019 = vpop.xlane.xlu0 %1018
        %1020 = vadd.xlane.f32.xlu0 %v834
        %v1021 = vpop.xlane.xlu0 %1020
        %1022 = vadd.xlane.f32.xlu0 %v835
        %v1023 = vpop.xlane.xlu0 %1022
        %1024 = vadd.xlane.f32.xlu0 %v836
        %v1025 = vpop.xlane.xlu0 %1024
        %1026 = vadd.xlane.f32.xlu0 %v837
        %v1027 = vpop.xlane.xlu0 %1026
        %1028 = vadd.xlane.f32.xlu0 %v838
        %v1029 = vpop.xlane.xlu0 %1028
        %1030 = vadd.xlane.f32.xlu0 %v839
        %v1031 = vpop.xlane.xlu0 %1030
        %1032 = vadd.xlane.f32.xlu0 %v840
        %v1033 = vpop.xlane.xlu0 %1032
        %1034 = vadd.xlane.f32.xlu0 %v841
        %v1035 = vpop.xlane.xlu0 %1034
        %1036 = vadd.xlane.f32.xlu0 %v842
        %v1037 = vpop.xlane.xlu0 %1036
        %1038 = vadd.xlane.f32.xlu0 %v843
        %v1039 = vpop.xlane.xlu0 %1038
        %1040 = vadd.xlane.f32.xlu0 %v844
        %v1041 = vpop.xlane.xlu0 %1040
        %1042 = vadd.xlane.f32.xlu0 %v845
        %v1043 = vpop.xlane.xlu0 %1042
        %1044 = vadd.xlane.f32.xlu0 %v846
        %v1045 = vpop.xlane.xlu0 %1044
        %1046 = vadd.xlane.f32.xlu0 %v847
        %v1047 = vpop.xlane.xlu0 %1046
        %1048 = vadd.xlane.f32.xlu0 %v848
        %v1049 = vpop.xlane.xlu0 %1048
        %1050 = vadd.xlane.f32.xlu0 %v849
        %v1051 = vpop.xlane.xlu0 %1050
        %1052 = vadd.xlane.f32.xlu0 %v850
        %v1053 = vpop.xlane.xlu0 %1052
        %1054 = vadd.xlane.f32.xlu0 %v851
        %v1055 = vpop.xlane.xlu0 %1054
        %1056 = vadd.xlane.f32.xlu0 %v852
        %v1057 = vpop.xlane.xlu0 %1056
        %1058 = vadd.xlane.f32.xlu0 %v853
        %v1059 = vpop.xlane.xlu0 %1058
        %1060 = vadd.xlane.f32.xlu0 %v854
        %v1061 = vpop.xlane.xlu0 %1060
        %1062 = vadd.xlane.f32.xlu0 %v855
        %v1063 = vpop.xlane.xlu0 %1062
        %1064 = vadd.xlane.f32.xlu0 %v856
        %v1065 = vpop.xlane.xlu0 %1064
        %1066 = vadd.xlane.f32.xlu0 %v857
        %v1067 = vpop.xlane.xlu0 %1066
        %1068 = vadd.xlane.f32.xlu0 %v858
        %v1069 = vpop.xlane.xlu0 %1068
        %1070 = vadd.xlane.f32.xlu0 %v859
        %v1071 = vpop.xlane.xlu0 %1070
        %1072 = vadd.xlane.f32.xlu0 %v860
        %v1073 = vpop.xlane.xlu0 %1072
        %1074 = vadd.xlane.f32.xlu0 %v861
        %v1075 = vpop.xlane.xlu0 %1074
        %1076 = vadd.xlane.f32.xlu0 %v862
        %v1077 = vpop.xlane.xlu0 %1076
        %1078 = vadd.xlane.f32.xlu0 %v863
        %v1079 = vpop.xlane.xlu0 %1078
        %1080 = vadd.xlane.f32.xlu0 %v864
        %v1081 = vpop.xlane.xlu0 %1080
        %1082 = vadd.xlane.f32.xlu0 %v865
        %v1083 = vpop.xlane.xlu0 %1082
        %1084 = vadd.xlane.f32.xlu0 %v866
        %v1085 = vpop.xlane.xlu0 %1084
        %1086 = vadd.xlane.f32.xlu0 %v867
        %v1087 = vpop.xlane.xlu0 %1086
        %1088 = vadd.xlane.f32.xlu0 %v868
        %v1089 = vpop.xlane.xlu0 %1088
        %1090 = vadd.xlane.f32.xlu0 %v869
        %v1091 = vpop.xlane.xlu0 %1090
        %1092 = vadd.xlane.f32.xlu0 %v870
        %v1093 = vpop.xlane.xlu0 %1092
        %1094 = vadd.xlane.f32.xlu0 %v871
        %v1095 = vpop.xlane.xlu0 %1094
        %1096 = vadd.xlane.f32.xlu0 %v872
        %v1097 = vpop.xlane.xlu0 %1096
        %1098 = vadd.xlane.f32.xlu0 %v873
        %v1099 = vpop.xlane.xlu0 %1098
        %1100 = vadd.xlane.f32.xlu0 %v874
        %v1101 = vpop.xlane.xlu0 %1100
        %1102 = vadd.xlane.f32.xlu0 %v875
        %v1103 = vpop.xlane.xlu0 %1102
        %1104 = vadd.xlane.f32.xlu0 %v876
        %v1105 = vpop.xlane.xlu0 %1104
        %1106 = vadd.xlane.f32.xlu0 %v877
        %v1107 = vpop.xlane.xlu0 %1106
        %1108 = vadd.xlane.f32.xlu0 %v878
        %v1109 = vpop.xlane.xlu0 %1108
        %1110 = vadd.xlane.f32.xlu0 %v879
        %v1111 = vpop.xlane.xlu0 %1110
        %1112 = vadd.xlane.f32.xlu0 %v880
        %v1113 = vpop.xlane.xlu0 %1112
        %1114 = vadd.xlane.f32.xlu0 %v881
        %v1115 = vpop.xlane.xlu0 %1114
        %1116 = vadd.xlane.f32.xlu0 %v882
        %v1117 = vpop.xlane.xlu0 %1116
        %1118 = vadd.xlane.f32.xlu0 %v883
        %v1119 = vpop.xlane.xlu0 %1118
        %1120 = vadd.xlane.f32.xlu0 %v884
        %v1121 = vpop.xlane.xlu0 %1120
        %1122 = vadd.xlane.f32.xlu0 %v885
        %v1123 = vpop.xlane.xlu0 %1122
        %1124 = vadd.xlane.f32.xlu0 %v886
        %v1125 = vpop.xlane.xlu0 %1124
        %1126 = vadd.xlane.f32.xlu0 %v887
        %v1127 = vpop.xlane.xlu0 %1126
        %1128 = vadd.xlane.f32.xlu0 %v888
        %v1129 = vpop.xlane.xlu0 %1128
        %1130 = vadd.xlane.f32.xlu0 %v889
        %v1131 = vpop.xlane.xlu0 %1130
        %1132 = vadd.xlane.f32.xlu0 %v890
        %v1133 = vpop.xlane.xlu0 %1132
        %1134 = vadd.xlane.f32.xlu0 %v891
        %v1135 = vpop.xlane.xlu0 %1134
        %1136 = vadd.xlane.f32.xlu0 %v892
        %v1137 = vpop.xlane.xlu0 %1136
        %1138 = vadd.xlane.f32.xlu0 %v893
        %v1139 = vpop.xlane.xlu0 %1138
        %1140 = vadd.xlane.f32.xlu0 %v894
        %v1141 = vpop.xlane.xlu0 %1140
        %1142 = vadd.xlane.f32.xlu0 %v895
        %v1143 = vpop.xlane.xlu0 %1142
        %1144 = vadd.xlane.f32.xlu0 %v896
        %v1145 = vpop.xlane.xlu0 %1144
        %1146 = vadd.xlane.f32.xlu0 %v897
        %v1147 = vpop.xlane.xlu0 %1146
        %1148 = vadd.xlane.f32.xlu0 %v898
        %v1149 = vpop.xlane.xlu0 %1148
        %1150 = vadd.xlane.f32.xlu0 %v899
        %v1151 = vpop.xlane.xlu0 %1150
        %1152 = vadd.xlane.f32.xlu0 %v900
        %v1153 = vpop.xlane.xlu0 %1152
        %1154 = vadd.xlane.f32.xlu0 %v901
        %v1155 = vpop.xlane.xlu0 %1154
        %1156 = vadd.xlane.f32.xlu0 %v902
        %v1157 = vpop.xlane.xlu0 %1156
        %1158 = vadd.xlane.f32.xlu0 %v903
        %v1159 = vpop.xlane.xlu0 %1158
        %v1288 = vlaneseq
        %v1289 = vand.u32 %v1288, 127
        %v1290 = vperm.slane %v905, %v1289
        %v1291 = vadd.s32 %v1289, 4294967288
        %v1292 = vperm.slane %v907, %v1291
        %vm1293 = vcmask 130112
        %v1294 = vsel %vm1293, %v1292, %v1290
        %v1295 = vadd.s32 %v1289, 4294967280
        %v1296 = vperm.slane %v909, %v1295
        %vm1297 = vcmask 195712
        %v1298 = vsel %vm1297, %v1296, %v1294
        %v1299 = vadd.s32 %v1289, 4294967272
        %v1300 = vperm.slane %v911, %v1299
        %vm1301 = vcmask 261312
        %v1302 = vsel %vm1301, %v1300, %v1298
        %v1303 = vadd.s32 %v1289, 4294967264
        %v1304 = vperm.slane %v913, %v1303
        %vm1305 = vcmask 326912
        %v1306 = vsel %vm1305, %v1304, %v1302
        %v1307 = vadd.s32 %v1289, 4294967256
        %v1308 = vperm.slane %v915, %v1307
        %vm1309 = vcmask 392512
        %v1310 = vsel %vm1309, %v1308, %v1306
        %v1311 = vadd.s32 %v1289, 4294967248
        %v1312 = vperm.slane %v917, %v1311
        %vm1313 = vcmask 458112
        %v1314 = vsel %vm1313, %v1312, %v1310
        %v1315 = vadd.s32 %v1289, 4294967240
        %v1316 = vperm.slane %v919, %v1315
        %vm1317 = vcmask 523712
        %v1318 = vsel %vm1317, %v1316, %v1314
        %v1319 = vadd.s32 %v1289, 4294967232
        %v1320 = vperm.slane %v921, %v1319
        %vm1321 = vcmask 589312
        %v1322 = vsel %vm1321, %v1320, %v1318
        %v1323 = vadd.s32 %v1289, 4294967224
        %v1324 = vperm.slane %v923, %v1323
        %vm1325 = vcmask 654912
        %v1326 = vsel %vm1325, %v1324, %v1322
        %v1327 = vadd.s32 %v1289, 4294967216
        %v1328 = vperm.slane %v925, %v1327
        %vm1329 = vcmask 720512
        %v1330 = vsel %vm1329, %v1328, %v1326
        %v1331 = vadd.s32 %v1289, 4294967208
        %v1332 = vperm.slane %v927, %v1331
        %vm1333 = vcmask 786112
        %v1334 = vsel %vm1333, %v1332, %v1330
        %v1335 = vadd.s32 %v1289, 4294967200
        %v1336 = vperm.slane %v929, %v1335
        %vm1337 = vcmask 851712
        %v1338 = vsel %vm1337, %v1336, %v1334
        %v1339 = vadd.s32 %v1289, 4294967192
        %v1340 = vperm.slane %v931, %v1339
        %vm1341 = vcmask 917312
        %v1342 = vsel %vm1341, %v1340, %v1338
        %v1343 = vadd.s32 %v1289, 4294967184
        %v1344 = vperm.slane %v933, %v1343
        %vm1345 = vcmask 982912
        %v1346 = vsel %vm1345, %v1344, %v1342
        %v1347 = vadd.s32 %v1289, 4294967176
        %v1348 = vperm.slane %v935, %v1347
        %vm1349 = vcmask 1048512
        %v1350 = vsel %vm1349, %v1348, %v1346
        %v1351 = vperm.slane %v937, %v1289
        %v1352 = vperm.slane %v939, %v1291
        %v1353 = vsel %vm1293, %v1352, %v1351
        %v1354 = vperm.slane %v941, %v1295
        %v1355 = vsel %vm1297, %v1354, %v1353
        %v1356 = vperm.slane %v943, %v1299
        %v1357 = vsel %vm1301, %v1356, %v1355
        %v1358 = vperm.slane %v945, %v1303
        %v1359 = vsel %vm1305, %v1358, %v1357
        %v1360 = vperm.slane %v947, %v1307
        %v1361 = vsel %vm1309, %v1360, %v1359
        %v1362 = vperm.slane %v949, %v1311
        %v1363 = vsel %vm1313, %v1362, %v1361
        %v1364 = vperm.slane %v951, %v1315
        %v1365 = vsel %vm1317, %v1364, %v1363
        %v1366 = vperm.slane %v953, %v1319
        %v1367 = vsel %vm1321, %v1366, %v1365
        %v1368 = vperm.slane %v955, %v1323
        %v1369 = vsel %vm1325, %v1368, %v1367
        %v1370 = vperm.slane %v957, %v1327
        %v1371 = vsel %vm1329, %v1370, %v1369
        %v1372 = vperm.slane %v959, %v1331
        %v1373 = vsel %vm1333, %v1372, %v1371
        %v1374 = vperm.slane %v961, %v1335
        %v1375 = vsel %vm1337, %v1374, %v1373
        %v1376 = vperm.slane %v963, %v1339
        %v1377 = vsel %vm1341, %v1376, %v1375
        %v1378 = vperm.slane %v965, %v1343
        %v1379 = vsel %vm1345, %v1378, %v1377
        %v1380 = vperm.slane %v967, %v1347
        %v1381 = vsel %vm1349, %v1380, %v1379
        %v1382 = vperm.slane %v969, %v1289
        %v1383 = vperm.slane %v971, %v1291
        %v1384 = vsel %vm1293, %v1383, %v1382
        %v1385 = vperm.slane %v973, %v1295
        %v1386 = vsel %vm1297, %v1385, %v1384
        %v1387 = vperm.slane %v975, %v1299
        %v1388 = vsel %vm1301, %v1387, %v1386
        %v1389 = vperm.slane %v977, %v1303
        %v1390 = vsel %vm1305, %v1389, %v1388
        %v1391 = vperm.slane %v979, %v1307
        %v1392 = vsel %vm1309, %v1391, %v1390
        %v1393 = vperm.slane %v981, %v1311
        %v1394 = vsel %vm1313, %v1393, %v1392
        %v1395 = vperm.slane %v983, %v1315
        %v1396 = vsel %vm1317, %v1395, %v1394
        %v1397 = vperm.slane %v985, %v1319
        %v1398 = vsel %vm1321, %v1397, %v1396
        %v1399 = vperm.slane %v987, %v1323
        %v1400 = vsel %vm1325, %v1399, %v1398
        %v1401 = vperm.slane %v989, %v1327
        %v1402 = vsel %vm1329, %v1401, %v1400
        %v1403 = vperm.slane %v991, %v1331
        %v1404 = vsel %vm1333, %v1403, %v1402
        %v1405 = vperm.slane %v993, %v1335
        %v1406 = vsel %vm1337, %v1405, %v1404
        %v1407 = vperm.slane %v995, %v1339
        %v1408 = vsel %vm1341, %v1407, %v1406
        %v1409 = vperm.slane %v997, %v1343
        %v1410 = vsel %vm1345, %v1409, %v1408
        %v1411 = vperm.slane %v999, %v1347
        %v1412 = vsel %vm1349, %v1411, %v1410
        %v1413 = vperm.slane %v1001, %v1289
        %v1414 = vperm.slane %v1003, %v1291
        %v1415 = vsel %vm1293, %v1414, %v1413
        %v1416 = vperm.slane %v1005, %v1295
        %v1417 = vsel %vm1297, %v1416, %v1415
        %v1418 = vperm.slane %v1007, %v1299
        %v1419 = vsel %vm1301, %v1418, %v1417
        %v1420 = vperm.slane %v1009, %v1303
        %v1421 = vsel %vm1305, %v1420, %v1419
        %v1422 = vperm.slane %v1011, %v1307
        %v1423 = vsel %vm1309, %v1422, %v1421
        %v1424 = vperm.slane %v1013, %v1311
        %v1425 = vsel %vm1313, %v1424, %v1423
        %v1426 = vperm.slane %v1015, %v1315
        %v1427 = vsel %vm1317, %v1426, %v1425
        %v1428 = vperm.slane %v1017, %v1319
        %v1429 = vsel %vm1321, %v1428, %v1427
        %v1430 = vperm.slane %v1019, %v1323
        %v1431 = vsel %vm1325, %v1430, %v1429
        %v1432 = vperm.slane %v1021, %v1327
        %v1433 = vsel %vm1329, %v1432, %v1431
        %v1434 = vperm.slane %v1023, %v1331
        %v1435 = vsel %vm1333, %v1434, %v1433
        %v1436 = vperm.slane %v1025, %v1335
        %v1437 = vsel %vm1337, %v1436, %v1435
        %v1438 = vperm.slane %v1027, %v1339
        %v1439 = vsel %vm1341, %v1438, %v1437
        %v1440 = vperm.slane %v1029, %v1343
        %v1441 = vsel %vm1345, %v1440, %v1439
        %v1442 = vperm.slane %v1031, %v1347
        %v1443 = vsel %vm1349, %v1442, %v1441
        %v1444 = vperm.slane %v1033, %v1289
        %v1445 = vperm.slane %v1035, %v1291
        %v1446 = vsel %vm1293, %v1445, %v1444
        %v1447 = vperm.slane %v1037, %v1295
        %v1448 = vsel %vm1297, %v1447, %v1446
        %v1449 = vperm.slane %v1039, %v1299
        %v1450 = vsel %vm1301, %v1449, %v1448
        %v1451 = vperm.slane %v1041, %v1303
        %v1452 = vsel %vm1305, %v1451, %v1450
        %v1453 = vperm.slane %v1043, %v1307
        %v1454 = vsel %vm1309, %v1453, %v1452
        %v1455 = vperm.slane %v1045, %v1311
        %v1456 = vsel %vm1313, %v1455, %v1454
        %v1457 = vperm.slane %v1047, %v1315
        %v1458 = vsel %vm1317, %v1457, %v1456
        %v1459 = vperm.slane %v1049, %v1319
        %v1460 = vsel %vm1321, %v1459, %v1458
        %v1461 = vperm.slane %v1051, %v1323
        %v1462 = vsel %vm1325, %v1461, %v1460
        %v1463 = vperm.slane %v1053, %v1327
        %v1464 = vsel %vm1329, %v1463, %v1462
        %v1465 = vperm.slane %v1055, %v1331
        %v1466 = vsel %vm1333, %v1465, %v1464
        %v1467 = vperm.slane %v1057, %v1335
        %v1468 = vsel %vm1337, %v1467, %v1466
        %v1469 = vperm.slane %v1059, %v1339
        %v1470 = vsel %vm1341, %v1469, %v1468
        %v1471 = vperm.slane %v1061, %v1343
        %v1472 = vsel %vm1345, %v1471, %v1470
        %v1473 = vperm.slane %v1063, %v1347
        %v1474 = vsel %vm1349, %v1473, %v1472
        %v1475 = vperm.slane %v1065, %v1289
        %v1476 = vperm.slane %v1067, %v1291
        %v1477 = vsel %vm1293, %v1476, %v1475
        %v1478 = vperm.slane %v1069, %v1295
        %v1479 = vsel %vm1297, %v1478, %v1477
        %v1480 = vperm.slane %v1071, %v1299
        %v1481 = vsel %vm1301, %v1480, %v1479
        %v1482 = vperm.slane %v1073, %v1303
        %v1483 = vsel %vm1305, %v1482, %v1481
        %v1484 = vperm.slane %v1075, %v1307
        %v1485 = vsel %vm1309, %v1484, %v1483
        %v1486 = vperm.slane %v1077, %v1311
        %v1487 = vsel %vm1313, %v1486, %v1485
        %v1488 = vperm.slane %v1079, %v1315
        %v1489 = vsel %vm1317, %v1488, %v1487
        %v1490 = vperm.slane %v1081, %v1319
        %v1491 = vsel %vm1321, %v1490, %v1489
        %v1492 = vperm.slane %v1083, %v1323
        %v1493 = vsel %vm1325, %v1492, %v1491
        %v1494 = vperm.slane %v1085, %v1327
        %v1495 = vsel %vm1329, %v1494, %v1493
        %v1496 = vperm.slane %v1087, %v1331
        %v1497 = vsel %vm1333, %v1496, %v1495
        %v1498 = vperm.slane %v1089, %v1335
        %v1499 = vsel %vm1337, %v1498, %v1497
        %v1500 = vperm.slane %v1091, %v1339
        %v1501 = vsel %vm1341, %v1500, %v1499
        %v1502 = vperm.slane %v1093, %v1343
        %v1503 = vsel %vm1345, %v1502, %v1501
        %v1504 = vperm.slane %v1095, %v1347
        %v1505 = vsel %vm1349, %v1504, %v1503
        %v1506 = vperm.slane %v1097, %v1289
        %v1507 = vperm.slane %v1099, %v1291
        %v1508 = vsel %vm1293, %v1507, %v1506
        %v1509 = vperm.slane %v1101, %v1295
        %v1510 = vsel %vm1297, %v1509, %v1508
        %v1511 = vperm.slane %v1103, %v1299
        %v1512 = vsel %vm1301, %v1511, %v1510
        %v1513 = vperm.slane %v1105, %v1303
        %v1514 = vsel %vm1305, %v1513, %v1512
        %v1515 = vperm.slane %v1107, %v1307
        %v1516 = vsel %vm1309, %v1515, %v1514
        %v1517 = vperm.slane %v1109, %v1311
        %v1518 = vsel %vm1313, %v1517, %v1516
        %v1519 = vperm.slane %v1111, %v1315
        %v1520 = vsel %vm1317, %v1519, %v1518
        %v1521 = vperm.slane %v1113, %v1319
        %v1522 = vsel %vm1321, %v1521, %v1520
        %v1523 = vperm.slane %v1115, %v1323
        %v1524 = vsel %vm1325, %v1523, %v1522
        %v1525 = vperm.slane %v1117, %v1327
        %v1526 = vsel %vm1329, %v1525, %v1524
        %v1527 = vperm.slane %v1119, %v1331
        %v1528 = vsel %vm1333, %v1527, %v1526
        %v1529 = vperm.slane %v1121, %v1335
        %v1530 = vsel %vm1337, %v1529, %v1528
        %v1531 = vperm.slane %v1123, %v1339
        %v1532 = vsel %vm1341, %v1531, %v1530
        %v1533 = vperm.slane %v1125, %v1343
        %v1534 = vsel %vm1345, %v1533, %v1532
        %v1535 = vperm.slane %v1127, %v1347
        %v1536 = vsel %vm1349, %v1535, %v1534
        %v1537 = vperm.slane %v1129, %v1289
        %v1538 = vperm.slane %v1131, %v1291
        %v1539 = vsel %vm1293, %v1538, %v1537
        %v1540 = vperm.slane %v1133, %v1295
        %v1541 = vsel %vm1297, %v1540, %v1539
        %v1542 = vperm.slane %v1135, %v1299
        %v1543 = vsel %vm1301, %v1542, %v1541
        %v1544 = vperm.slane %v1137, %v1303
        %v1545 = vsel %vm1305, %v1544, %v1543
        %v1546 = vperm.slane %v1139, %v1307
        %v1547 = vsel %vm1309, %v1546, %v1545
        %v1548 = vperm.slane %v1141, %v1311
        %v1549 = vsel %vm1313, %v1548, %v1547
        %v1550 = vperm.slane %v1143, %v1315
        %v1551 = vsel %vm1317, %v1550, %v1549
        %v1552 = vperm.slane %v1145, %v1319
        %v1553 = vsel %vm1321, %v1552, %v1551
        %v1554 = vperm.slane %v1147, %v1323
        %v1555 = vsel %vm1325, %v1554, %v1553
        %v1556 = vperm.slane %v1149, %v1327
        %v1557 = vsel %vm1329, %v1556, %v1555
        %v1558 = vperm.slane %v1151, %v1331
        %v1559 = vsel %vm1333, %v1558, %v1557
        %v1560 = vperm.slane %v1153, %v1335
        %v1561 = vsel %vm1337, %v1560, %v1559
        %v1562 = vperm.slane %v1155, %v1339
        %v1563 = vsel %vm1341, %v1562, %v1561
        %v1564 = vperm.slane %v1157, %v1343
        %v1565 = vsel %vm1345, %v1564, %v1563
        %v1566 = vperm.slane %v1159, %v1347
        %v1567 = vsel %vm1349, %v1566, %v1565
        %vm1568 = vcmask 1041409
        %v1569 = vsel %vm1568, %v1381, %v1350
        %vm1570 = vcmask 1042434
        %v1571 = vsel %vm1570, %v1412, %v1569
        %vm1572 = vcmask 1043459
        %v1573 = vsel %vm1572, %v1443, %v1571
        %vm1574 = vcmask 1044484
        %v1575 = vsel %vm1574, %v1474, %v1573
        %vm1576 = vcmask 1045509
        %v1577 = vsel %vm1576, %v1505, %v1575
        %vm1578 = vcmask 1046534
        %v1579 = vsel %vm1578, %v1536, %v1577
        %vm1580 = vcmask 1047559
        %v1581 = vsel %vm1580, %v1567, %v1579
        %1583 = vmax.xlane.f32.xlu0 %v1581
        %v1584 = vpop.xlane.xlu0 %1583
        %v1586 = vperm.slane %v1584, 0
        %v1587 = vperm.slane %v1584, 1
        %v1588 = vperm.slane %v1584, 2
        %v1589 = vperm.slane %v1584, 3
        %v1590 = vperm.slane %v1584, 4
        %v1591 = vperm.slane %v1584, 5
        %v1592 = vperm.slane %v1584, 6
        %v1593 = vperm.slane %v1584, 7
        %v1602 = vsub.f32 %v905, %v1586
        %v1603 = vsub.f32 %v907, %v1586
        %v1604 = vsub.f32 %v909, %v1586
        %v1605 = vsub.f32 %v911, %v1586
        %v1606 = vsub.f32 %v913, %v1586
        %v1607 = vsub.f32 %v915, %v1586
        %v1608 = vsub.f32 %v917, %v1586
        %v1609 = vsub.f32 %v919, %v1586
        %v1610 = vsub.f32 %v921, %v1586
        %v1611 = vsub.f32 %v923, %v1586
        %v1612 = vsub.f32 %v925, %v1586
        %v1613 = vsub.f32 %v927, %v1586
        %v1614 = vsub.f32 %v929, %v1586
        %v1615 = vsub.f32 %v931, %v1586
        %v1616 = vsub.f32 %v933, %v1586
        %v1617 = vsub.f32 %v935, %v1586
        %v1618 = vsub.f32 %v937, %v1587
        %v1619 = vsub.f32 %v939, %v1587
        %v1620 = vsub.f32 %v941, %v1587
        %v1621 = vsub.f32 %v943, %v1587
        %v1622 = vsub.f32 %v945, %v1587
        %v1623 = vsub.f32 %v947, %v1587
        %v1624 = vsub.f32 %v949, %v1587
        %v1625 = vsub.f32 %v951, %v1587
        %v1626 = vsub.f32 %v953, %v1587
        %v1627 = vsub.f32 %v955, %v1587
        %v1628 = vsub.f32 %v957, %v1587
        %v1629 = vsub.f32 %v959, %v1587
        %v1630 = vsub.f32 %v961, %v1587
        %v1631 = vsub.f32 %v963, %v1587
        %v1632 = vsub.f32 %v965, %v1587
        %v1633 = vsub.f32 %v967, %v1587
        %v1634 = vsub.f32 %v969, %v1588
        %v1635 = vsub.f32 %v971, %v1588
        %v1636 = vsub.f32 %v973, %v1588
        %v1637 = vsub.f32 %v975, %v1588
        %v1638 = vsub.f32 %v977, %v1588
        %v1639 = vsub.f32 %v979, %v1588
        %v1640 = vsub.f32 %v981, %v1588
        %v1641 = vsub.f32 %v983, %v1588
        %v1642 = vsub.f32 %v985, %v1588
        %v1643 = vsub.f32 %v987, %v1588
        %v1644 = vsub.f32 %v989, %v1588
        %v1645 = vsub.f32 %v991, %v1588
        %v1646 = vsub.f32 %v993, %v1588
        %v1647 = vsub.f32 %v995, %v1588
        %v1648 = vsub.f32 %v997, %v1588
        %v1649 = vsub.f32 %v999, %v1588
        %v1650 = vsub.f32 %v1001, %v1589
        %v1651 = vsub.f32 %v1003, %v1589
        %v1652 = vsub.f32 %v1005, %v1589
        %v1653 = vsub.f32 %v1007, %v1589
        %v1654 = vsub.f32 %v1009, %v1589
        %v1655 = vsub.f32 %v1011, %v1589
        %v1656 = vsub.f32 %v1013, %v1589
        %v1657 = vsub.f32 %v1015, %v1589
        %v1658 = vsub.f32 %v1017, %v1589
        %v1659 = vsub.f32 %v1019, %v1589
        %v1660 = vsub.f32 %v1021, %v1589
        %v1661 = vsub.f32 %v1023, %v1589
        %v1662 = vsub.f32 %v1025, %v1589
        %v1663 = vsub.f32 %v1027, %v1589
        %v1664 = vsub.f32 %v1029, %v1589
        %v1665 = vsub.f32 %v1031, %v1589
        %v1666 = vsub.f32 %v1033, %v1590
        %v1667 = vsub.f32 %v1035, %v1590
        %v1668 = vsub.f32 %v1037, %v1590
        %v1669 = vsub.f32 %v1039, %v1590
        %v1670 = vsub.f32 %v1041, %v1590
        %v1671 = vsub.f32 %v1043, %v1590
        %v1672 = vsub.f32 %v1045, %v1590
        %v1673 = vsub.f32 %v1047, %v1590
        %v1674 = vsub.f32 %v1049, %v1590
        %v1675 = vsub.f32 %v1051, %v1590
        %v1676 = vsub.f32 %v1053, %v1590
        %v1677 = vsub.f32 %v1055, %v1590
        %v1678 = vsub.f32 %v1057, %v1590
        %v1679 = vsub.f32 %v1059, %v1590
        %v1680 = vsub.f32 %v1061, %v1590
        %v1681 = vsub.f32 %v1063, %v1590
        %v1682 = vsub.f32 %v1065, %v1591
        %v1683 = vsub.f32 %v1067, %v1591
        %v1684 = vsub.f32 %v1069, %v1591
        %v1685 = vsub.f32 %v1071, %v1591
        %v1686 = vsub.f32 %v1073, %v1591
        %v1687 = vsub.f32 %v1075, %v1591
        %v1688 = vsub.f32 %v1077, %v1591
        %v1689 = vsub.f32 %v1079, %v1591
        %v1690 = vsub.f32 %v1081, %v1591
        %v1691 = vsub.f32 %v1083, %v1591
        %v1692 = vsub.f32 %v1085, %v1591
        %v1693 = vsub.f32 %v1087, %v1591
        %v1694 = vsub.f32 %v1089, %v1591
        %v1695 = vsub.f32 %v1091, %v1591
        %v1696 = vsub.f32 %v1093, %v1591
        %v1697 = vsub.f32 %v1095, %v1591
        %v1698 = vsub.f32 %v1097, %v1592
        %v1699 = vsub.f32 %v1099, %v1592
        %v1700 = vsub.f32 %v1101, %v1592
        %v1701 = vsub.f32 %v1103, %v1592
        %v1702 = vsub.f32 %v1105, %v1592
        %v1703 = vsub.f32 %v1107, %v1592
        %v1704 = vsub.f32 %v1109, %v1592
        %v1705 = vsub.f32 %v1111, %v1592
        %v1706 = vsub.f32 %v1113, %v1592
        %v1707 = vsub.f32 %v1115, %v1592
        %v1708 = vsub.f32 %v1117, %v1592
        %v1709 = vsub.f32 %v1119, %v1592
        %v1710 = vsub.f32 %v1121, %v1592
        %v1711 = vsub.f32 %v1123, %v1592
        %v1712 = vsub.f32 %v1125, %v1592
        %v1713 = vsub.f32 %v1127, %v1592
        %v1714 = vsub.f32 %v1129, %v1593
        %v1715 = vsub.f32 %v1131, %v1593
        %v1716 = vsub.f32 %v1133, %v1593
        %v1717 = vsub.f32 %v1135, %v1593
        %v1718 = vsub.f32 %v1137, %v1593
        %v1719 = vsub.f32 %v1139, %v1593
        %v1720 = vsub.f32 %v1141, %v1593
        %v1721 = vsub.f32 %v1143, %v1593
        %v1722 = vsub.f32 %v1145, %v1593
        %v1723 = vsub.f32 %v1147, %v1593
        %v1724 = vsub.f32 %v1149, %v1593
        %v1725 = vsub.f32 %v1151, %v1593
        %v1726 = vsub.f32 %v1153, %v1593
        %v1727 = vsub.f32 %v1155, %v1593
        %v1728 = vsub.f32 %v1157, %v1593
        %v1729 = vsub.f32 %v1159, %v1593
        %v1730 = vmul.f32 %v1602, 1.442695
        %v1731 = vpow.pop %v1730
        %v1732 = vmul.f32 %v1603, 1.442695
        %v1733 = vpow.pop %v1732
        %v1734 = vmul.f32 %v1604, 1.442695
        %v1735 = vpow.pop %v1734
        %v1736 = vmul.f32 %v1605, 1.442695
        %v1737 = vpow.pop %v1736
        %v1738 = vmul.f32 %v1606, 1.442695
        %v1739 = vpow.pop %v1738
        %v1740 = vmul.f32 %v1607, 1.442695
        %v1741 = vpow.pop %v1740
        %v1742 = vmul.f32 %v1608, 1.442695
        %v1743 = vpow.pop %v1742
        %v1744 = vmul.f32 %v1609, 1.442695
        %v1745 = vpow.pop %v1744
        %v1746 = vmul.f32 %v1610, 1.442695
        %v1747 = vpow.pop %v1746
        %v1748 = vmul.f32 %v1611, 1.442695
        %v1749 = vpow.pop %v1748
        %v1750 = vmul.f32 %v1612, 1.442695
        %v1751 = vpow.pop %v1750
        %v1752 = vmul.f32 %v1613, 1.442695
        %v1753 = vpow.pop %v1752
        %v1754 = vmul.f32 %v1614, 1.442695
        %v1755 = vpow.pop %v1754
        %v1756 = vmul.f32 %v1615, 1.442695
        %v1757 = vpow.pop %v1756
        %v1758 = vmul.f32 %v1616, 1.442695
        %v1759 = vpow.pop %v1758
        %v1760 = vmul.f32 %v1617, 1.442695
        %v1761 = vpow.pop %v1760
        %v1762 = vmul.f32 %v1618, 1.442695
        %v1763 = vpow.pop %v1762
        %v1764 = vmul.f32 %v1619, 1.442695
        %v1765 = vpow.pop %v1764
        %v1766 = vmul.f32 %v1620, 1.442695
        %v1767 = vpow.pop %v1766
        %v1768 = vmul.f32 %v1621, 1.442695
        %v1769 = vpow.pop %v1768
        %v1770 = vmul.f32 %v1622, 1.442695
        %v1771 = vpow.pop %v1770
        %v1772 = vmul.f32 %v1623, 1.442695
        %v1773 = vpow.pop %v1772
        %v1774 = vmul.f32 %v1624, 1.442695
        %v1775 = vpow.pop %v1774
        %v1776 = vmul.f32 %v1625, 1.442695
        %v1777 = vpow.pop %v1776
        %v1778 = vmul.f32 %v1626, 1.442695
        %v1779 = vpow.pop %v1778
        %v1780 = vmul.f32 %v1627, 1.442695
        %v1781 = vpow.pop %v1780
        %v1782 = vmul.f32 %v1628, 1.442695
        %v1783 = vpow.pop %v1782
        %v1784 = vmul.f32 %v1629, 1.442695
        %v1785 = vpow.pop %v1784
        %v1786 = vmul.f32 %v1630, 1.442695
        %v1787 = vpow.pop %v1786
        %v1788 = vmul.f32 %v1631, 1.442695
        %v1789 = vpow.pop %v1788
        %v1790 = vmul.f32 %v1632, 1.442695
        %v1791 = vpow.pop %v1790
        %v1792 = vmul.f32 %v1633, 1.442695
        %v1793 = vpow.pop %v1792
        %v1794 = vmul.f32 %v1634, 1.442695
        %v1795 = vpow.pop %v1794
        %v1796 = vmul.f32 %v1635, 1.442695
        %v1797 = vpow.pop %v1796
        %v1798 = vmul.f32 %v1636, 1.442695
        %v1799 = vpow.pop %v1798
        %v1800 = vmul.f32 %v1637, 1.442695
        %v1801 = vpow.pop %v1800
        %v1802 = vmul.f32 %v1638, 1.442695
        %v1803 = vpow.pop %v1802
        %v1804 = vmul.f32 %v1639, 1.442695
        %v1805 = vpow.pop %v1804
        %v1806 = vmul.f32 %v1640, 1.442695
        %v1807 = vpow.pop %v1806
        %v1808 = vmul.f32 %v1641, 1.442695
        %v1809 = vpow.pop %v1808
        %v1810 = vmul.f32 %v1642, 1.442695
        %v1811 = vpow.pop %v1810
        %v1812 = vmul.f32 %v1643, 1.442695
        %v1813 = vpow.pop %v1812
        %v1814 = vmul.f32 %v1644, 1.442695
        %v1815 = vpow.pop %v1814
        %v1816 = vmul.f32 %v1645, 1.442695
        %v1817 = vpow.pop %v1816
        %v1818 = vmul.f32 %v1646, 1.442695
        %v1819 = vpow.pop %v1818
        %v1820 = vmul.f32 %v1647, 1.442695
        %v1821 = vpow.pop %v1820
        %v1822 = vmul.f32 %v1648, 1.442695
        %v1823 = vpow.pop %v1822
        %v1824 = vmul.f32 %v1649, 1.442695
        %v1825 = vpow.pop %v1824
        %v1826 = vmul.f32 %v1650, 1.442695
        %v1827 = vpow.pop %v1826
        %v1828 = vmul.f32 %v1651, 1.442695
        %v1829 = vpow.pop %v1828
        %v1830 = vmul.f32 %v1652, 1.442695
        %v1831 = vpow.pop %v1830
        %v1832 = vmul.f32 %v1653, 1.442695
        %v1833 = vpow.pop %v1832
        %v1834 = vmul.f32 %v1654, 1.442695
        %v1835 = vpow.pop %v1834
        %v1836 = vmul.f32 %v1655, 1.442695
        %v1837 = vpow.pop %v1836
        %v1838 = vmul.f32 %v1656, 1.442695
        %v1839 = vpow.pop %v1838
        %v1840 = vmul.f32 %v1657, 1.442695
        %v1841 = vpow.pop %v1840
        %v1842 = vmul.f32 %v1658, 1.442695
        %v1843 = vpow.pop %v1842
        %v1844 = vmul.f32 %v1659, 1.442695
        %v1845 = vpow.pop %v1844
        %v1846 = vmul.f32 %v1660, 1.442695
        %v1847 = vpow.pop %v1846
        %v1848 = vmul.f32 %v1661, 1.442695
        %v1849 = vpow.pop %v1848
        %v1850 = vmul.f32 %v1662, 1.442695
        %v1851 = vpow.pop %v1850
        %v1852 = vmul.f32 %v1663, 1.442695
        %v1853 = vpow.pop %v1852
        %v1854 = vmul.f32 %v1664, 1.442695
        %v1855 = vpow.pop %v1854
        %v1856 = vmul.f32 %v1665, 1.442695
        %v1857 = vpow.pop %v1856
        %v1858 = vmul.f32 %v1666, 1.442695
        %v1859 = vpow.pop %v1858
        %v1860 = vmul.f32 %v1667, 1.442695
        %v1861 = vpow.pop %v1860
        %v1862 = vmul.f32 %v1668, 1.442695
        %v1863 = vpow.pop %v1862
        %v1864 = vmul.f32 %v1669, 1.442695
        %v1865 = vpow.pop %v1864
        %v1866 = vmul.f32 %v1670, 1.442695
        %v1867 = vpow.pop %v1866
        %v1868 = vmul.f32 %v1671, 1.442695
        %v1869 = vpow.pop %v1868
        %v1870 = vmul.f32 %v1672, 1.442695
        %v1871 = vpow.pop %v1870
        %v1872 = vmul.f32 %v1673, 1.442695
        %v1873 = vpow.pop %v1872
        %v1874 = vmul.f32 %v1674, 1.442695
        %v1875 = vpow.pop %v1874
        %v1876 = vmul.f32 %v1675, 1.442695
        %v1877 = vpow.pop %v1876
        %v1878 = vmul.f32 %v1676, 1.442695
        %v1879 = vpow.pop %v1878
        %v1880 = vmul.f32 %v1677, 1.442695
        %v1881 = vpow.pop %v1880
        %v1882 = vmul.f32 %v1678, 1.442695
        %v1883 = vpow.pop %v1882
        %v1884 = vmul.f32 %v1679, 1.442695
        %v1885 = vpow.pop %v1884
        %v1886 = vmul.f32 %v1680, 1.442695
        %v1887 = vpow.pop %v1886
        %v1888 = vmul.f32 %v1681, 1.442695
        %v1889 = vpow.pop %v1888
        %v1890 = vmul.f32 %v1682, 1.442695
        %v1891 = vpow.pop %v1890
        %v1892 = vmul.f32 %v1683, 1.442695
        %v1893 = vpow.pop %v1892
        %v1894 = vmul.f32 %v1684, 1.442695
        %v1895 = vpow.pop %v1894
        %v1896 = vmul.f32 %v1685, 1.442695
        %v1897 = vpow.pop %v1896
        %v1898 = vmul.f32 %v1686, 1.442695
        %v1899 = vpow.pop %v1898
        %v1900 = vmul.f32 %v1687, 1.442695
        %v1901 = vpow.pop %v1900
        %v1902 = vmul.f32 %v1688, 1.442695
        %v1903 = vpow.pop %v1902
        %v1904 = vmul.f32 %v1689, 1.442695
        %v1905 = vpow.pop %v1904
        %v1906 = vmul.f32 %v1690, 1.442695
        %v1907 = vpow.pop %v1906
        %v1908 = vmul.f32 %v1691, 1.442695
        %v1909 = vpow.pop %v1908
        %v1910 = vmul.f32 %v1692, 1.442695
        %v1911 = vpow.pop %v1910
        %v1912 = vmul.f32 %v1693, 1.442695
        %v1913 = vpow.pop %v1912
        %v1914 = vmul.f32 %v1694, 1.442695
        %v1915 = vpow.pop %v1914
        %v1916 = vmul.f32 %v1695, 1.442695
        %v1917 = vpow.pop %v1916
        %v1918 = vmul.f32 %v1696, 1.442695
        %v1919 = vpow.pop %v1918
        %v1920 = vmul.f32 %v1697, 1.442695
        %v1921 = vpow.pop %v1920
        %v1922 = vmul.f32 %v1698, 1.442695
        %v1923 = vpow.pop %v1922
        %v1924 = vmul.f32 %v1699, 1.442695
        %v1925 = vpow.pop %v1924
        %v1926 = vmul.f32 %v1700, 1.442695
        %v1927 = vpow.pop %v1926
        %v1928 = vmul.f32 %v1701, 1.442695
        %v1929 = vpow.pop %v1928
        %v1930 = vmul.f32 %v1702, 1.442695
        %v1931 = vpow.pop %v1930
        %v1932 = vmul.f32 %v1703, 1.442695
        %v1933 = vpow.pop %v1932
        %v1934 = vmul.f32 %v1704, 1.442695
        %v1935 = vpow.pop %v1934
        %v1936 = vmul.f32 %v1705, 1.442695
        %v1937 = vpow.pop %v1936
        %v1938 = vmul.f32 %v1706, 1.442695
        %v1939 = vpow.pop %v1938
        %v1940 = vmul.f32 %v1707, 1.442695
        %v1941 = vpow.pop %v1940
        %v1942 = vmul.f32 %v1708, 1.442695
        %v1943 = vpow.pop %v1942
        %v1944 = vmul.f32 %v1709, 1.442695
        %v1945 = vpow.pop %v1944
        %v1946 = vmul.f32 %v1710, 1.442695
        %v1947 = vpow.pop %v1946
        %v1948 = vmul.f32 %v1711, 1.442695
        %v1949 = vpow.pop %v1948
        %v1950 = vmul.f32 %v1712, 1.442695
        %v1951 = vpow.pop %v1950
        %v1952 = vmul.f32 %v1713, 1.442695
        %v1953 = vpow.pop %v1952
        %v1954 = vmul.f32 %v1714, 1.442695
        %v1955 = vpow.pop %v1954
        %v1956 = vmul.f32 %v1715, 1.442695
        %v1957 = vpow.pop %v1956
        %v1958 = vmul.f32 %v1716, 1.442695
        %v1959 = vpow.pop %v1958
        %v1960 = vmul.f32 %v1717, 1.442695
        %v1961 = vpow.pop %v1960
        %v1962 = vmul.f32 %v1718, 1.442695
        %v1963 = vpow.pop %v1962
        %v1964 = vmul.f32 %v1719, 1.442695
        %v1965 = vpow.pop %v1964
        %v1966 = vmul.f32 %v1720, 1.442695
        %v1967 = vpow.pop %v1966
        %v1968 = vmul.f32 %v1721, 1.442695
        %v1969 = vpow.pop %v1968
        %v1970 = vmul.f32 %v1722, 1.442695
        %v1971 = vpow.pop %v1970
        %v1972 = vmul.f32 %v1723, 1.442695
        %v1973 = vpow.pop %v1972
        %v1974 = vmul.f32 %v1724, 1.442695
        %v1975 = vpow.pop %v1974
        %v1976 = vmul.f32 %v1725, 1.442695
        %v1977 = vpow.pop %v1976
        %v1978 = vmul.f32 %v1726, 1.442695
        %v1979 = vpow.pop %v1978
        %v1980 = vmul.f32 %v1727, 1.442695
        %v1981 = vpow.pop %v1980
        %v1982 = vmul.f32 %v1728, 1.442695
        %v1983 = vpow.pop %v1982
        %v1984 = vmul.f32 %v1729, 1.442695
        %v1985 = vpow.pop %v1984
        %2114 = vset.pattern.permute.xlu0 0
        %2115 = vperm.xlu0 %2114, %v1731
        %v2116 = vpop.permute.xlu0 %2115
        %2117 = vset.pattern.permute.xlu0 0
        %2118 = vperm.xlu0 %2117, %v1733
        %v2119 = vpop.permute.xlu0 %2118
        %2120 = vset.pattern.permute.xlu0 0
        %2121 = vperm.xlu0 %2120, %v1735
        %v2122 = vpop.permute.xlu0 %2121
        %2123 = vset.pattern.permute.xlu0 0
        %2124 = vperm.xlu0 %2123, %v1737
        %v2125 = vpop.permute.xlu0 %2124
        %2126 = vset.pattern.permute.xlu0 0
        %2127 = vperm.xlu0 %2126, %v1739
        %v2128 = vpop.permute.xlu0 %2127
        %2129 = vset.pattern.permute.xlu0 0
        %2130 = vperm.xlu0 %2129, %v1741
        %v2131 = vpop.permute.xlu0 %2130
        %2132 = vset.pattern.permute.xlu0 0
        %2133 = vperm.xlu0 %2132, %v1743
        %v2134 = vpop.permute.xlu0 %2133
        %2135 = vset.pattern.permute.xlu0 0
        %2136 = vperm.xlu0 %2135, %v1745
        %v2137 = vpop.permute.xlu0 %2136
        %2138 = vset.pattern.permute.xlu0 0
        %2139 = vperm.xlu0 %2138, %v1747
        %v2140 = vpop.permute.xlu0 %2139
        %2141 = vset.pattern.permute.xlu0 0
        %2142 = vperm.xlu0 %2141, %v1749
        %v2143 = vpop.permute.xlu0 %2142
        %2144 = vset.pattern.permute.xlu0 0
        %2145 = vperm.xlu0 %2144, %v1751
        %v2146 = vpop.permute.xlu0 %2145
        %2147 = vset.pattern.permute.xlu0 0
        %2148 = vperm.xlu0 %2147, %v1753
        %v2149 = vpop.permute.xlu0 %2148
        %2150 = vset.pattern.permute.xlu0 0
        %2151 = vperm.xlu0 %2150, %v1755
        %v2152 = vpop.permute.xlu0 %2151
        %2153 = vset.pattern.permute.xlu0 0
        %2154 = vperm.xlu0 %2153, %v1757
        %v2155 = vpop.permute.xlu0 %2154
        %2156 = vset.pattern.permute.xlu0 0
        %2157 = vperm.xlu0 %2156, %v1759
        %v2158 = vpop.permute.xlu0 %2157
        %2159 = vset.pattern.permute.xlu0 0
        %2160 = vperm.xlu0 %2159, %v1761
        %v2161 = vpop.permute.xlu0 %2160
        %2162 = vset.pattern.permute.xlu0 0
        %2163 = vperm.xlu0 %2162, %v1763
        %v2164 = vpop.permute.xlu0 %2163
        %2165 = vset.pattern.permute.xlu0 0
        %2166 = vperm.xlu0 %2165, %v1765
        %v2167 = vpop.permute.xlu0 %2166
        %2168 = vset.pattern.permute.xlu0 0
        %2169 = vperm.xlu0 %2168, %v1767
        %v2170 = vpop.permute.xlu0 %2169
        %2171 = vset.pattern.permute.xlu0 0
        %2172 = vperm.xlu0 %2171, %v1769
        %v2173 = vpop.permute.xlu0 %2172
        %2174 = vset.pattern.permute.xlu0 0
        %2175 = vperm.xlu0 %2174, %v1771
        %v2176 = vpop.permute.xlu0 %2175
        %2177 = vset.pattern.permute.xlu0 0
        %2178 = vperm.xlu0 %2177, %v1773
        %v2179 = vpop.permute.xlu0 %2178
        %2180 = vset.pattern.permute.xlu0 0
        %2181 = vperm.xlu0 %2180, %v1775
        %v2182 = vpop.permute.xlu0 %2181
        %2183 = vset.pattern.permute.xlu0 0
        %2184 = vperm.xlu0 %2183, %v1777
        %v2185 = vpop.permute.xlu0 %2184
        %2186 = vset.pattern.permute.xlu0 0
        %2187 = vperm.xlu0 %2186, %v1779
        %v2188 = vpop.permute.xlu0 %2187
        %2189 = vset.pattern.permute.xlu0 0
        %2190 = vperm.xlu0 %2189, %v1781
        %v2191 = vpop.permute.xlu0 %2190
        %2192 = vset.pattern.permute.xlu0 0
        %2193 = vperm.xlu0 %2192, %v1783
        %v2194 = vpop.permute.xlu0 %2193
        %2195 = vset.pattern.permute.xlu0 0
        %2196 = vperm.xlu0 %2195, %v1785
        %v2197 = vpop.permute.xlu0 %2196
        %2198 = vset.pattern.permute.xlu0 0
        %2199 = vperm.xlu0 %2198, %v1787
        %v2200 = vpop.permute.xlu0 %2199
        %2201 = vset.pattern.permute.xlu0 0
        %2202 = vperm.xlu0 %2201, %v1789
        %v2203 = vpop.permute.xlu0 %2202
        %2204 = vset.pattern.permute.xlu0 0
        %2205 = vperm.xlu0 %2204, %v1791
        %v2206 = vpop.permute.xlu0 %2205
        %2207 = vset.pattern.permute.xlu0 0
        %2208 = vperm.xlu0 %2207, %v1793
        %v2209 = vpop.permute.xlu0 %2208
        %2210 = vset.pattern.permute.xlu0 0
        %2211 = vperm.xlu0 %2210, %v1795
        %v2212 = vpop.permute.xlu0 %2211
        %2213 = vset.pattern.permute.xlu0 0
        %2214 = vperm.xlu0 %2213, %v1797
        %v2215 = vpop.permute.xlu0 %2214
        %2216 = vset.pattern.permute.xlu0 0
        %2217 = vperm.xlu0 %2216, %v1799
        %v2218 = vpop.permute.xlu0 %2217
        %2219 = vset.pattern.permute.xlu0 0
        %2220 = vperm.xlu0 %2219, %v1801
        %v2221 = vpop.permute.xlu0 %2220
        %2222 = vset.pattern.permute.xlu0 0
        %2223 = vperm.xlu0 %2222, %v1803
        %v2224 = vpop.permute.xlu0 %2223
        %2225 = vset.pattern.permute.xlu0 0
        %2226 = vperm.xlu0 %2225, %v1805
        %v2227 = vpop.permute.xlu0 %2226
        %2228 = vset.pattern.permute.xlu0 0
        %2229 = vperm.xlu0 %2228, %v1807
        %v2230 = vpop.permute.xlu0 %2229
        %2231 = vset.pattern.permute.xlu0 0
        %2232 = vperm.xlu0 %2231, %v1809
        %v2233 = vpop.permute.xlu0 %2232
        %2234 = vset.pattern.permute.xlu0 0
        %2235 = vperm.xlu0 %2234, %v1811
        %v2236 = vpop.permute.xlu0 %2235
        %2237 = vset.pattern.permute.xlu0 0
        %2238 = vperm.xlu0 %2237, %v1813
        %v2239 = vpop.permute.xlu0 %2238
        %2240 = vset.pattern.permute.xlu0 0
        %2241 = vperm.xlu0 %2240, %v1815
        %v2242 = vpop.permute.xlu0 %2241
        %2243 = vset.pattern.permute.xlu0 0
        %2244 = vperm.xlu0 %2243, %v1817
        %v2245 = vpop.permute.xlu0 %2244
        %2246 = vset.pattern.permute.xlu0 0
        %2247 = vperm.xlu0 %2246, %v1819
        %v2248 = vpop.permute.xlu0 %2247
        %2249 = vset.pattern.permute.xlu0 0
        %2250 = vperm.xlu0 %2249, %v1821
        %v2251 = vpop.permute.xlu0 %2250
        %2252 = vset.pattern.permute.xlu0 0
        %2253 = vperm.xlu0 %2252, %v1823
        %v2254 = vpop.permute.xlu0 %2253
        %2255 = vset.pattern.permute.xlu0 0
        %2256 = vperm.xlu0 %2255, %v1825
        %v2257 = vpop.permute.xlu0 %2256
        %2258 = vset.pattern.permute.xlu0 0
        %2259 = vperm.xlu0 %2258, %v1827
        %v2260 = vpop.permute.xlu0 %2259
        %2261 = vset.pattern.permute.xlu0 0
        %2262 = vperm.xlu0 %2261, %v1829
        %v2263 = vpop.permute.xlu0 %2262
        %2264 = vset.pattern.permute.xlu0 0
        %2265 = vperm.xlu0 %2264, %v1831
        %v2266 = vpop.permute.xlu0 %2265
        %2267 = vset.pattern.permute.xlu0 0
        %2268 = vperm.xlu0 %2267, %v1833
        %v2269 = vpop.permute.xlu0 %2268
        %2270 = vset.pattern.permute.xlu0 0
        %2271 = vperm.xlu0 %2270, %v1835
        %v2272 = vpop.permute.xlu0 %2271
        %2273 = vset.pattern.permute.xlu0 0
        %2274 = vperm.xlu0 %2273, %v1837
        %v2275 = vpop.permute.xlu0 %2274
        %2276 = vset.pattern.permute.xlu0 0
        %2277 = vperm.xlu0 %2276, %v1839
        %v2278 = vpop.permute.xlu0 %2277
        %2279 = vset.pattern.permute.xlu0 0
        %2280 = vperm.xlu0 %2279, %v1841
        %v2281 = vpop.permute.xlu0 %2280
        %2282 = vset.pattern.permute.xlu0 0
        %2283 = vperm.xlu0 %2282, %v1843
        %v2284 = vpop.permute.xlu0 %2283
        %2285 = vset.pattern.permute.xlu0 0
        %2286 = vperm.xlu0 %2285, %v1845
        %v2287 = vpop.permute.xlu0 %2286
        %2288 = vset.pattern.permute.xlu0 0
        %2289 = vperm.xlu0 %2288, %v1847
        %v2290 = vpop.permute.xlu0 %2289
        %2291 = vset.pattern.permute.xlu0 0
        %2292 = vperm.xlu0 %2291, %v1849
        %v2293 = vpop.permute.xlu0 %2292
        %2294 = vset.pattern.permute.xlu0 0
        %2295 = vperm.xlu0 %2294, %v1851
        %v2296 = vpop.permute.xlu0 %2295
        %2297 = vset.pattern.permute.xlu0 0
        %2298 = vperm.xlu0 %2297, %v1853
        %v2299 = vpop.permute.xlu0 %2298
        %2300 = vset.pattern.permute.xlu0 0
        %2301 = vperm.xlu0 %2300, %v1855
        %v2302 = vpop.permute.xlu0 %2301
        %2303 = vset.pattern.permute.xlu0 0
        %2304 = vperm.xlu0 %2303, %v1857
        %v2305 = vpop.permute.xlu0 %2304
        %2306 = vset.pattern.permute.xlu0 0
        %2307 = vperm.xlu0 %2306, %v1859
        %v2308 = vpop.permute.xlu0 %2307
        %2309 = vset.pattern.permute.xlu0 0
        %2310 = vperm.xlu0 %2309, %v1861
        %v2311 = vpop.permute.xlu0 %2310
        %2312 = vset.pattern.permute.xlu0 0
        %2313 = vperm.xlu0 %2312, %v1863
        %v2314 = vpop.permute.xlu0 %2313
        %2315 = vset.pattern.permute.xlu0 0
        %2316 = vperm.xlu0 %2315, %v1865
        %v2317 = vpop.permute.xlu0 %2316
        %2318 = vset.pattern.permute.xlu0 0
        %2319 = vperm.xlu0 %2318, %v1867
        %v2320 = vpop.permute.xlu0 %2319
        %2321 = vset.pattern.permute.xlu0 0
        %2322 = vperm.xlu0 %2321, %v1869
        %v2323 = vpop.permute.xlu0 %2322
        %2324 = vset.pattern.permute.xlu0 0
        %2325 = vperm.xlu0 %2324, %v1871
        %v2326 = vpop.permute.xlu0 %2325
        %2327 = vset.pattern.permute.xlu0 0
        %2328 = vperm.xlu0 %2327, %v1873
        %v2329 = vpop.permute.xlu0 %2328
        %2330 = vset.pattern.permute.xlu0 0
        %2331 = vperm.xlu0 %2330, %v1875
        %v2332 = vpop.permute.xlu0 %2331
        %2333 = vset.pattern.permute.xlu0 0
        %2334 = vperm.xlu0 %2333, %v1877
        %v2335 = vpop.permute.xlu0 %2334
        %2336 = vset.pattern.permute.xlu0 0
        %2337 = vperm.xlu0 %2336, %v1879
        %v2338 = vpop.permute.xlu0 %2337
        %2339 = vset.pattern.permute.xlu0 0
        %2340 = vperm.xlu0 %2339, %v1881
        %v2341 = vpop.permute.xlu0 %2340
        %2342 = vset.pattern.permute.xlu0 0
        %2343 = vperm.xlu0 %2342, %v1883
        %v2344 = vpop.permute.xlu0 %2343
        %2345 = vset.pattern.permute.xlu0 0
        %2346 = vperm.xlu0 %2345, %v1885
        %v2347 = vpop.permute.xlu0 %2346
        %2348 = vset.pattern.permute.xlu0 0
        %2349 = vperm.xlu0 %2348, %v1887
        %v2350 = vpop.permute.xlu0 %2349
        %2351 = vset.pattern.permute.xlu0 0
        %2352 = vperm.xlu0 %2351, %v1889
        %v2353 = vpop.permute.xlu0 %2352
        %2354 = vset.pattern.permute.xlu0 0
        %2355 = vperm.xlu0 %2354, %v1891
        %v2356 = vpop.permute.xlu0 %2355
        %2357 = vset.pattern.permute.xlu0 0
        %2358 = vperm.xlu0 %2357, %v1893
        %v2359 = vpop.permute.xlu0 %2358
        %2360 = vset.pattern.permute.xlu0 0
        %2361 = vperm.xlu0 %2360, %v1895
        %v2362 = vpop.permute.xlu0 %2361
        %2363 = vset.pattern.permute.xlu0 0
        %2364 = vperm.xlu0 %2363, %v1897
        %v2365 = vpop.permute.xlu0 %2364
        %2366 = vset.pattern.permute.xlu0 0
        %2367 = vperm.xlu0 %2366, %v1899
        %v2368 = vpop.permute.xlu0 %2367
        %2369 = vset.pattern.permute.xlu0 0
        %2370 = vperm.xlu0 %2369, %v1901
        %v2371 = vpop.permute.xlu0 %2370
        %2372 = vset.pattern.permute.xlu0 0
        %2373 = vperm.xlu0 %2372, %v1903
        %v2374 = vpop.permute.xlu0 %2373
        %2375 = vset.pattern.permute.xlu0 0
        %2376 = vperm.xlu0 %2375, %v1905
        %v2377 = vpop.permute.xlu0 %2376
        %2378 = vset.pattern.permute.xlu0 0
        %2379 = vperm.xlu0 %2378, %v1907
        %v2380 = vpop.permute.xlu0 %2379
        %2381 = vset.pattern.permute.xlu0 0
        %2382 = vperm.xlu0 %2381, %v1909
        %v2383 = vpop.permute.xlu0 %2382
        %2384 = vset.pattern.permute.xlu0 0
        %2385 = vperm.xlu0 %2384, %v1911
        %v2386 = vpop.permute.xlu0 %2385
        %2387 = vset.pattern.permute.xlu0 0
        %2388 = vperm.xlu0 %2387, %v1913
        %v2389 = vpop.permute.xlu0 %2388
        %2390 = vset.pattern.permute.xlu0 0
        %2391 = vperm.xlu0 %2390, %v1915
        %v2392 = vpop.permute.xlu0 %2391
        %2393 = vset.pattern.permute.xlu0 0
        %2394 = vperm.xlu0 %2393, %v1917
        %v2395 = vpop.permute.xlu0 %2394
        %2396 = vset.pattern.permute.xlu0 0
        %2397 = vperm.xlu0 %2396, %v1919
        %v2398 = vpop.permute.xlu0 %2397
        %2399 = vset.pattern.permute.xlu0 0
        %2400 = vperm.xlu0 %2399, %v1921
        %v2401 = vpop.permute.xlu0 %2400
        %2402 = vset.pattern.permute.xlu0 0
        %2403 = vperm.xlu0 %2402, %v1923
        %v2404 = vpop.permute.xlu0 %2403
        %2405 = vset.pattern.permute.xlu0 0
        %2406 = vperm.xlu0 %2405, %v1925
        %v2407 = vpop.permute.xlu0 %2406
        %2408 = vset.pattern.permute.xlu0 0
        %2409 = vperm.xlu0 %2408, %v1927
        %v2410 = vpop.permute.xlu0 %2409
        %2411 = vset.pattern.permute.xlu0 0
        %2412 = vperm.xlu0 %2411, %v1929
        %v2413 = vpop.permute.xlu0 %2412
        %2414 = vset.pattern.permute.xlu0 0
        %2415 = vperm.xlu0 %2414, %v1931
        %v2416 = vpop.permute.xlu0 %2415
        %2417 = vset.pattern.permute.xlu0 0
        %2418 = vperm.xlu0 %2417, %v1933
        %v2419 = vpop.permute.xlu0 %2418
        %2420 = vset.pattern.permute.xlu0 0
        %2421 = vperm.xlu0 %2420, %v1935
        %v2422 = vpop.permute.xlu0 %2421
        %2423 = vset.pattern.permute.xlu0 0
        %2424 = vperm.xlu0 %2423, %v1937
        %v2425 = vpop.permute.xlu0 %2424
        %2426 = vset.pattern.permute.xlu0 0
        %2427 = vperm.xlu0 %2426, %v1939
        %v2428 = vpop.permute.xlu0 %2427
        %2429 = vset.pattern.permute.xlu0 0
        %2430 = vperm.xlu0 %2429, %v1941
        %v2431 = vpop.permute.xlu0 %2430
        %2432 = vset.pattern.permute.xlu0 0
        %2433 = vperm.xlu0 %2432, %v1943
        %v2434 = vpop.permute.xlu0 %2433
        %2435 = vset.pattern.permute.xlu0 0
        %2436 = vperm.xlu0 %2435, %v1945
        %v2437 = vpop.permute.xlu0 %2436
        %2438 = vset.pattern.permute.xlu0 0
        %2439 = vperm.xlu0 %2438, %v1947
        %v2440 = vpop.permute.xlu0 %2439
        %2441 = vset.pattern.permute.xlu0 0
        %2442 = vperm.xlu0 %2441, %v1949
        %v2443 = vpop.permute.xlu0 %2442
        %2444 = vset.pattern.permute.xlu0 0
        %2445 = vperm.xlu0 %2444, %v1951
        %v2446 = vpop.permute.xlu0 %2445
        %2447 = vset.pattern.permute.xlu0 0
        %2448 = vperm.xlu0 %2447, %v1953
        %v2449 = vpop.permute.xlu0 %2448
        %2450 = vset.pattern.permute.xlu0 0
        %2451 = vperm.xlu0 %2450, %v1955
        %v2452 = vpop.permute.xlu0 %2451
        %2453 = vset.pattern.permute.xlu0 0
        %2454 = vperm.xlu0 %2453, %v1957
        %v2455 = vpop.permute.xlu0 %2454
        %2456 = vset.pattern.permute.xlu0 0
        %2457 = vperm.xlu0 %2456, %v1959
        %v2458 = vpop.permute.xlu0 %2457
        %2459 = vset.pattern.permute.xlu0 0
        %2460 = vperm.xlu0 %2459, %v1961
        %v2461 = vpop.permute.xlu0 %2460
        %2462 = vset.pattern.permute.xlu0 0
        %2463 = vperm.xlu0 %2462, %v1963
        %v2464 = vpop.permute.xlu0 %2463
        %2465 = vset.pattern.permute.xlu0 0
        %2466 = vperm.xlu0 %2465, %v1965
        %v2467 = vpop.permute.xlu0 %2466
        %2468 = vset.pattern.permute.xlu0 0
        %2469 = vperm.xlu0 %2468, %v1967
        %v2470 = vpop.permute.xlu0 %2469
        %2471 = vset.pattern.permute.xlu0 0
        %2472 = vperm.xlu0 %2471, %v1969
        %v2473 = vpop.permute.xlu0 %2472
        %2474 = vset.pattern.permute.xlu0 0
        %2475 = vperm.xlu0 %2474, %v1971
        %v2476 = vpop.permute.xlu0 %2475
        %2477 = vset.pattern.permute.xlu0 0
        %2478 = vperm.xlu0 %2477, %v1973
        %v2479 = vpop.permute.xlu0 %2478
        %2480 = vset.pattern.permute.xlu0 0
        %2481 = vperm.xlu0 %2480, %v1975
        %v2482 = vpop.permute.xlu0 %2481
        %2483 = vset.pattern.permute.xlu0 0
        %2484 = vperm.xlu0 %2483, %v1977
        %v2485 = vpop.permute.xlu0 %2484
        %2486 = vset.pattern.permute.xlu0 0
        %2487 = vperm.xlu0 %2486, %v1979
        %v2488 = vpop.permute.xlu0 %2487
        %2489 = vset.pattern.permute.xlu0 0
        %2490 = vperm.xlu0 %2489, %v1981
        %v2491 = vpop.permute.xlu0 %2490
        %2492 = vset.pattern.permute.xlu0 0
        %2493 = vperm.xlu0 %2492, %v1983
        %v2494 = vpop.permute.xlu0 %2493
        %2495 = vset.pattern.permute.xlu0 0
        %2496 = vperm.xlu0 %2495, %v1985
        %v2497 = vpop.permute.xlu0 %2496
        %v2498 = vperm.slane %v2116, %v1289
        %v2499 = vperm.slane %v2119, %v1291
        %v2500 = vsel %vm1293, %v2499, %v2498
        %v2501 = vperm.slane %v2122, %v1295
        %v2502 = vsel %vm1297, %v2501, %v2500
        %v2503 = vperm.slane %v2125, %v1299
        %v2504 = vsel %vm1301, %v2503, %v2502
        %v2505 = vperm.slane %v2128, %v1303
        %v2506 = vsel %vm1305, %v2505, %v2504
        %v2507 = vperm.slane %v2131, %v1307
        %v2508 = vsel %vm1309, %v2507, %v2506
        %v2509 = vperm.slane %v2134, %v1311
        %v2510 = vsel %vm1313, %v2509, %v2508
        %v2511 = vperm.slane %v2137, %v1315
        %v2512 = vsel %vm1317, %v2511, %v2510
        %v2513 = vperm.slane %v2140, %v1319
        %v2514 = vsel %vm1321, %v2513, %v2512
        %v2515 = vperm.slane %v2143, %v1323
        %v2516 = vsel %vm1325, %v2515, %v2514
        %v2517 = vperm.slane %v2146, %v1327
        %v2518 = vsel %vm1329, %v2517, %v2516
        %v2519 = vperm.slane %v2149, %v1331
        %v2520 = vsel %vm1333, %v2519, %v2518
        %v2521 = vperm.slane %v2152, %v1335
        %v2522 = vsel %vm1337, %v2521, %v2520
        %v2523 = vperm.slane %v2155, %v1339
        %v2524 = vsel %vm1341, %v2523, %v2522
        %v2525 = vperm.slane %v2158, %v1343
        %v2526 = vsel %vm1345, %v2525, %v2524
        %v2527 = vperm.slane %v2161, %v1347
        %v2528 = vsel %vm1349, %v2527, %v2526
        %v2529 = vperm.slane %v2164, %v1289
        %v2530 = vperm.slane %v2167, %v1291
        %v2531 = vsel %vm1293, %v2530, %v2529
        %v2532 = vperm.slane %v2170, %v1295
        %v2533 = vsel %vm1297, %v2532, %v2531
        %v2534 = vperm.slane %v2173, %v1299
        %v2535 = vsel %vm1301, %v2534, %v2533
        %v2536 = vperm.slane %v2176, %v1303
        %v2537 = vsel %vm1305, %v2536, %v2535
        %v2538 = vperm.slane %v2179, %v1307
        %v2539 = vsel %vm1309, %v2538, %v2537
        %v2540 = vperm.slane %v2182, %v1311
        %v2541 = vsel %vm1313, %v2540, %v2539
        %v2542 = vperm.slane %v2185, %v1315
        %v2543 = vsel %vm1317, %v2542, %v2541
        %v2544 = vperm.slane %v2188, %v1319
        %v2545 = vsel %vm1321, %v2544, %v2543
        %v2546 = vperm.slane %v2191, %v1323
        %v2547 = vsel %vm1325, %v2546, %v2545
        %v2548 = vperm.slane %v2194, %v1327
        %v2549 = vsel %vm1329, %v2548, %v2547
        %v2550 = vperm.slane %v2197, %v1331
        %v2551 = vsel %vm1333, %v2550, %v2549
        %v2552 = vperm.slane %v2200, %v1335
        %v2553 = vsel %vm1337, %v2552, %v2551
        %v2554 = vperm.slane %v2203, %v1339
        %v2555 = vsel %vm1341, %v2554, %v2553
        %v2556 = vperm.slane %v2206, %v1343
        %v2557 = vsel %vm1345, %v2556, %v2555
        %v2558 = vperm.slane %v2209, %v1347
        %v2559 = vsel %vm1349, %v2558, %v2557
        %v2560 = vperm.slane %v2212, %v1289
        %v2561 = vperm.slane %v2215, %v1291
        %v2562 = vsel %vm1293, %v2561, %v2560
        %v2563 = vperm.slane %v2218, %v1295
        %v2564 = vsel %vm1297, %v2563, %v2562
        %v2565 = vperm.slane %v2221, %v1299
        %v2566 = vsel %vm1301, %v2565, %v2564
        %v2567 = vperm.slane %v2224, %v1303
        %v2568 = vsel %vm1305, %v2567, %v2566
        %v2569 = vperm.slane %v2227, %v1307
        %v2570 = vsel %vm1309, %v2569, %v2568
        %v2571 = vperm.slane %v2230, %v1311
        %v2572 = vsel %vm1313, %v2571, %v2570
        %v2573 = vperm.slane %v2233, %v1315
        %v2574 = vsel %vm1317, %v2573, %v2572
        %v2575 = vperm.slane %v2236, %v1319
        %v2576 = vsel %vm1321, %v2575, %v2574
        %v2577 = vperm.slane %v2239, %v1323
        %v2578 = vsel %vm1325, %v2577, %v2576
        %v2579 = vperm.slane %v2242, %v1327
        %v2580 = vsel %vm1329, %v2579, %v2578
        %v2581 = vperm.slane %v2245, %v1331
        %v2582 = vsel %vm1333, %v2581, %v2580
        %v2583 = vperm.slane %v2248, %v1335
        %v2584 = vsel %vm1337, %v2583, %v2582
        %v2585 = vperm.slane %v2251, %v1339
        %v2586 = vsel %vm1341, %v2585, %v2584
        %v2587 = vperm.slane %v2254, %v1343
        %v2588 = vsel %vm1345, %v2587, %v2586
        %v2589 = vperm.slane %v2257, %v1347
        %v2590 = vsel %vm1349, %v2589, %v2588
        %v2591 = vperm.slane %v2260, %v1289
        %v2592 = vperm.slane %v2263, %v1291
        %v2593 = vsel %vm1293, %v2592, %v2591
        %v2594 = vperm.slane %v2266, %v1295
        %v2595 = vsel %vm1297, %v2594, %v2593
        %v2596 = vperm.slane %v2269, %v1299
        %v2597 = vsel %vm1301, %v2596, %v2595
        %v2598 = vperm.slane %v2272, %v1303
        %v2599 = vsel %vm1305, %v2598, %v2597
        %v2600 = vperm.slane %v2275, %v1307
        %v2601 = vsel %vm1309, %v2600, %v2599
        %v2602 = vperm.slane %v2278, %v1311
        %v2603 = vsel %vm1313, %v2602, %v2601
        %v2604 = vperm.slane %v2281, %v1315
        %v2605 = vsel %vm1317, %v2604, %v2603
        %v2606 = vperm.slane %v2284, %v1319
        %v2607 = vsel %vm1321, %v2606, %v2605
        %v2608 = vperm.slane %v2287, %v1323
        %v2609 = vsel %vm1325, %v2608, %v2607
        %v2610 = vperm.slane %v2290, %v1327
        %v2611 = vsel %vm1329, %v2610, %v2609
        %v2612 = vperm.slane %v2293, %v1331
        %v2613 = vsel %vm1333, %v2612, %v2611
        %v2614 = vperm.slane %v2296, %v1335
        %v2615 = vsel %vm1337, %v2614, %v2613
        %v2616 = vperm.slane %v2299, %v1339
        %v2617 = vsel %vm1341, %v2616, %v2615
        %v2618 = vperm.slane %v2302, %v1343
        %v2619 = vsel %vm1345, %v2618, %v2617
        %v2620 = vperm.slane %v2305, %v1347
        %v2621 = vsel %vm1349, %v2620, %v2619
        %v2622 = vperm.slane %v2308, %v1289
        %v2623 = vperm.slane %v2311, %v1291
        %v2624 = vsel %vm1293, %v2623, %v2622
        %v2625 = vperm.slane %v2314, %v1295
        %v2626 = vsel %vm1297, %v2625, %v2624
        %v2627 = vperm.slane %v2317, %v1299
        %v2628 = vsel %vm1301, %v2627, %v2626
        %v2629 = vperm.slane %v2320, %v1303
        %v2630 = vsel %vm1305, %v2629, %v2628
        %v2631 = vperm.slane %v2323, %v1307
        %v2632 = vsel %vm1309, %v2631, %v2630
        %v2633 = vperm.slane %v2326, %v1311
        %v2634 = vsel %vm1313, %v2633, %v2632
        %v2635 = vperm.slane %v2329, %v1315
        %v2636 = vsel %vm1317, %v2635, %v2634
        %v2637 = vperm.slane %v2332, %v1319
        %v2638 = vsel %vm1321, %v2637, %v2636
        %v2639 = vperm.slane %v2335, %v1323
        %v2640 = vsel %vm1325, %v2639, %v2638
        %v2641 = vperm.slane %v2338, %v1327
        %v2642 = vsel %vm1329, %v2641, %v2640
        %v2643 = vperm.slane %v2341, %v1331
        %v2644 = vsel %vm1333, %v2643, %v2642
        %v2645 = vperm.slane %v2344, %v1335
        %v2646 = vsel %vm1337, %v2645, %v2644
        %v2647 = vperm.slane %v2347, %v1339
        %v2648 = vsel %vm1341, %v2647, %v2646
        %v2649 = vperm.slane %v2350, %v1343
        %v2650 = vsel %vm1345, %v2649, %v2648
        %v2651 = vperm.slane %v2353, %v1347
        %v2652 = vsel %vm1349, %v2651, %v2650
        %v2653 = vperm.slane %v2356, %v1289
        %v2654 = vperm.slane %v2359, %v1291
        %v2655 = vsel %vm1293, %v2654, %v2653
        %v2656 = vperm.slane %v2362, %v1295
        %v2657 = vsel %vm1297, %v2656, %v2655
        %v2658 = vperm.slane %v2365, %v1299
        %v2659 = vsel %vm1301, %v2658, %v2657
        %v2660 = vperm.slane %v2368, %v1303
        %v2661 = vsel %vm1305, %v2660, %v2659
        %v2662 = vperm.slane %v2371, %v1307
        %v2663 = vsel %vm1309, %v2662, %v2661
        %v2664 = vperm.slane %v2374, %v1311
        %v2665 = vsel %vm1313, %v2664, %v2663
        %v2666 = vperm.slane %v2377, %v1315
        %v2667 = vsel %vm1317, %v2666, %v2665
        %v2668 = vperm.slane %v2380, %v1319
        %v2669 = vsel %vm1321, %v2668, %v2667
        %v2670 = vperm.slane %v2383, %v1323
        %v2671 = vsel %vm1325, %v2670, %v2669
        %v2672 = vperm.slane %v2386, %v1327
        %v2673 = vsel %vm1329, %v2672, %v2671
        %v2674 = vperm.slane %v2389, %v1331
        %v2675 = vsel %vm1333, %v2674, %v2673
        %v2676 = vperm.slane %v2392, %v1335
        %v2677 = vsel %vm1337, %v2676, %v2675
        %v2678 = vperm.slane %v2395, %v1339
        %v2679 = vsel %vm1341, %v2678, %v2677
        %v2680 = vperm.slane %v2398, %v1343
        %v2681 = vsel %vm1345, %v2680, %v2679
        %v2682 = vperm.slane %v2401, %v1347
        %v2683 = vsel %vm1349, %v2682, %v2681
        %v2684 = vperm.slane %v2404, %v1289
        %v2685 = vperm.slane %v2407, %v1291
        %v2686 = vsel %vm1293, %v2685, %v2684
        %v2687 = vperm.slane %v2410, %v1295
        %v2688 = vsel %vm1297, %v2687, %v2686
        %v2689 = vperm.slane %v2413, %v1299
        %v2690 = vsel %vm1301, %v2689, %v2688
        %v2691 = vperm.slane %v2416, %v1303
        %v2692 = vsel %vm1305, %v2691, %v2690
        %v2693 = vperm.slane %v2419, %v1307
        %v2694 = vsel %vm1309, %v2693, %v2692
        %v2695 = vperm.slane %v2422, %v1311
        %v2696 = vsel %vm1313, %v2695, %v2694
        %v2697 = vperm.slane %v2425, %v1315
        %v2698 = vsel %vm1317, %v2697, %v2696
        %v2699 = vperm.slane %v2428, %v1319
        %v2700 = vsel %vm1321, %v2699, %v2698
        %v2701 = vperm.slane %v2431, %v1323
        %v2702 = vsel %vm1325, %v2701, %v2700
        %v2703 = vperm.slane %v2434, %v1327
        %v2704 = vsel %vm1329, %v2703, %v2702
        %v2705 = vperm.slane %v2437, %v1331
        %v2706 = vsel %vm1333, %v2705, %v2704
        %v2707 = vperm.slane %v2440, %v1335
        %v2708 = vsel %vm1337, %v2707, %v2706
        %v2709 = vperm.slane %v2443, %v1339
        %v2710 = vsel %vm1341, %v2709, %v2708
        %v2711 = vperm.slane %v2446, %v1343
        %v2712 = vsel %vm1345, %v2711, %v2710
        %v2713 = vperm.slane %v2449, %v1347
        %v2714 = vsel %vm1349, %v2713, %v2712
        %v2715 = vperm.slane %v2452, %v1289
        %v2716 = vperm.slane %v2455, %v1291
        %v2717 = vsel %vm1293, %v2716, %v2715
        %v2718 = vperm.slane %v2458, %v1295
        %v2719 = vsel %vm1297, %v2718, %v2717
        %v2720 = vperm.slane %v2461, %v1299
        %v2721 = vsel %vm1301, %v2720, %v2719
        %v2722 = vperm.slane %v2464, %v1303
        %v2723 = vsel %vm1305, %v2722, %v2721
        %v2724 = vperm.slane %v2467, %v1307
        %v2725 = vsel %vm1309, %v2724, %v2723
        %v2726 = vperm.slane %v2470, %v1311
        %v2727 = vsel %vm1313, %v2726, %v2725
        %v2728 = vperm.slane %v2473, %v1315
        %v2729 = vsel %vm1317, %v2728, %v2727
        %v2730 = vperm.slane %v2476, %v1319
        %v2731 = vsel %vm1321, %v2730, %v2729
        %v2732 = vperm.slane %v2479, %v1323
        %v2733 = vsel %vm1325, %v2732, %v2731
        %v2734 = vperm.slane %v2482, %v1327
        %v2735 = vsel %vm1329, %v2734, %v2733
        %v2736 = vperm.slane %v2485, %v1331
        %v2737 = vsel %vm1333, %v2736, %v2735
        %v2738 = vperm.slane %v2488, %v1335
        %v2739 = vsel %vm1337, %v2738, %v2737
        %v2740 = vperm.slane %v2491, %v1339
        %v2741 = vsel %vm1341, %v2740, %v2739
        %v2742 = vperm.slane %v2494, %v1343
        %v2743 = vsel %vm1345, %v2742, %v2741
        %v2744 = vperm.slane %v2497, %v1347
        %v2745 = vsel %vm1349, %v2744, %v2743
        %v2746 = vsel %vm1568, %v2559, %v2528
        %v2747 = vsel %vm1570, %v2590, %v2746
        %v2748 = vsel %vm1572, %v2621, %v2747
        %v2749 = vsel %vm1574, %v2652, %v2748
        %v2750 = vsel %vm1576, %v2683, %v2749
        %v2751 = vsel %vm1578, %v2714, %v2750
        %v2752 = vsel %vm1580, %v2745, %v2751
        %2754 = vadd.xlane.f32.xlu0 %v2752
        %v2755 = vpop.xlane.xlu0 %2754
        %v2757 = vperm.slane %v2755, 0
        %v2758 = vperm.slane %v2755, 1
        %v2759 = vperm.slane %v2755, 2
        %v2760 = vperm.slane %v2755, 3
        %v2761 = vperm.slane %v2755, 4
        %v2762 = vperm.slane %v2755, 5
        %v2763 = vperm.slane %v2755, 6
        %v2764 = vperm.slane %v2755, 7
        %v2773 = vrcp.pop %v2757
        %v2774 = vmul.f32 %v2757, %v2773
        %v2775 = vsub.f32 1.0, %v2774
        %v2776 = vmul.f32 %v2773, %v2775
        %v2777 = vadd.f32 %v2773, %v2776
        %vm2778 = vweird.f32 %v2757
        %vm2779 = vweird.f32 %v2773
        %vm2780 = vmor %vm2778, %vm2779
        %v2781 = vsel %vm2780, %v2773, %v2777
        %v2782 = vand.u32 2147483647, %v2757
        %vm2783 = vcmp.eq.f32.partialorder %v2782, 8.507059e+37
        %v2784 = vand.u32 %v2757, 2147483648
        %v2785 = vor.u32 1.1754944e-38, %v2784
        %v2786 = vsel %vm2783, %v2785, %v2781
        %v2787 = vmul.f32 %v1731, %v2786
        %v2788 = vmul.f32 %v1733, %v2786
        %v2789 = vmul.f32 %v1735, %v2786
        %v2790 = vmul.f32 %v1737, %v2786
        %v2791 = vmul.f32 %v1739, %v2786
        %v2792 = vmul.f32 %v1741, %v2786
        %v2793 = vmul.f32 %v1743, %v2786
        %v2794 = vmul.f32 %v1745, %v2786
        %v2795 = vmul.f32 %v1747, %v2786
        %v2796 = vmul.f32 %v1749, %v2786
        %v2797 = vmul.f32 %v1751, %v2786
        %v2798 = vmul.f32 %v1753, %v2786
        %v2799 = vmul.f32 %v1755, %v2786
        %v2800 = vmul.f32 %v1757, %v2786
        %v2801 = vmul.f32 %v1759, %v2786
        %v2802 = vmul.f32 %v1761, %v2786
        %v2803 = vrcp.pop %v2758
        %v2804 = vmul.f32 %v2758, %v2803
        %v2805 = vsub.f32 1.0, %v2804
        %v2806 = vmul.f32 %v2803, %v2805
        %v2807 = vadd.f32 %v2803, %v2806
        %vm2808 = vweird.f32 %v2758
        %vm2809 = vweird.f32 %v2803
        %vm2810 = vmor %vm2808, %vm2809
        %v2811 = vsel %vm2810, %v2803, %v2807
        %v2812 = vand.u32 2147483647, %v2758
        %vm2813 = vcmp.eq.f32.partialorder %v2812, 8.507059e+37
        %v2814 = vand.u32 %v2758, 2147483648
        %v2815 = vor.u32 1.1754944e-38, %v2814
        %v2816 = vsel %vm2813, %v2815, %v2811
        %v2817 = vmul.f32 %v1763, %v2816
        %v2818 = vmul.f32 %v1765, %v2816
        %v2819 = vmul.f32 %v1767, %v2816
        %v2820 = vmul.f32 %v1769, %v2816
        %v2821 = vmul.f32 %v1771, %v2816
        %v2822 = vmul.f32 %v1773, %v2816
        %v2823 = vmul.f32 %v1775, %v2816
        %v2824 = vmul.f32 %v1777, %v2816
        %v2825 = vmul.f32 %v1779, %v2816
        %v2826 = vmul.f32 %v1781, %v2816
        %v2827 = vmul.f32 %v1783, %v2816
        %v2828 = vmul.f32 %v1785, %v2816
        %v2829 = vmul.f32 %v1787, %v2816
        %v2830 = vmul.f32 %v1789, %v2816
        %v2831 = vmul.f32 %v1791, %v2816
        %v2832 = vmul.f32 %v1793, %v2816
        %v2833 = vrcp.pop %v2759
        %v2834 = vmul.f32 %v2759, %v2833
        %v2835 = vsub.f32 1.0, %v2834
        %v2836 = vmul.f32 %v2833, %v2835
        %v2837 = vadd.f32 %v2833, %v2836
        %vm2838 = vweird.f32 %v2759
        %vm2839 = vweird.f32 %v2833
        %vm2840 = vmor %vm2838, %vm2839
        %v2841 = vsel %vm2840, %v2833, %v2837
        %v2842 = vand.u32 2147483647, %v2759
        %vm2843 = vcmp.eq.f32.partialorder %v2842, 8.507059e+37
        %v2844 = vand.u32 %v2759, 2147483648
        %v2845 = vor.u32 1.1754944e-38, %v2844
        %v2846 = vsel %vm2843, %v2845, %v2841
        %v2847 = vmul.f32 %v1795, %v2846
        %v2848 = vmul.f32 %v1797, %v2846
        %v2849 = vmul.f32 %v1799, %v2846
        %v2850 = vmul.f32 %v1801, %v2846
        %v2851 = vmul.f32 %v1803, %v2846
        %v2852 = vmul.f32 %v1805, %v2846
        %v2853 = vmul.f32 %v1807, %v2846
        %v2854 = vmul.f32 %v1809, %v2846
        %v2855 = vmul.f32 %v1811, %v2846
        %v2856 = vmul.f32 %v1813, %v2846
        %v2857 = vmul.f32 %v1815, %v2846
        %v2858 = vmul.f32 %v1817, %v2846
        %v2859 = vmul.f32 %v1819, %v2846
        %v2860 = vmul.f32 %v1821, %v2846
        %v2861 = vmul.f32 %v1823, %v2846
        %v2862 = vmul.f32 %v1825, %v2846
        %v2863 = vrcp.pop %v2760
        %v2864 = vmul.f32 %v2760, %v2863
        %v2865 = vsub.f32 1.0, %v2864
        %v2866 = vmul.f32 %v2863, %v2865
        %v2867 = vadd.f32 %v2863, %v2866
        %vm2868 = vweird.f32 %v2760
        %vm2869 = vweird.f32 %v2863
        %vm2870 = vmor %vm2868, %vm2869
        %v2871 = vsel %vm2870, %v2863, %v2867
        %v2872 = vand.u32 2147483647, %v2760
        %vm2873 = vcmp.eq.f32.partialorder %v2872, 8.507059e+37
        %v2874 = vand.u32 %v2760, 2147483648
        %v2875 = vor.u32 1.1754944e-38, %v2874
        %v2876 = vsel %vm2873, %v2875, %v2871
        %v2877 = vmul.f32 %v1827, %v2876
        %v2878 = vmul.f32 %v1829, %v2876
        %v2879 = vmul.f32 %v1831, %v2876
        %v2880 = vmul.f32 %v1833, %v2876
        %v2881 = vmul.f32 %v1835, %v2876
        %v2882 = vmul.f32 %v1837, %v2876
        %v2883 = vmul.f32 %v1839, %v2876
        %v2884 = vmul.f32 %v1841, %v2876
        %v2885 = vmul.f32 %v1843, %v2876
        %v2886 = vmul.f32 %v1845, %v2876
        %v2887 = vmul.f32 %v1847, %v2876
        %v2888 = vmul.f32 %v1849, %v2876
        %v2889 = vmul.f32 %v1851, %v2876
        %v2890 = vmul.f32 %v1853, %v2876
        %v2891 = vmul.f32 %v1855, %v2876
        %v2892 = vmul.f32 %v1857, %v2876
        %v2893 = vrcp.pop %v2761
        %v2894 = vmul.f32 %v2761, %v2893
        %v2895 = vsub.f32 1.0, %v2894
        %v2896 = vmul.f32 %v2893, %v2895
        %v2897 = vadd.f32 %v2893, %v2896
        %vm2898 = vweird.f32 %v2761
        %vm2899 = vweird.f32 %v2893
        %vm2900 = vmor %vm2898, %vm2899
        %v2901 = vsel %vm2900, %v2893, %v2897
        %v2902 = vand.u32 2147483647, %v2761
        %vm2903 = vcmp.eq.f32.partialorder %v2902, 8.507059e+37
        %v2904 = vand.u32 %v2761, 2147483648
        %v2905 = vor.u32 1.1754944e-38, %v2904
        %v2906 = vsel %vm2903, %v2905, %v2901
        %v2907 = vmul.f32 %v1859, %v2906
        %v2908 = vmul.f32 %v1861, %v2906
        %v2909 = vmul.f32 %v1863, %v2906
        %v2910 = vmul.f32 %v1865, %v2906
        %v2911 = vmul.f32 %v1867, %v2906
        %v2912 = vmul.f32 %v1869, %v2906
        %v2913 = vmul.f32 %v1871, %v2906
        %v2914 = vmul.f32 %v1873, %v2906
        %v2915 = vmul.f32 %v1875, %v2906
        %v2916 = vmul.f32 %v1877, %v2906
        %v2917 = vmul.f32 %v1879, %v2906
        %v2918 = vmul.f32 %v1881, %v2906
        %v2919 = vmul.f32 %v1883, %v2906
        %v2920 = vmul.f32 %v1885, %v2906
        %v2921 = vmul.f32 %v1887, %v2906
        %v2922 = vmul.f32 %v1889, %v2906
        %v2923 = vrcp.pop %v2762
        %v2924 = vmul.f32 %v2762, %v2923
        %v2925 = vsub.f32 1.0, %v2924
        %v2926 = vmul.f32 %v2923, %v2925
        %v2927 = vadd.f32 %v2923, %v2926
        %vm2928 = vweird.f32 %v2762
        %vm2929 = vweird.f32 %v2923
        %vm2930 = vmor %vm2928, %vm2929
        %v2931 = vsel %vm2930, %v2923, %v2927
        %v2932 = vand.u32 2147483647, %v2762
        %vm2933 = vcmp.eq.f32.partialorder %v2932, 8.507059e+37
        %v2934 = vand.u32 %v2762, 2147483648
        %v2935 = vor.u32 1.1754944e-38, %v2934
        %v2936 = vsel %vm2933, %v2935, %v2931
        %v2937 = vmul.f32 %v1891, %v2936
        %v2938 = vmul.f32 %v1893, %v2936
        %v2939 = vmul.f32 %v1895, %v2936
        %v2940 = vmul.f32 %v1897, %v2936
        %v2941 = vmul.f32 %v1899, %v2936
        %v2942 = vmul.f32 %v1901, %v2936
        %v2943 = vmul.f32 %v1903, %v2936
        %v2944 = vmul.f32 %v1905, %v2936
        %v2945 = vmul.f32 %v1907, %v2936
        %v2946 = vmul.f32 %v1909, %v2936
        %v2947 = vmul.f32 %v1911, %v2936
        %v2948 = vmul.f32 %v1913, %v2936
        %v2949 = vmul.f32 %v1915, %v2936
        %v2950 = vmul.f32 %v1917, %v2936
        %v2951 = vmul.f32 %v1919, %v2936
        %v2952 = vmul.f32 %v1921, %v2936
        %v2953 = vrcp.pop %v2763
        %v2954 = vmul.f32 %v2763, %v2953
        %v2955 = vsub.f32 1.0, %v2954
        %v2956 = vmul.f32 %v2953, %v2955
        %v2957 = vadd.f32 %v2953, %v2956
        %vm2958 = vweird.f32 %v2763
        %vm2959 = vweird.f32 %v2953
        %vm2960 = vmor %vm2958, %vm2959
        %v2961 = vsel %vm2960, %v2953, %v2957
        %v2962 = vand.u32 2147483647, %v2763
        %vm2963 = vcmp.eq.f32.partialorder %v2962, 8.507059e+37
        %v2964 = vand.u32 %v2763, 2147483648
        %v2965 = vor.u32 1.1754944e-38, %v2964
        %v2966 = vsel %vm2963, %v2965, %v2961
        %v2967 = vmul.f32 %v1923, %v2966
        %v2968 = vmul.f32 %v1925, %v2966
        %v2969 = vmul.f32 %v1927, %v2966
        %v2970 = vmul.f32 %v1929, %v2966
        %v2971 = vmul.f32 %v1931, %v2966
        %v2972 = vmul.f32 %v1933, %v2966
        %v2973 = vmul.f32 %v1935, %v2966
        %v2974 = vmul.f32 %v1937, %v2966
        %v2975 = vmul.f32 %v1939, %v2966
        %v2976 = vmul.f32 %v1941, %v2966
        %v2977 = vmul.f32 %v1943, %v2966
        %v2978 = vmul.f32 %v1945, %v2966
        %v2979 = vmul.f32 %v1947, %v2966
        %v2980 = vmul.f32 %v1949, %v2966
        %v2981 = vmul.f32 %v1951, %v2966
        %v2982 = vmul.f32 %v1953, %v2966
        %v2983 = vrcp.pop %v2764
        %v2984 = vmul.f32 %v2764, %v2983
        %v2985 = vsub.f32 1.0, %v2984
        %v2986 = vmul.f32 %v2983, %v2985
        %v2987 = vadd.f32 %v2983, %v2986
        %vm2988 = vweird.f32 %v2764
        %vm2989 = vweird.f32 %v2983
        %vm2990 = vmor %vm2988, %vm2989
        %v2991 = vsel %vm2990, %v2983, %v2987
        %v2992 = vand.u32 2147483647, %v2764
        %vm2993 = vcmp.eq.f32.partialorder %v2992, 8.507059e+37
        %v2994 = vand.u32 %v2764, 2147483648
        %v2995 = vor.u32 1.1754944e-38, %v2994
        %v2996 = vsel %vm2993, %v2995, %v2991
        %v2997 = vmul.f32 %v1955, %v2996
        %v2998 = vmul.f32 %v1957, %v2996
        %v2999 = vmul.f32 %v1959, %v2996
        %v3000 = vmul.f32 %v1961, %v2996
        %v3001 = vmul.f32 %v1963, %v2996
        %v3002 = vmul.f32 %v1965, %v2996
        %v3003 = vmul.f32 %v1967, %v2996
        %v3004 = vmul.f32 %v1969, %v2996
        %v3005 = vmul.f32 %v1971, %v2996
        %v3006 = vmul.f32 %v1973, %v2996
        %v3007 = vmul.f32 %v1975, %v2996
        %v3008 = vmul.f32 %v1977, %v2996
        %v3009 = vmul.f32 %v1979, %v2996
        %v3010 = vmul.f32 %v1981, %v2996
        %v3011 = vmul.f32 %v1983, %v2996
        %v3012 = vmul.f32 %v1985, %v2996
        %3141 = vset.pattern.permute.xlu0 0
        %3142 = vperm.xlu0 %3141, %v2787
        %v3143 = vpop.permute.xlu0 %3142
        %3144 = vset.pattern.permute.xlu0 0
        %3145 = vperm.xlu0 %3144, %v2788
        %v3146 = vpop.permute.xlu0 %3145
        %3147 = vset.pattern.permute.xlu0 0
        %3148 = vperm.xlu0 %3147, %v2789
        %v3149 = vpop.permute.xlu0 %3148
        %3150 = vset.pattern.permute.xlu0 0
        %3151 = vperm.xlu0 %3150, %v2790
        %v3152 = vpop.permute.xlu0 %3151
        %3153 = vset.pattern.permute.xlu0 0
        %3154 = vperm.xlu0 %3153, %v2791
        %v3155 = vpop.permute.xlu0 %3154
        %3156 = vset.pattern.permute.xlu0 0
        %3157 = vperm.xlu0 %3156, %v2792
        %v3158 = vpop.permute.xlu0 %3157
        %3159 = vset.pattern.permute.xlu0 0
        %3160 = vperm.xlu0 %3159, %v2793
        %v3161 = vpop.permute.xlu0 %3160
        %3162 = vset.pattern.permute.xlu0 0
        %3163 = vperm.xlu0 %3162, %v2794
        %v3164 = vpop.permute.xlu0 %3163
        %3165 = vset.pattern.permute.xlu0 0
        %3166 = vperm.xlu0 %3165, %v2795
        %v3167 = vpop.permute.xlu0 %3166
        %3168 = vset.pattern.permute.xlu0 0
        %3169 = vperm.xlu0 %3168, %v2796
        %v3170 = vpop.permute.xlu0 %3169
        %3171 = vset.pattern.permute.xlu0 0
        %3172 = vperm.xlu0 %3171, %v2797
        %v3173 = vpop.permute.xlu0 %3172
        %3174 = vset.pattern.permute.xlu0 0
        %3175 = vperm.xlu0 %3174, %v2798
        %v3176 = vpop.permute.xlu0 %3175
        %3177 = vset.pattern.permute.xlu0 0
        %3178 = vperm.xlu0 %3177, %v2799
        %v3179 = vpop.permute.xlu0 %3178
        %3180 = vset.pattern.permute.xlu0 0
        %3181 = vperm.xlu0 %3180, %v2800
        %v3182 = vpop.permute.xlu0 %3181
        %3183 = vset.pattern.permute.xlu0 0
        %3184 = vperm.xlu0 %3183, %v2801
        %v3185 = vpop.permute.xlu0 %3184
        %3186 = vset.pattern.permute.xlu0 0
        %3187 = vperm.xlu0 %3186, %v2802
        %v3188 = vpop.permute.xlu0 %3187
        %3189 = vset.pattern.permute.xlu0 0
        %3190 = vperm.xlu0 %3189, %v2817
        %v3191 = vpop.permute.xlu0 %3190
        %3192 = vset.pattern.permute.xlu0 0
        %3193 = vperm.xlu0 %3192, %v2818
        %v3194 = vpop.permute.xlu0 %3193
        %3195 = vset.pattern.permute.xlu0 0
        %3196 = vperm.xlu0 %3195, %v2819
        %v3197 = vpop.permute.xlu0 %3196
        %3198 = vset.pattern.permute.xlu0 0
        %3199 = vperm.xlu0 %3198, %v2820
        %v3200 = vpop.permute.xlu0 %3199
        %3201 = vset.pattern.permute.xlu0 0
        %3202 = vperm.xlu0 %3201, %v2821
        %v3203 = vpop.permute.xlu0 %3202
        %3204 = vset.pattern.permute.xlu0 0
        %3205 = vperm.xlu0 %3204, %v2822
        %v3206 = vpop.permute.xlu0 %3205
        %3207 = vset.pattern.permute.xlu0 0
        %3208 = vperm.xlu0 %3207, %v2823
        %v3209 = vpop.permute.xlu0 %3208
        %3210 = vset.pattern.permute.xlu0 0
        %3211 = vperm.xlu0 %3210, %v2824
        %v3212 = vpop.permute.xlu0 %3211
        %3213 = vset.pattern.permute.xlu0 0
        %3214 = vperm.xlu0 %3213, %v2825
        %v3215 = vpop.permute.xlu0 %3214
        %3216 = vset.pattern.permute.xlu0 0
        %3217 = vperm.xlu0 %3216, %v2826
        %v3218 = vpop.permute.xlu0 %3217
        %3219 = vset.pattern.permute.xlu0 0
        %3220 = vperm.xlu0 %3219, %v2827
        %v3221 = vpop.permute.xlu0 %3220
        %3222 = vset.pattern.permute.xlu0 0
        %3223 = vperm.xlu0 %3222, %v2828
        %v3224 = vpop.permute.xlu0 %3223
        %3225 = vset.pattern.permute.xlu0 0
        %3226 = vperm.xlu0 %3225, %v2829
        %v3227 = vpop.permute.xlu0 %3226
        %3228 = vset.pattern.permute.xlu0 0
        %3229 = vperm.xlu0 %3228, %v2830
        %v3230 = vpop.permute.xlu0 %3229
        %3231 = vset.pattern.permute.xlu0 0
        %3232 = vperm.xlu0 %3231, %v2831
        %v3233 = vpop.permute.xlu0 %3232
        %3234 = vset.pattern.permute.xlu0 0
        %3235 = vperm.xlu0 %3234, %v2832
        %v3236 = vpop.permute.xlu0 %3235
        %3237 = vset.pattern.permute.xlu0 0
        %3238 = vperm.xlu0 %3237, %v2847
        %v3239 = vpop.permute.xlu0 %3238
        %3240 = vset.pattern.permute.xlu0 0
        %3241 = vperm.xlu0 %3240, %v2848
        %v3242 = vpop.permute.xlu0 %3241
        %3243 = vset.pattern.permute.xlu0 0
        %3244 = vperm.xlu0 %3243, %v2849
        %v3245 = vpop.permute.xlu0 %3244
        %3246 = vset.pattern.permute.xlu0 0
        %3247 = vperm.xlu0 %3246, %v2850
        %v3248 = vpop.permute.xlu0 %3247
        %3249 = vset.pattern.permute.xlu0 0
        %3250 = vperm.xlu0 %3249, %v2851
        %v3251 = vpop.permute.xlu0 %3250
        %3252 = vset.pattern.permute.xlu0 0
        %3253 = vperm.xlu0 %3252, %v2852
        %v3254 = vpop.permute.xlu0 %3253
        %3255 = vset.pattern.permute.xlu0 0
        %3256 = vperm.xlu0 %3255, %v2853
        %v3257 = vpop.permute.xlu0 %3256
        %3258 = vset.pattern.permute.xlu0 0
        %3259 = vperm.xlu0 %3258, %v2854
        %v3260 = vpop.permute.xlu0 %3259
        %3261 = vset.pattern.permute.xlu0 0
        %3262 = vperm.xlu0 %3261, %v2855
        %v3263 = vpop.permute.xlu0 %3262
        %3264 = vset.pattern.permute.xlu0 0
        %3265 = vperm.xlu0 %3264, %v2856
        %v3266 = vpop.permute.xlu0 %3265
        %3267 = vset.pattern.permute.xlu0 0
        %3268 = vperm.xlu0 %3267, %v2857
        %v3269 = vpop.permute.xlu0 %3268
        %3270 = vset.pattern.permute.xlu0 0
        %3271 = vperm.xlu0 %3270, %v2858
        %v3272 = vpop.permute.xlu0 %3271
        %3273 = vset.pattern.permute.xlu0 0
        %3274 = vperm.xlu0 %3273, %v2859
        %v3275 = vpop.permute.xlu0 %3274
        %3276 = vset.pattern.permute.xlu0 0
        %3277 = vperm.xlu0 %3276, %v2860
        %v3278 = vpop.permute.xlu0 %3277
        %3279 = vset.pattern.permute.xlu0 0
        %3280 = vperm.xlu0 %3279, %v2861
        %v3281 = vpop.permute.xlu0 %3280
        %3282 = vset.pattern.permute.xlu0 0
        %3283 = vperm.xlu0 %3282, %v2862
        %v3284 = vpop.permute.xlu0 %3283
        %3285 = vset.pattern.permute.xlu0 0
        %3286 = vperm.xlu0 %3285, %v2877
        %v3287 = vpop.permute.xlu0 %3286
        %3288 = vset.pattern.permute.xlu0 0
        %3289 = vperm.xlu0 %3288, %v2878
        %v3290 = vpop.permute.xlu0 %3289
        %3291 = vset.pattern.permute.xlu0 0
        %3292 = vperm.xlu0 %3291, %v2879
        %v3293 = vpop.permute.xlu0 %3292
        %3294 = vset.pattern.permute.xlu0 0
        %3295 = vperm.xlu0 %3294, %v2880
        %v3296 = vpop.permute.xlu0 %3295
        %3297 = vset.pattern.permute.xlu0 0
        %3298 = vperm.xlu0 %3297, %v2881
        %v3299 = vpop.permute.xlu0 %3298
        %3300 = vset.pattern.permute.xlu0 0
        %3301 = vperm.xlu0 %3300, %v2882
        %v3302 = vpop.permute.xlu0 %3301
        %3303 = vset.pattern.permute.xlu0 0
        %3304 = vperm.xlu0 %3303, %v2883
        %v3305 = vpop.permute.xlu0 %3304
        %3306 = vset.pattern.permute.xlu0 0
        %3307 = vperm.xlu0 %3306, %v2884
        %v3308 = vpop.permute.xlu0 %3307
        %3309 = vset.pattern.permute.xlu0 0
        %3310 = vperm.xlu0 %3309, %v2885
        %v3311 = vpop.permute.xlu0 %3310
        %3312 = vset.pattern.permute.xlu0 0
        %3313 = vperm.xlu0 %3312, %v2886
        %v3314 = vpop.permute.xlu0 %3313
        %3315 = vset.pattern.permute.xlu0 0
        %3316 = vperm.xlu0 %3315, %v2887
        %v3317 = vpop.permute.xlu0 %3316
        %3318 = vset.pattern.permute.xlu0 0
        %3319 = vperm.xlu0 %3318, %v2888
        %v3320 = vpop.permute.xlu0 %3319
        %3321 = vset.pattern.permute.xlu0 0
        %3322 = vperm.xlu0 %3321, %v2889
        %v3323 = vpop.permute.xlu0 %3322
        %3324 = vset.pattern.permute.xlu0 0
        %3325 = vperm.xlu0 %3324, %v2890
        %v3326 = vpop.permute.xlu0 %3325
        %3327 = vset.pattern.permute.xlu0 0
        %3328 = vperm.xlu0 %3327, %v2891
        %v3329 = vpop.permute.xlu0 %3328
        %3330 = vset.pattern.permute.xlu0 0
        %3331 = vperm.xlu0 %3330, %v2892
        %v3332 = vpop.permute.xlu0 %3331
        %3333 = vset.pattern.permute.xlu0 0
        %3334 = vperm.xlu0 %3333, %v2907
        %v3335 = vpop.permute.xlu0 %3334
        %3336 = vset.pattern.permute.xlu0 0
        %3337 = vperm.xlu0 %3336, %v2908
        %v3338 = vpop.permute.xlu0 %3337
        %3339 = vset.pattern.permute.xlu0 0
        %3340 = vperm.xlu0 %3339, %v2909
        %v3341 = vpop.permute.xlu0 %3340
        %3342 = vset.pattern.permute.xlu0 0
        %3343 = vperm.xlu0 %3342, %v2910
        %v3344 = vpop.permute.xlu0 %3343
        %3345 = vset.pattern.permute.xlu0 0
        %3346 = vperm.xlu0 %3345, %v2911
        %v3347 = vpop.permute.xlu0 %3346
        %3348 = vset.pattern.permute.xlu0 0
        %3349 = vperm.xlu0 %3348, %v2912
        %v3350 = vpop.permute.xlu0 %3349
        %3351 = vset.pattern.permute.xlu0 0
        %3352 = vperm.xlu0 %3351, %v2913
        %v3353 = vpop.permute.xlu0 %3352
        %3354 = vset.pattern.permute.xlu0 0
        %3355 = vperm.xlu0 %3354, %v2914
        %v3356 = vpop.permute.xlu0 %3355
        %3357 = vset.pattern.permute.xlu0 0
        %3358 = vperm.xlu0 %3357, %v2915
        %v3359 = vpop.permute.xlu0 %3358
        %3360 = vset.pattern.permute.xlu0 0
        %3361 = vperm.xlu0 %3360, %v2916
        %v3362 = vpop.permute.xlu0 %3361
        %3363 = vset.pattern.permute.xlu0 0
        %3364 = vperm.xlu0 %3363, %v2917
        %v3365 = vpop.permute.xlu0 %3364
        %3366 = vset.pattern.permute.xlu0 0
        %3367 = vperm.xlu0 %3366, %v2918
        %v3368 = vpop.permute.xlu0 %3367
        %3369 = vset.pattern.permute.xlu0 0
        %3370 = vperm.xlu0 %3369, %v2919
        %v3371 = vpop.permute.xlu0 %3370
        %3372 = vset.pattern.permute.xlu0 0
        %3373 = vperm.xlu0 %3372, %v2920
        %v3374 = vpop.permute.xlu0 %3373
        %3375 = vset.pattern.permute.xlu0 0
        %3376 = vperm.xlu0 %3375, %v2921
        %v3377 = vpop.permute.xlu0 %3376
        %3378 = vset.pattern.permute.xlu0 0
        %3379 = vperm.xlu0 %3378, %v2922
        %v3380 = vpop.permute.xlu0 %3379
        %3381 = vset.pattern.permute.xlu0 0
        %3382 = vperm.xlu0 %3381, %v2937
        %v3383 = vpop.permute.xlu0 %3382
        %3384 = vset.pattern.permute.xlu0 0
        %3385 = vperm.xlu0 %3384, %v2938
        %v3386 = vpop.permute.xlu0 %3385
        %3387 = vset.pattern.permute.xlu0 0
        %3388 = vperm.xlu0 %3387, %v2939
        %v3389 = vpop.permute.xlu0 %3388
        %3390 = vset.pattern.permute.xlu0 0
        %3391 = vperm.xlu0 %3390, %v2940
        %v3392 = vpop.permute.xlu0 %3391
        %3393 = vset.pattern.permute.xlu0 0
        %3394 = vperm.xlu0 %3393, %v2941
        %v3395 = vpop.permute.xlu0 %3394
        %3396 = vset.pattern.permute.xlu0 0
        %3397 = vperm.xlu0 %3396, %v2942
        %v3398 = vpop.permute.xlu0 %3397
        %3399 = vset.pattern.permute.xlu0 0
        %3400 = vperm.xlu0 %3399, %v2943
        %v3401 = vpop.permute.xlu0 %3400
        %3402 = vset.pattern.permute.xlu0 0
        %3403 = vperm.xlu0 %3402, %v2944
        %v3404 = vpop.permute.xlu0 %3403
        %3405 = vset.pattern.permute.xlu0 0
        %3406 = vperm.xlu0 %3405, %v2945
        %v3407 = vpop.permute.xlu0 %3406
        %3408 = vset.pattern.permute.xlu0 0
        %3409 = vperm.xlu0 %3408, %v2946
        %v3410 = vpop.permute.xlu0 %3409
        %3411 = vset.pattern.permute.xlu0 0
        %3412 = vperm.xlu0 %3411, %v2947
        %v3413 = vpop.permute.xlu0 %3412
        %3414 = vset.pattern.permute.xlu0 0
        %3415 = vperm.xlu0 %3414, %v2948
        %v3416 = vpop.permute.xlu0 %3415
        %3417 = vset.pattern.permute.xlu0 0
        %3418 = vperm.xlu0 %3417, %v2949
        %v3419 = vpop.permute.xlu0 %3418
        %3420 = vset.pattern.permute.xlu0 0
        %3421 = vperm.xlu0 %3420, %v2950
        %v3422 = vpop.permute.xlu0 %3421
        %3423 = vset.pattern.permute.xlu0 0
        %3424 = vperm.xlu0 %3423, %v2951
        %v3425 = vpop.permute.xlu0 %3424
        %3426 = vset.pattern.permute.xlu0 0
        %3427 = vperm.xlu0 %3426, %v2952
        %v3428 = vpop.permute.xlu0 %3427
        %3429 = vset.pattern.permute.xlu0 0
        %3430 = vperm.xlu0 %3429, %v2967
        %v3431 = vpop.permute.xlu0 %3430
        %3432 = vset.pattern.permute.xlu0 0
        %3433 = vperm.xlu0 %3432, %v2968
        %v3434 = vpop.permute.xlu0 %3433
        %3435 = vset.pattern.permute.xlu0 0
        %3436 = vperm.xlu0 %3435, %v2969
        %v3437 = vpop.permute.xlu0 %3436
        %3438 = vset.pattern.permute.xlu0 0
        %3439 = vperm.xlu0 %3438, %v2970
        %v3440 = vpop.permute.xlu0 %3439
        %3441 = vset.pattern.permute.xlu0 0
        %3442 = vperm.xlu0 %3441, %v2971
        %v3443 = vpop.permute.xlu0 %3442
        %3444 = vset.pattern.permute.xlu0 0
        %3445 = vperm.xlu0 %3444, %v2972
        %v3446 = vpop.permute.xlu0 %3445
        %3447 = vset.pattern.permute.xlu0 0
        %3448 = vperm.xlu0 %3447, %v2973
        %v3449 = vpop.permute.xlu0 %3448
        %3450 = vset.pattern.permute.xlu0 0
        %3451 = vperm.xlu0 %3450, %v2974
        %v3452 = vpop.permute.xlu0 %3451
        %3453 = vset.pattern.permute.xlu0 0
        %3454 = vperm.xlu0 %3453, %v2975
        %v3455 = vpop.permute.xlu0 %3454
        %3456 = vset.pattern.permute.xlu0 0
        %3457 = vperm.xlu0 %3456, %v2976
        %v3458 = vpop.permute.xlu0 %3457
        %3459 = vset.pattern.permute.xlu0 0
        %3460 = vperm.xlu0 %3459, %v2977
        %v3461 = vpop.permute.xlu0 %3460
        %3462 = vset.pattern.permute.xlu0 0
        %3463 = vperm.xlu0 %3462, %v2978
        %v3464 = vpop.permute.xlu0 %3463
        %3465 = vset.pattern.permute.xlu0 0
        %3466 = vperm.xlu0 %3465, %v2979
        %v3467 = vpop.permute.xlu0 %3466
        %3468 = vset.pattern.permute.xlu0 0
        %3469 = vperm.xlu0 %3468, %v2980
        %v3470 = vpop.permute.xlu0 %3469
        %3471 = vset.pattern.permute.xlu0 0
        %3472 = vperm.xlu0 %3471, %v2981
        %v3473 = vpop.permute.xlu0 %3472
        %3474 = vset.pattern.permute.xlu0 0
        %3475 = vperm.xlu0 %3474, %v2982
        %v3476 = vpop.permute.xlu0 %3475
        %3477 = vset.pattern.permute.xlu0 0
        %3478 = vperm.xlu0 %3477, %v2997
        %v3479 = vpop.permute.xlu0 %3478
        %3480 = vset.pattern.permute.xlu0 0
        %3481 = vperm.xlu0 %3480, %v2998
        %v3482 = vpop.permute.xlu0 %3481
        %3483 = vset.pattern.permute.xlu0 0
        %3484 = vperm.xlu0 %3483, %v2999
        %v3485 = vpop.permute.xlu0 %3484
        %3486 = vset.pattern.permute.xlu0 0
        %3487 = vperm.xlu0 %3486, %v3000
        %v3488 = vpop.permute.xlu0 %3487
        %3489 = vset.pattern.permute.xlu0 0
        %3490 = vperm.xlu0 %3489, %v3001
        %v3491 = vpop.permute.xlu0 %3490
        %3492 = vset.pattern.permute.xlu0 0
        %3493 = vperm.xlu0 %3492, %v3002
        %v3494 = vpop.permute.xlu0 %3493
        %3495 = vset.pattern.permute.xlu0 0
        %3496 = vperm.xlu0 %3495, %v3003
        %v3497 = vpop.permute.xlu0 %3496
        %3498 = vset.pattern.permute.xlu0 0
        %3499 = vperm.xlu0 %3498, %v3004
        %v3500 = vpop.permute.xlu0 %3499
        %3501 = vset.pattern.permute.xlu0 0
        %3502 = vperm.xlu0 %3501, %v3005
        %v3503 = vpop.permute.xlu0 %3502
        %3504 = vset.pattern.permute.xlu0 0
        %3505 = vperm.xlu0 %3504, %v3006
        %v3506 = vpop.permute.xlu0 %3505
        %3507 = vset.pattern.permute.xlu0 0
        %3508 = vperm.xlu0 %3507, %v3007
        %v3509 = vpop.permute.xlu0 %3508
        %3510 = vset.pattern.permute.xlu0 0
        %3511 = vperm.xlu0 %3510, %v3008
        %v3512 = vpop.permute.xlu0 %3511
        %3513 = vset.pattern.permute.xlu0 0
        %3514 = vperm.xlu0 %3513, %v3009
        %v3515 = vpop.permute.xlu0 %3514
        %3516 = vset.pattern.permute.xlu0 0
        %3517 = vperm.xlu0 %3516, %v3010
        %v3518 = vpop.permute.xlu0 %3517
        %3519 = vset.pattern.permute.xlu0 0
        %3520 = vperm.xlu0 %3519, %v3011
        %v3521 = vpop.permute.xlu0 %3520
        %3522 = vset.pattern.permute.xlu0 0
        %3523 = vperm.xlu0 %3522, %v3012
        %v3524 = vpop.permute.xlu0 %3523
        %v3525 = vperm.slane %v3143, %v1289
        %v3526 = vperm.slane %v3146, %v1291
        %v3527 = vsel %vm1293, %v3526, %v3525
        %v3528 = vperm.slane %v3149, %v1295
        %v3529 = vsel %vm1297, %v3528, %v3527
        %v3530 = vperm.slane %v3152, %v1299
        %v3531 = vsel %vm1301, %v3530, %v3529
        %v3532 = vperm.slane %v3155, %v1303
        %v3533 = vsel %vm1305, %v3532, %v3531
        %v3534 = vperm.slane %v3158, %v1307
        %v3535 = vsel %vm1309, %v3534, %v3533
        %v3536 = vperm.slane %v3161, %v1311
        %v3537 = vsel %vm1313, %v3536, %v3535
        %v3538 = vperm.slane %v3164, %v1315
        %v3539 = vsel %vm1317, %v3538, %v3537
        %v3540 = vperm.slane %v3167, %v1319
        %v3541 = vsel %vm1321, %v3540, %v3539
        %v3542 = vperm.slane %v3170, %v1323
        %v3543 = vsel %vm1325, %v3542, %v3541
        %v3544 = vperm.slane %v3173, %v1327
        %v3545 = vsel %vm1329, %v3544, %v3543
        %v3546 = vperm.slane %v3176, %v1331
        %v3547 = vsel %vm1333, %v3546, %v3545
        %v3548 = vperm.slane %v3179, %v1335
        %v3549 = vsel %vm1337, %v3548, %v3547
        %v3550 = vperm.slane %v3182, %v1339
        %v3551 = vsel %vm1341, %v3550, %v3549
        %v3552 = vperm.slane %v3185, %v1343
        %v3553 = vsel %vm1345, %v3552, %v3551
        %v3554 = vperm.slane %v3188, %v1347
        %v3555 = vsel %vm1349, %v3554, %v3553
        %v3556 = vperm.slane %v3191, %v1289
        %v3557 = vperm.slane %v3194, %v1291
        %v3558 = vsel %vm1293, %v3557, %v3556
        %v3559 = vperm.slane %v3197, %v1295
        %v3560 = vsel %vm1297, %v3559, %v3558
        %v3561 = vperm.slane %v3200, %v1299
        %v3562 = vsel %vm1301, %v3561, %v3560
        %v3563 = vperm.slane %v3203, %v1303
        %v3564 = vsel %vm1305, %v3563, %v3562
        %v3565 = vperm.slane %v3206, %v1307
        %v3566 = vsel %vm1309, %v3565, %v3564
        %v3567 = vperm.slane %v3209, %v1311
        %v3568 = vsel %vm1313, %v3567, %v3566
        %v3569 = vperm.slane %v3212, %v1315
        %v3570 = vsel %vm1317, %v3569, %v3568
        %v3571 = vperm.slane %v3215, %v1319
        %v3572 = vsel %vm1321, %v3571, %v3570
        %v3573 = vperm.slane %v3218, %v1323
        %v3574 = vsel %vm1325, %v3573, %v3572
        %v3575 = vperm.slane %v3221, %v1327
        %v3576 = vsel %vm1329, %v3575, %v3574
        %v3577 = vperm.slane %v3224, %v1331
        %v3578 = vsel %vm1333, %v3577, %v3576
        %v3579 = vperm.slane %v3227, %v1335
        %v3580 = vsel %vm1337, %v3579, %v3578
        %v3581 = vperm.slane %v3230, %v1339
        %v3582 = vsel %vm1341, %v3581, %v3580
        %v3583 = vperm.slane %v3233, %v1343
        %v3584 = vsel %vm1345, %v3583, %v3582
        %v3585 = vperm.slane %v3236, %v1347
        %v3586 = vsel %vm1349, %v3585, %v3584
        %v3587 = vperm.slane %v3239, %v1289
        %v3588 = vperm.slane %v3242, %v1291
        %v3589 = vsel %vm1293, %v3588, %v3587
        %v3590 = vperm.slane %v3245, %v1295
        %v3591 = vsel %vm1297, %v3590, %v3589
        %v3592 = vperm.slane %v3248, %v1299
        %v3593 = vsel %vm1301, %v3592, %v3591
        %v3594 = vperm.slane %v3251, %v1303
        %v3595 = vsel %vm1305, %v3594, %v3593
        %v3596 = vperm.slane %v3254, %v1307
        %v3597 = vsel %vm1309, %v3596, %v3595
        %v3598 = vperm.slane %v3257, %v1311
        %v3599 = vsel %vm1313, %v3598, %v3597
        %v3600 = vperm.slane %v3260, %v1315
        %v3601 = vsel %vm1317, %v3600, %v3599
        %v3602 = vperm.slane %v3263, %v1319
        %v3603 = vsel %vm1321, %v3602, %v3601
        %v3604 = vperm.slane %v3266, %v1323
        %v3605 = vsel %vm1325, %v3604, %v3603
        %v3606 = vperm.slane %v3269, %v1327
        %v3607 = vsel %vm1329, %v3606, %v3605
        %v3608 = vperm.slane %v3272, %v1331
        %v3609 = vsel %vm1333, %v3608, %v3607
        %v3610 = vperm.slane %v3275, %v1335
        %v3611 = vsel %vm1337, %v3610, %v3609
        %v3612 = vperm.slane %v3278, %v1339
        %v3613 = vsel %vm1341, %v3612, %v3611
        %v3614 = vperm.slane %v3281, %v1343
        %v3615 = vsel %vm1345, %v3614, %v3613
        %v3616 = vperm.slane %v3284, %v1347
        %v3617 = vsel %vm1349, %v3616, %v3615
        %v3618 = vperm.slane %v3287, %v1289
        %v3619 = vperm.slane %v3290, %v1291
        %v3620 = vsel %vm1293, %v3619, %v3618
        %v3621 = vperm.slane %v3293, %v1295
        %v3622 = vsel %vm1297, %v3621, %v3620
        %v3623 = vperm.slane %v3296, %v1299
        %v3624 = vsel %vm1301, %v3623, %v3622
        %v3625 = vperm.slane %v3299, %v1303
        %v3626 = vsel %vm1305, %v3625, %v3624
        %v3627 = vperm.slane %v3302, %v1307
        %v3628 = vsel %vm1309, %v3627, %v3626
        %v3629 = vperm.slane %v3305, %v1311
        %v3630 = vsel %vm1313, %v3629, %v3628
        %v3631 = vperm.slane %v3308, %v1315
        %v3632 = vsel %vm1317, %v3631, %v3630
        %v3633 = vperm.slane %v3311, %v1319
        %v3634 = vsel %vm1321, %v3633, %v3632
        %v3635 = vperm.slane %v3314, %v1323
        %v3636 = vsel %vm1325, %v3635, %v3634
        %v3637 = vperm.slane %v3317, %v1327
        %v3638 = vsel %vm1329, %v3637, %v3636
        %v3639 = vperm.slane %v3320, %v1331
        %v3640 = vsel %vm1333, %v3639, %v3638
        %v3641 = vperm.slane %v3323, %v1335
        %v3642 = vsel %vm1337, %v3641, %v3640
        %v3643 = vperm.slane %v3326, %v1339
        %v3644 = vsel %vm1341, %v3643, %v3642
        %v3645 = vperm.slane %v3329, %v1343
        %v3646 = vsel %vm1345, %v3645, %v3644
        %v3647 = vperm.slane %v3332, %v1347
        %v3648 = vsel %vm1349, %v3647, %v3646
        %v3649 = vperm.slane %v3335, %v1289
        %v3650 = vperm.slane %v3338, %v1291
        %v3651 = vsel %vm1293, %v3650, %v3649
        %v3652 = vperm.slane %v3341, %v1295
        %v3653 = vsel %vm1297, %v3652, %v3651
        %v3654 = vperm.slane %v3344, %v1299
        %v3655 = vsel %vm1301, %v3654, %v3653
        %v3656 = vperm.slane %v3347, %v1303
        %v3657 = vsel %vm1305, %v3656, %v3655
        %v3658 = vperm.slane %v3350, %v1307
        %v3659 = vsel %vm1309, %v3658, %v3657
        %v3660 = vperm.slane %v3353, %v1311
        %v3661 = vsel %vm1313, %v3660, %v3659
        %v3662 = vperm.slane %v3356, %v1315
        %v3663 = vsel %vm1317, %v3662, %v3661
        %v3664 = vperm.slane %v3359, %v1319
        %v3665 = vsel %vm1321, %v3664, %v3663
        %v3666 = vperm.slane %v3362, %v1323
        %v3667 = vsel %vm1325, %v3666, %v3665
        %v3668 = vperm.slane %v3365, %v1327
        %v3669 = vsel %vm1329, %v3668, %v3667
        %v3670 = vperm.slane %v3368, %v1331
        %v3671 = vsel %vm1333, %v3670, %v3669
        %v3672 = vperm.slane %v3371, %v1335
        %v3673 = vsel %vm1337, %v3672, %v3671
        %v3674 = vperm.slane %v3374, %v1339
        %v3675 = vsel %vm1341, %v3674, %v3673
        %v3676 = vperm.slane %v3377, %v1343
        %v3677 = vsel %vm1345, %v3676, %v3675
        %v3678 = vperm.slane %v3380, %v1347
        %v3679 = vsel %vm1349, %v3678, %v3677
        %v3680 = vperm.slane %v3383, %v1289
        %v3681 = vperm.slane %v3386, %v1291
        %v3682 = vsel %vm1293, %v3681, %v3680
        %v3683 = vperm.slane %v3389, %v1295
        %v3684 = vsel %vm1297, %v3683, %v3682
        %v3685 = vperm.slane %v3392, %v1299
        %v3686 = vsel %vm1301, %v3685, %v3684
        %v3687 = vperm.slane %v3395, %v1303
        %v3688 = vsel %vm1305, %v3687, %v3686
        %v3689 = vperm.slane %v3398, %v1307
        %v3690 = vsel %vm1309, %v3689, %v3688
        %v3691 = vperm.slane %v3401, %v1311
        %v3692 = vsel %vm1313, %v3691, %v3690
        %v3693 = vperm.slane %v3404, %v1315
        %v3694 = vsel %vm1317, %v3693, %v3692
        %v3695 = vperm.slane %v3407, %v1319
        %v3696 = vsel %vm1321, %v3695, %v3694
        %v3697 = vperm.slane %v3410, %v1323
        %v3698 = vsel %vm1325, %v3697, %v3696
        %v3699 = vperm.slane %v3413, %v1327
        %v3700 = vsel %vm1329, %v3699, %v3698
        %v3701 = vperm.slane %v3416, %v1331
        %v3702 = vsel %vm1333, %v3701, %v3700
        %v3703 = vperm.slane %v3419, %v1335
        %v3704 = vsel %vm1337, %v3703, %v3702
        %v3705 = vperm.slane %v3422, %v1339
        %v3706 = vsel %vm1341, %v3705, %v3704
        %v3707 = vperm.slane %v3425, %v1343
        %v3708 = vsel %vm1345, %v3707, %v3706
        %v3709 = vperm.slane %v3428, %v1347
        %v3710 = vsel %vm1349, %v3709, %v3708
        %v3711 = vperm.slane %v3431, %v1289
        %v3712 = vperm.slane %v3434, %v1291
        %v3713 = vsel %vm1293, %v3712, %v3711
        %v3714 = vperm.slane %v3437, %v1295
        %v3715 = vsel %vm1297, %v3714, %v3713
        %v3716 = vperm.slane %v3440, %v1299
        %v3717 = vsel %vm1301, %v3716, %v3715
        %v3718 = vperm.slane %v3443, %v1303
        %v3719 = vsel %vm1305, %v3718, %v3717
        %v3720 = vperm.slane %v3446, %v1307
        %v3721 = vsel %vm1309, %v3720, %v3719
        %v3722 = vperm.slane %v3449, %v1311
        %v3723 = vsel %vm1313, %v3722, %v3721
        %v3724 = vperm.slane %v3452, %v1315
        %v3725 = vsel %vm1317, %v3724, %v3723
        %v3726 = vperm.slane %v3455, %v1319
        %v3727 = vsel %vm1321, %v3726, %v3725
        %v3728 = vperm.slane %v3458, %v1323
        %v3729 = vsel %vm1325, %v3728, %v3727
        %v3730 = vperm.slane %v3461, %v1327
        %v3731 = vsel %vm1329, %v3730, %v3729
        %v3732 = vperm.slane %v3464, %v1331
        %v3733 = vsel %vm1333, %v3732, %v3731
        %v3734 = vperm.slane %v3467, %v1335
        %v3735 = vsel %vm1337, %v3734, %v3733
        %v3736 = vperm.slane %v3470, %v1339
        %v3737 = vsel %vm1341, %v3736, %v3735
        %v3738 = vperm.slane %v3473, %v1343
        %v3739 = vsel %vm1345, %v3738, %v3737
        %v3740 = vperm.slane %v3476, %v1347
        %v3741 = vsel %vm1349, %v3740, %v3739
        %v3742 = vperm.slane %v3479, %v1289
        %v3743 = vperm.slane %v3482, %v1291
        %v3744 = vsel %vm1293, %v3743, %v3742
        %v3745 = vperm.slane %v3485, %v1295
        %v3746 = vsel %vm1297, %v3745, %v3744
        %v3747 = vperm.slane %v3488, %v1299
        %v3748 = vsel %vm1301, %v3747, %v3746
        %v3749 = vperm.slane %v3491, %v1303
        %v3750 = vsel %vm1305, %v3749, %v3748
        %v3751 = vperm.slane %v3494, %v1307
        %v3752 = vsel %vm1309, %v3751, %v3750
        %v3753 = vperm.slane %v3497, %v1311
        %v3754 = vsel %vm1313, %v3753, %v3752
        %v3755 = vperm.slane %v3500, %v1315
        %v3756 = vsel %vm1317, %v3755, %v3754
        %v3757 = vperm.slane %v3503, %v1319
        %v3758 = vsel %vm1321, %v3757, %v3756
        %v3759 = vperm.slane %v3506, %v1323
        %v3760 = vsel %vm1325, %v3759, %v3758
        %v3761 = vperm.slane %v3509, %v1327
        %v3762 = vsel %vm1329, %v3761, %v3760
        %v3763 = vperm.slane %v3512, %v1331
        %v3764 = vsel %vm1333, %v3763, %v3762
        %v3765 = vperm.slane %v3515, %v1335
        %v3766 = vsel %vm1337, %v3765, %v3764
        %v3767 = vperm.slane %v3518, %v1339
        %v3768 = vsel %vm1341, %v3767, %v3766
        %v3769 = vperm.slane %v3521, %v1343
        %v3770 = vsel %vm1345, %v3769, %v3768
        %v3771 = vperm.slane %v3524, %v1347
        %v3772 = vsel %vm1349, %v3771, %v3770
        %v3773 = vsel %vm1568, %v3586, %v3555
        %v3774 = vsel %vm1570, %v3617, %v3773
        %v3775 = vsel %vm1572, %v3648, %v3774
        %v3776 = vsel %vm1574, %v3679, %v3775
        %v3777 = vsel %vm1576, %v3710, %v3776
        %v3778 = vsel %vm1578, %v3741, %v3777
        %v3779 = vsel %vm1580, %v3772, %v3778
        %3781 = vst [vmem:[%s290] sm:$0xff] %v3779
        %v3782 = vld [vmem:[#allocation2] sm:$0xff]
        %v3783 = vld [vmem:[#allocation2 + $0x8] sm:$0xff]
        %v3784 = vld [vmem:[#allocation2 + $0x10] sm:$0xff]
        %v3785 = vld [vmem:[#allocation2 + $0x18] sm:$0xff]
        %v3786 = vld [vmem:[#allocation2 + $0x20] sm:$0xff]
        %v3787 = vld [vmem:[#allocation2 + $0x28] sm:$0xff]
        %v3788 = vld [vmem:[#allocation2 + $0x30] sm:$0xff]
        %v3789 = vld [vmem:[#allocation2 + $0x38] sm:$0xff]
        %v3790 = vld [vmem:[#allocation2 + $0x40] sm:$0xff]
        %v3791 = vld [vmem:[#allocation2 + $0x48] sm:$0xff]
        %v3792 = vld [vmem:[#allocation2 + $0x50] sm:$0xff]
        %v3793 = vld [vmem:[#allocation2 + $0x58] sm:$0xff]
        %v3794 = vld [vmem:[#allocation2 + $0x60] sm:$0xff]
        %v3795 = vld [vmem:[#allocation2 + $0x68] sm:$0xff]
        %v3796 = vld [vmem:[#allocation2 + $0x70] sm:$0xff]
        %v3797 = vld [vmem:[#allocation2 + $0x78] sm:$0xff]
        %v3798 = vld [vmem:[%s4] sm:$0x1]
        %s3799 = scalar_lea.vmem [#allocation3], 8
        %v3800 = vld [vmem:[%s3799] sm:$0xff]
        %v3802 = vrot.slane %v3800, 1
        %v3803 = vrot.slane %v3800, 2
        %v3804 = vrot.slane %v3800, 3
        %v3805 = vrot.slane %v3800, 4
        %v3806 = vrot.slane %v3800, 5
        %v3807 = vrot.slane %v3800, 6
        %v3808 = vrot.slane %v3800, 7
        %v3809 = vperm.slane %v3800, 0
        %v3810 = vperm.slane %v3802, 0
        %v3811 = vperm.slane %v3803, 0
        %v3812 = vperm.slane %v3804, 0
        %v3813 = vperm.slane %v3805, 0
        %v3814 = vperm.slane %v3806, 0
        %v3815 = vperm.slane %v3807, 0
        %v3816 = vperm.slane %v3808, 0
        %v3825 = vmul.f32 %v3809, %v3782
        %v3826 = vmul.f32 %v3809, %v3783
        %v3827 = vmul.f32 %v3809, %v3784
        %v3828 = vmul.f32 %v3809, %v3785
        %v3829 = vmul.f32 %v3809, %v3786
        %v3830 = vmul.f32 %v3809, %v3787
        %v3831 = vmul.f32 %v3809, %v3788
        %v3832 = vmul.f32 %v3809, %v3789
        %v3833 = vmul.f32 %v3809, %v3790
        %v3834 = vmul.f32 %v3809, %v3791
        %v3835 = vmul.f32 %v3809, %v3792
        %v3836 = vmul.f32 %v3809, %v3793
        %v3837 = vmul.f32 %v3809, %v3794
        %v3838 = vmul.f32 %v3809, %v3795
        %v3839 = vmul.f32 %v3809, %v3796
        %v3840 = vmul.f32 %v3809, %v3797
        %v3841 = vmul.f32 %v3810, %v3782
        %v3842 = vmul.f32 %v3810, %v3783
        %v3843 = vmul.f32 %v3810, %v3784
        %v3844 = vmul.f32 %v3810, %v3785
        %v3845 = vmul.f32 %v3810, %v3786
        %v3846 = vmul.f32 %v3810, %v3787
        %v3847 = vmul.f32 %v3810, %v3788
        %v3848 = vmul.f32 %v3810, %v3789
        %v3849 = vmul.f32 %v3810, %v3790
        %v3850 = vmul.f32 %v3810, %v3791
        %v3851 = vmul.f32 %v3810, %v3792
        %v3852 = vmul.f32 %v3810, %v3793
        %v3853 = vmul.f32 %v3810, %v3794
        %v3854 = vmul.f32 %v3810, %v3795
        %v3855 = vmul.f32 %v3810, %v3796
        %v3856 = vmul.f32 %v3810, %v3797
        %v3857 = vmul.f32 %v3811, %v3782
        %v3858 = vmul.f32 %v3811, %v3783
        %v3859 = vmul.f32 %v3811, %v3784
        %v3860 = vmul.f32 %v3811, %v3785
        %v3861 = vmul.f32 %v3811, %v3786
        %v3862 = vmul.f32 %v3811, %v3787
        %v3863 = vmul.f32 %v3811, %v3788
        %v3864 = vmul.f32 %v3811, %v3789
        %v3865 = vmul.f32 %v3811, %v3790
        %v3866 = vmul.f32 %v3811, %v3791
        %v3867 = vmul.f32 %v3811, %v3792
        %v3868 = vmul.f32 %v3811, %v3793
        %v3869 = vmul.f32 %v3811, %v3794
        %v3870 = vmul.f32 %v3811, %v3795
        %v3871 = vmul.f32 %v3811, %v3796
        %v3872 = vmul.f32 %v3811, %v3797
        %v3873 = vmul.f32 %v3812, %v3782
        %v3874 = vmul.f32 %v3812, %v3783
        %v3875 = vmul.f32 %v3812, %v3784
        %v3876 = vmul.f32 %v3812, %v3785
        %v3877 = vmul.f32 %v3812, %v3786
        %v3878 = vmul.f32 %v3812, %v3787
        %v3879 = vmul.f32 %v3812, %v3788
        %v3880 = vmul.f32 %v3812, %v3789
        %v3881 = vmul.f32 %v3812, %v3790
        %v3882 = vmul.f32 %v3812, %v3791
        %v3883 = vmul.f32 %v3812, %v3792
        %v3884 = vmul.f32 %v3812, %v3793
        %v3885 = vmul.f32 %v3812, %v3794
        %v3886 = vmul.f32 %v3812, %v3795
        %v3887 = vmul.f32 %v3812, %v3796
        %v3888 = vmul.f32 %v3812, %v3797
        %v3889 = vmul.f32 %v3813, %v3782
        %v3890 = vmul.f32 %v3813, %v3783
        %v3891 = vmul.f32 %v3813, %v3784
        %v3892 = vmul.f32 %v3813, %v3785
        %v3893 = vmul.f32 %v3813, %v3786
        %v3894 = vmul.f32 %v3813, %v3787
        %v3895 = vmul.f32 %v3813, %v3788
        %v3896 = vmul.f32 %v3813, %v3789
        %v3897 = vmul.f32 %v3813, %v3790
        %v3898 = vmul.f32 %v3813, %v3791
        %v3899 = vmul.f32 %v3813, %v3792
        %v3900 = vmul.f32 %v3813, %v3793
        %v3901 = vmul.f32 %v3813, %v3794
        %v3902 = vmul.f32 %v3813, %v3795
        %v3903 = vmul.f32 %v3813, %v3796
        %v3904 = vmul.f32 %v3813, %v3797
        %v3905 = vmul.f32 %v3814, %v3782
        %v3906 = vmul.f32 %v3814, %v3783
        %v3907 = vmul.f32 %v3814, %v3784
        %v3908 = vmul.f32 %v3814, %v3785
        %v3909 = vmul.f32 %v3814, %v3786
        %v3910 = vmul.f32 %v3814, %v3787
        %v3911 = vmul.f32 %v3814, %v3788
        %v3912 = vmul.f32 %v3814, %v3789
        %v3913 = vmul.f32 %v3814, %v3790
        %v3914 = vmul.f32 %v3814, %v3791
        %v3915 = vmul.f32 %v3814, %v3792
        %v3916 = vmul.f32 %v3814, %v3793
        %v3917 = vmul.f32 %v3814, %v3794
        %v3918 = vmul.f32 %v3814, %v3795
        %v3919 = vmul.f32 %v3814, %v3796
        %v3920 = vmul.f32 %v3814, %v3797
        %v3921 = vmul.f32 %v3815, %v3782
        %v3922 = vmul.f32 %v3815, %v3783
        %v3923 = vmul.f32 %v3815, %v3784
        %v3924 = vmul.f32 %v3815, %v3785
        %v3925 = vmul.f32 %v3815, %v3786
        %v3926 = vmul.f32 %v3815, %v3787
        %v3927 = vmul.f32 %v3815, %v3788
        %v3928 = vmul.f32 %v3815, %v3789
        %v3929 = vmul.f32 %v3815, %v3790
        %v3930 = vmul.f32 %v3815, %v3791
        %v3931 = vmul.f32 %v3815, %v3792
        %v3932 = vmul.f32 %v3815, %v3793
        %v3933 = vmul.f32 %v3815, %v3794
        %v3934 = vmul.f32 %v3815, %v3795
        %v3935 = vmul.f32 %v3815, %v3796
        %v3936 = vmul.f32 %v3815, %v3797
        %v3937 = vmul.f32 %v3816, %v3782
        %v3938 = vmul.f32 %v3816, %v3783
        %v3939 = vmul.f32 %v3816, %v3784
        %v3940 = vmul.f32 %v3816, %v3785
        %v3941 = vmul.f32 %v3816, %v3786
        %v3942 = vmul.f32 %v3816, %v3787
        %v3943 = vmul.f32 %v3816, %v3788
        %v3944 = vmul.f32 %v3816, %v3789
        %v3945 = vmul.f32 %v3816, %v3790
        %v3946 = vmul.f32 %v3816, %v3791
        %v3947 = vmul.f32 %v3816, %v3792
        %v3948 = vmul.f32 %v3816, %v3793
        %v3949 = vmul.f32 %v3816, %v3794
        %v3950 = vmul.f32 %v3816, %v3795
        %v3951 = vmul.f32 %v3816, %v3796
        %v3952 = vmul.f32 %v3816, %v3797
        %v3953 = vtanh.pop %v3825
        %v3954 = vtanh.pop %v3826
        %v3955 = vtanh.pop %v3827
        %v3956 = vtanh.pop %v3828
        %v3957 = vtanh.pop %v3829
        %v3958 = vtanh.pop %v3830
        %v3959 = vtanh.pop %v3831
        %v3960 = vtanh.pop %v3832
        %v3961 = vtanh.pop %v3833
        %v3962 = vtanh.pop %v3834
        %v3963 = vtanh.pop %v3835
        %v3964 = vtanh.pop %v3836
        %v3965 = vtanh.pop %v3837
        %v3966 = vtanh.pop %v3838
        %v3967 = vtanh.pop %v3839
        %v3968 = vtanh.pop %v3840
        %v3969 = vtanh.pop %v3841
        %v3970 = vtanh.pop %v3842
        %v3971 = vtanh.pop %v3843
        %v3972 = vtanh.pop %v3844
        %v3973 = vtanh.pop %v3845
        %v3974 = vtanh.pop %v3846
        %v3975 = vtanh.pop %v3847
        %v3976 = vtanh.pop %v3848
        %v3977 = vtanh.pop %v3849
        %v3978 = vtanh.pop %v3850
        %v3979 = vtanh.pop %v3851
        %v3980 = vtanh.pop %v3852
        %v3981 = vtanh.pop %v3853
        %v3982 = vtanh.pop %v3854
        %v3983 = vtanh.pop %v3855
        %v3984 = vtanh.pop %v3856
        %v3985 = vtanh.pop %v3857
        %v3986 = vtanh.pop %v3858
        %v3987 = vtanh.pop %v3859
        %v3988 = vtanh.pop %v3860
        %v3989 = vtanh.pop %v3861
        %v3990 = vtanh.pop %v3862
        %v3991 = vtanh.pop %v3863
        %v3992 = vtanh.pop %v3864
        %v3993 = vtanh.pop %v3865
        %v3994 = vtanh.pop %v3866
        %v3995 = vtanh.pop %v3867
        %v3996 = vtanh.pop %v3868
        %v3997 = vtanh.pop %v3869
        %v3998 = vtanh.pop %v3870
        %v3999 = vtanh.pop %v3871
        %v4000 = vtanh.pop %v3872
        %v4001 = vtanh.pop %v3873
        %v4002 = vtanh.pop %v3874
        %v4003 = vtanh.pop %v3875
        %v4004 = vtanh.pop %v3876
        %v4005 = vtanh.pop %v3877
        %v4006 = vtanh.pop %v3878
        %v4007 = vtanh.pop %v3879
        %v4008 = vtanh.pop %v3880
        %v4009 = vtanh.pop %v3881
        %v4010 = vtanh.pop %v3882
        %v4011 = vtanh.pop %v3883
        %v4012 = vtanh.pop %v3884
        %v4013 = vtanh.pop %v3885
        %v4014 = vtanh.pop %v3886
        %v4015 = vtanh.pop %v3887
        %v4016 = vtanh.pop %v3888
        %v4017 = vtanh.pop %v3889
        %v4018 = vtanh.pop %v3890
        %v4019 = vtanh.pop %v3891
        %v4020 = vtanh.pop %v3892
        %v4021 = vtanh.pop %v3893
        %v4022 = vtanh.pop %v3894
        %v4023 = vtanh.pop %v3895
        %v4024 = vtanh.pop %v3896
        %v4025 = vtanh.pop %v3897
        %v4026 = vtanh.pop %v3898
        %v4027 = vtanh.pop %v3899
        %v4028 = vtanh.pop %v3900
        %v4029 = vtanh.pop %v3901
        %v4030 = vtanh.pop %v3902
        %v4031 = vtanh.pop %v3903
        %v4032 = vtanh.pop %v3904
        %v4033 = vtanh.pop %v3905
        %v4034 = vtanh.pop %v3906
        %v4035 = vtanh.pop %v3907
        %v4036 = vtanh.pop %v3908
        %v4037 = vtanh.pop %v3909
        %v4038 = vtanh.pop %v3910
        %v4039 = vtanh.pop %v3911
        %v4040 = vtanh.pop %v3912
        %v4041 = vtanh.pop %v3913
        %v4042 = vtanh.pop %v3914
        %v4043 = vtanh.pop %v3915
        %v4044 = vtanh.pop %v3916
        %v4045 = vtanh.pop %v3917
        %v4046 = vtanh.pop %v3918
        %v4047 = vtanh.pop %v3919
        %v4048 = vtanh.pop %v3920
        %v4049 = vtanh.pop %v3921
        %v4050 = vtanh.pop %v3922
        %v4051 = vtanh.pop %v3923
        %v4052 = vtanh.pop %v3924
        %v4053 = vtanh.pop %v3925
        %v4054 = vtanh.pop %v3926
        %v4055 = vtanh.pop %v3927
        %v4056 = vtanh.pop %v3928
        %v4057 = vtanh.pop %v3929
        %v4058 = vtanh.pop %v3930
        %v4059 = vtanh.pop %v3931
        %v4060 = vtanh.pop %v3932
        %v4061 = vtanh.pop %v3933
        %v4062 = vtanh.pop %v3934
        %v4063 = vtanh.pop %v3935
        %v4064 = vtanh.pop %v3936
        %v4065 = vtanh.pop %v3937
        %v4066 = vtanh.pop %v3938
        %v4067 = vtanh.pop %v3939
        %v4068 = vtanh.pop %v3940
        %v4069 = vtanh.pop %v3941
        %v4070 = vtanh.pop %v3942
        %v4071 = vtanh.pop %v3943
        %v4072 = vtanh.pop %v3944
        %v4073 = vtanh.pop %v3945
        %v4074 = vtanh.pop %v3946
        %v4075 = vtanh.pop %v3947
        %v4076 = vtanh.pop %v3948
        %v4077 = vtanh.pop %v3949
        %v4078 = vtanh.pop %v3950
        %v4079 = vtanh.pop %v3951
        %v4080 = vtanh.pop %v3952
        %v4082 = vperm.slane %v3798, 0
        %v4084 = vmul.f32 %v3953, %v4082
        %v4085 = vmul.f32 %v3954, %v4082
        %v4086 = vmul.f32 %v3955, %v4082
        %v4087 = vmul.f32 %v3956, %v4082
        %v4088 = vmul.f32 %v3957, %v4082
        %v4089 = vmul.f32 %v3958, %v4082
        %v4090 = vmul.f32 %v3959, %v4082
        %v4091 = vmul.f32 %v3960, %v4082
        %v4092 = vmul.f32 %v3961, %v4082
        %v4093 = vmul.f32 %v3962, %v4082
        %v4094 = vmul.f32 %v3963, %v4082
        %v4095 = vmul.f32 %v3964, %v4082
        %v4096 = vmul.f32 %v3965, %v4082
        %v4097 = vmul.f32 %v3966, %v4082
        %v4098 = vmul.f32 %v3967, %v4082
        %v4099 = vmul.f32 %v3968, %v4082
        %v4100 = vmul.f32 %v3969, %v4082
        %v4101 = vmul.f32 %v3970, %v4082
        %v4102 = vmul.f32 %v3971, %v4082
        %v4103 = vmul.f32 %v3972, %v4082
        %v4104 = vmul.f32 %v3973, %v4082
        %v4105 = vmul.f32 %v3974, %v4082
        %v4106 = vmul.f32 %v3975, %v4082
        %v4107 = vmul.f32 %v3976, %v4082
        %v4108 = vmul.f32 %v3977, %v4082
        %v4109 = vmul.f32 %v3978, %v4082
        %v4110 = vmul.f32 %v3979, %v4082
        %v4111 = vmul.f32 %v3980, %v4082
        %v4112 = vmul.f32 %v3981, %v4082
        %v4113 = vmul.f32 %v3982, %v4082
        %v4114 = vmul.f32 %v3983, %v4082
        %v4115 = vmul.f32 %v3984, %v4082
        %v4116 = vmul.f32 %v3985, %v4082
        %v4117 = vmul.f32 %v3986, %v4082
        %v4118 = vmul.f32 %v3987, %v4082
        %v4119 = vmul.f32 %v3988, %v4082
        %v4120 = vmul.f32 %v3989, %v4082
        %v4121 = vmul.f32 %v3990, %v4082
        %v4122 = vmul.f32 %v3991, %v4082
        %v4123 = vmul.f32 %v3992, %v4082
        %v4124 = vmul.f32 %v3993, %v4082
        %v4125 = vmul.f32 %v3994, %v4082
        %v4126 = vmul.f32 %v3995, %v4082
        %v4127 = vmul.f32 %v3996, %v4082
        %v4128 = vmul.f32 %v3997, %v4082
        %v4129 = vmul.f32 %v3998, %v4082
        %v4130 = vmul.f32 %v3999, %v4082
        %v4131 = vmul.f32 %v4000, %v4082
        %v4132 = vmul.f32 %v4001, %v4082
        %v4133 = vmul.f32 %v4002, %v4082
        %v4134 = vmul.f32 %v4003, %v4082
        %v4135 = vmul.f32 %v4004, %v4082
        %v4136 = vmul.f32 %v4005, %v4082
        %v4137 = vmul.f32 %v4006, %v4082
        %v4138 = vmul.f32 %v4007, %v4082
        %v4139 = vmul.f32 %v4008, %v4082
        %v4140 = vmul.f32 %v4009, %v4082
        %v4141 = vmul.f32 %v4010, %v4082
        %v4142 = vmul.f32 %v4011, %v4082
        %v4143 = vmul.f32 %v4012, %v4082
        %v4144 = vmul.f32 %v4013, %v4082
        %v4145 = vmul.f32 %v4014, %v4082
        %v4146 = vmul.f32 %v4015, %v4082
        %v4147 = vmul.f32 %v4016, %v4082
        %v4148 = vmul.f32 %v4017, %v4082
        %v4149 = vmul.f32 %v4018, %v4082
        %v4150 = vmul.f32 %v4019, %v4082
        %v4151 = vmul.f32 %v4020, %v4082
        %v4152 = vmul.f32 %v4021, %v4082
        %v4153 = vmul.f32 %v4022, %v4082
        %v4154 = vmul.f32 %v4023, %v4082
        %v4155 = vmul.f32 %v4024, %v4082
        %v4156 = vmul.f32 %v4025, %v4082
        %v4157 = vmul.f32 %v4026, %v4082
        %v4158 = vmul.f32 %v4027, %v4082
        %v4159 = vmul.f32 %v4028, %v4082
        %v4160 = vmul.f32 %v4029, %v4082
        %v4161 = vmul.f32 %v4030, %v4082
        %v4162 = vmul.f32 %v4031, %v4082
        %v4163 = vmul.f32 %v4032, %v4082
        %v4164 = vmul.f32 %v4033, %v4082
        %v4165 = vmul.f32 %v4034, %v4082
        %v4166 = vmul.f32 %v4035, %v4082
        %v4167 = vmul.f32 %v4036, %v4082
        %v4168 = vmul.f32 %v4037, %v4082
        %v4169 = vmul.f32 %v4038, %v4082
        %v4170 = vmul.f32 %v4039, %v4082
        %v4171 = vmul.f32 %v4040, %v4082
        %v4172 = vmul.f32 %v4041, %v4082
        %v4173 = vmul.f32 %v4042, %v4082
        %v4174 = vmul.f32 %v4043, %v4082
        %v4175 = vmul.f32 %v4044, %v4082
        %v4176 = vmul.f32 %v4045, %v4082
        %v4177 = vmul.f32 %v4046, %v4082
        %v4178 = vmul.f32 %v4047, %v4082
        %v4179 = vmul.f32 %v4048, %v4082
        %v4180 = vmul.f32 %v4049, %v4082
        %v4181 = vmul.f32 %v4050, %v4082
        %v4182 = vmul.f32 %v4051, %v4082
        %v4183 = vmul.f32 %v4052, %v4082
        %v4184 = vmul.f32 %v4053, %v4082
        %v4185 = vmul.f32 %v4054, %v4082
        %v4186 = vmul.f32 %v4055, %v4082
        %v4187 = vmul.f32 %v4056, %v4082
        %v4188 = vmul.f32 %v4057, %v4082
        %v4189 = vmul.f32 %v4058, %v4082
        %v4190 = vmul.f32 %v4059, %v4082
        %v4191 = vmul.f32 %v4060, %v4082
        %v4192 = vmul.f32 %v4061, %v4082
        %v4193 = vmul.f32 %v4062, %v4082
        %v4194 = vmul.f32 %v4063, %v4082
        %v4195 = vmul.f32 %v4064, %v4082
        %v4196 = vmul.f32 %v4065, %v4082
        %v4197 = vmul.f32 %v4066, %v4082
        %v4198 = vmul.f32 %v4067, %v4082
        %v4199 = vmul.f32 %v4068, %v4082
        %v4200 = vmul.f32 %v4069, %v4082
        %v4201 = vmul.f32 %v4070, %v4082
        %v4202 = vmul.f32 %v4071, %v4082
        %v4203 = vmul.f32 %v4072, %v4082
        %v4204 = vmul.f32 %v4073, %v4082
        %v4205 = vmul.f32 %v4074, %v4082
        %v4206 = vmul.f32 %v4075, %v4082
        %v4207 = vmul.f32 %v4076, %v4082
        %v4208 = vmul.f32 %v4077, %v4082
        %v4209 = vmul.f32 %v4078, %v4082
        %v4210 = vmul.f32 %v4079, %v4082
        %v4211 = vmul.f32 %v4080, %v4082
        %4212 = vadd.xlane.f32.xlu0 %v4084
        %v4213 = vpop.xlane.xlu0 %4212
        %4214 = vadd.xlane.f32.xlu0 %v4085
        %v4215 = vpop.xlane.xlu0 %4214
        %4216 = vadd.xlane.f32.xlu0 %v4086
        %v4217 = vpop.xlane.xlu0 %4216
        %4218 = vadd.xlane.f32.xlu0 %v4087
        %v4219 = vpop.xlane.xlu0 %4218
        %4220 = vadd.xlane.f32.xlu0 %v4088
        %v4221 = vpop.xlane.xlu0 %4220
        %4222 = vadd.xlane.f32.xlu0 %v4089
        %v4223 = vpop.xlane.xlu0 %4222
        %4224 = vadd.xlane.f32.xlu0 %v4090
        %v4225 = vpop.xlane.xlu0 %4224
        %4226 = vadd.xlane.f32.xlu0 %v4091
        %v4227 = vpop.xlane.xlu0 %4226
        %4228 = vadd.xlane.f32.xlu0 %v4092
        %v4229 = vpop.xlane.xlu0 %4228
        %4230 = vadd.xlane.f32.xlu0 %v4093
        %v4231 = vpop.xlane.xlu0 %4230
        %4232 = vadd.xlane.f32.xlu0 %v4094
        %v4233 = vpop.xlane.xlu0 %4232
        %4234 = vadd.xlane.f32.xlu0 %v4095
        %v4235 = vpop.xlane.xlu0 %4234
        %4236 = vadd.xlane.f32.xlu0 %v4096
        %v4237 = vpop.xlane.xlu0 %4236
        %4238 = vadd.xlane.f32.xlu0 %v4097
        %v4239 = vpop.xlane.xlu0 %4238
        %4240 = vadd.xlane.f32.xlu0 %v4098
        %v4241 = vpop.xlane.xlu0 %4240
        %4242 = vadd.xlane.f32.xlu0 %v4099
        %v4243 = vpop.xlane.xlu0 %4242
        %4244 = vadd.xlane.f32.xlu0 %v4100
        %v4245 = vpop.xlane.xlu0 %4244
        %4246 = vadd.xlane.f32.xlu0 %v4101
        %v4247 = vpop.xlane.xlu0 %4246
        %4248 = vadd.xlane.f32.xlu0 %v4102
        %v4249 = vpop.xlane.xlu0 %4248
        %4250 = vadd.xlane.f32.xlu0 %v4103
        %v4251 = vpop.xlane.xlu0 %4250
        %4252 = vadd.xlane.f32.xlu0 %v4104
        %v4253 = vpop.xlane.xlu0 %4252
        %4254 = vadd.xlane.f32.xlu0 %v4105
        %v4255 = vpop.xlane.xlu0 %4254
        %4256 = vadd.xlane.f32.xlu0 %v4106
        %v4257 = vpop.xlane.xlu0 %4256
        %4258 = vadd.xlane.f32.xlu0 %v4107
        %v4259 = vpop.xlane.xlu0 %4258
        %4260 = vadd.xlane.f32.xlu0 %v4108
        %v4261 = vpop.xlane.xlu0 %4260
        %4262 = vadd.xlane.f32.xlu0 %v4109
        %v4263 = vpop.xlane.xlu0 %4262
        %4264 = vadd.xlane.f32.xlu0 %v4110
        %v4265 = vpop.xlane.xlu0 %4264
        %4266 = vadd.xlane.f32.xlu0 %v4111
        %v4267 = vpop.xlane.xlu0 %4266
        %4268 = vadd.xlane.f32.xlu0 %v4112
        %v4269 = vpop.xlane.xlu0 %4268
        %4270 = vadd.xlane.f32.xlu0 %v4113
        %v4271 = vpop.xlane.xlu0 %4270
        %4272 = vadd.xlane.f32.xlu0 %v4114
        %v4273 = vpop.xlane.xlu0 %4272
        %4274 = vadd.xlane.f32.xlu0 %v4115
        %v4275 = vpop.xlane.xlu0 %4274
        %4276 = vadd.xlane.f32.xlu0 %v4116
        %v4277 = vpop.xlane.xlu0 %4276
        %4278 = vadd.xlane.f32.xlu0 %v4117
        %v4279 = vpop.xlane.xlu0 %4278
        %4280 = vadd.xlane.f32.xlu0 %v4118
        %v4281 = vpop.xlane.xlu0 %4280
        %4282 = vadd.xlane.f32.xlu0 %v4119
        %v4283 = vpop.xlane.xlu0 %4282
        %4284 = vadd.xlane.f32.xlu0 %v4120
        %v4285 = vpop.xlane.xlu0 %4284
        %4286 = vadd.xlane.f32.xlu0 %v4121
        %v4287 = vpop.xlane.xlu0 %4286
        %4288 = vadd.xlane.f32.xlu0 %v4122
        %v4289 = vpop.xlane.xlu0 %4288
        %4290 = vadd.xlane.f32.xlu0 %v4123
        %v4291 = vpop.xlane.xlu0 %4290
        %4292 = vadd.xlane.f32.xlu0 %v4124
        %v4293 = vpop.xlane.xlu0 %4292
        %4294 = vadd.xlane.f32.xlu0 %v4125
        %v4295 = vpop.xlane.xlu0 %4294
        %4296 = vadd.xlane.f32.xlu0 %v4126
        %v4297 = vpop.xlane.xlu0 %4296
        %4298 = vadd.xlane.f32.xlu0 %v4127
        %v4299 = vpop.xlane.xlu0 %4298
        %4300 = vadd.xlane.f32.xlu0 %v4128
        %v4301 = vpop.xlane.xlu0 %4300
        %4302 = vadd.xlane.f32.xlu0 %v4129
        %v4303 = vpop.xlane.xlu0 %4302
        %4304 = vadd.xlane.f32.xlu0 %v4130
        %v4305 = vpop.xlane.xlu0 %4304
        %4306 = vadd.xlane.f32.xlu0 %v4131
        %v4307 = vpop.xlane.xlu0 %4306
        %4308 = vadd.xlane.f32.xlu0 %v4132
        %v4309 = vpop.xlane.xlu0 %4308
        %4310 = vadd.xlane.f32.xlu0 %v4133
        %v4311 = vpop.xlane.xlu0 %4310
        %4312 = vadd.xlane.f32.xlu0 %v4134
        %v4313 = vpop.xlane.xlu0 %4312
        %4314 = vadd.xlane.f32.xlu0 %v4135
        %v4315 = vpop.xlane.xlu0 %4314
        %4316 = vadd.xlane.f32.xlu0 %v4136
        %v4317 = vpop.xlane.xlu0 %4316
        %4318 = vadd.xlane.f32.xlu0 %v4137
        %v4319 = vpop.xlane.xlu0 %4318
        %4320 = vadd.xlane.f32.xlu0 %v4138
        %v4321 = vpop.xlane.xlu0 %4320
        %4322 = vadd.xlane.f32.xlu0 %v4139
        %v4323 = vpop.xlane.xlu0 %4322
        %4324 = vadd.xlane.f32.xlu0 %v4140
        %v4325 = vpop.xlane.xlu0 %4324
        %4326 = vadd.xlane.f32.xlu0 %v4141
        %v4327 = vpop.xlane.xlu0 %4326
        %4328 = vadd.xlane.f32.xlu0 %v4142
        %v4329 = vpop.xlane.xlu0 %4328
        %4330 = vadd.xlane.f32.xlu0 %v4143
        %v4331 = vpop.xlane.xlu0 %4330
        %4332 = vadd.xlane.f32.xlu0 %v4144
        %v4333 = vpop.xlane.xlu0 %4332
        %4334 = vadd.xlane.f32.xlu0 %v4145
        %v4335 = vpop.xlane.xlu0 %4334
        %4336 = vadd.xlane.f32.xlu0 %v4146
        %v4337 = vpop.xlane.xlu0 %4336
        %4338 = vadd.xlane.f32.xlu0 %v4147
        %v4339 = vpop.xlane.xlu0 %4338
        %4340 = vadd.xlane.f32.xlu0 %v4148
        %v4341 = vpop.xlane.xlu0 %4340
        %4342 = vadd.xlane.f32.xlu0 %v4149
        %v4343 = vpop.xlane.xlu0 %4342
        %4344 = vadd.xlane.f32.xlu0 %v4150
        %v4345 = vpop.xlane.xlu0 %4344
        %4346 = vadd.xlane.f32.xlu0 %v4151
        %v4347 = vpop.xlane.xlu0 %4346
        %4348 = vadd.xlane.f32.xlu0 %v4152
        %v4349 = vpop.xlane.xlu0 %4348
        %4350 = vadd.xlane.f32.xlu0 %v4153
        %v4351 = vpop.xlane.xlu0 %4350
        %4352 = vadd.xlane.f32.xlu0 %v4154
        %v4353 = vpop.xlane.xlu0 %4352
        %4354 = vadd.xlane.f32.xlu0 %v4155
        %v4355 = vpop.xlane.xlu0 %4354
        %4356 = vadd.xlane.f32.xlu0 %v4156
        %v4357 = vpop.xlane.xlu0 %4356
        %4358 = vadd.xlane.f32.xlu0 %v4157
        %v4359 = vpop.xlane.xlu0 %4358
        %4360 = vadd.xlane.f32.xlu0 %v4158
        %v4361 = vpop.xlane.xlu0 %4360
        %4362 = vadd.xlane.f32.xlu0 %v4159
        %v4363 = vpop.xlane.xlu0 %4362
        %4364 = vadd.xlane.f32.xlu0 %v4160
        %v4365 = vpop.xlane.xlu0 %4364
        %4366 = vadd.xlane.f32.xlu0 %v4161
        %v4367 = vpop.xlane.xlu0 %4366
        %4368 = vadd.xlane.f32.xlu0 %v4162
        %v4369 = vpop.xlane.xlu0 %4368
        %4370 = vadd.xlane.f32.xlu0 %v4163
        %v4371 = vpop.xlane.xlu0 %4370
        %4372 = vadd.xlane.f32.xlu0 %v4164
        %v4373 = vpop.xlane.xlu0 %4372
        %4374 = vadd.xlane.f32.xlu0 %v4165
        %v4375 = vpop.xlane.xlu0 %4374
        %4376 = vadd.xlane.f32.xlu0 %v4166
        %v4377 = vpop.xlane.xlu0 %4376
        %4378 = vadd.xlane.f32.xlu0 %v4167
        %v4379 = vpop.xlane.xlu0 %4378
        %4380 = vadd.xlane.f32.xlu0 %v4168
        %v4381 = vpop.xlane.xlu0 %4380
        %4382 = vadd.xlane.f32.xlu0 %v4169
        %v4383 = vpop.xlane.xlu0 %4382
        %4384 = vadd.xlane.f32.xlu0 %v4170
        %v4385 = vpop.xlane.xlu0 %4384
        %4386 = vadd.xlane.f32.xlu0 %v4171
        %v4387 = vpop.xlane.xlu0 %4386
        %4388 = vadd.xlane.f32.xlu0 %v4172
        %v4389 = vpop.xlane.xlu0 %4388
        %4390 = vadd.xlane.f32.xlu0 %v4173
        %v4391 = vpop.xlane.xlu0 %4390
        %4392 = vadd.xlane.f32.xlu0 %v4174
        %v4393 = vpop.xlane.xlu0 %4392
        %4394 = vadd.xlane.f32.xlu0 %v4175
        %v4395 = vpop.xlane.xlu0 %4394
        %4396 = vadd.xlane.f32.xlu0 %v4176
        %v4397 = vpop.xlane.xlu0 %4396
        %4398 = vadd.xlane.f32.xlu0 %v4177
        %v4399 = vpop.xlane.xlu0 %4398
        %4400 = vadd.xlane.f32.xlu0 %v4178
        %v4401 = vpop.xlane.xlu0 %4400
        %4402 = vadd.xlane.f32.xlu0 %v4179
        %v4403 = vpop.xlane.xlu0 %4402
        %4404 = vadd.xlane.f32.xlu0 %v4180
        %v4405 = vpop.xlane.xlu0 %4404
        %4406 = vadd.xlane.f32.xlu0 %v4181
        %v4407 = vpop.xlane.xlu0 %4406
        %4408 = vadd.xlane.f32.xlu0 %v4182
        %v4409 = vpop.xlane.xlu0 %4408
        %4410 = vadd.xlane.f32.xlu0 %v4183
        %v4411 = vpop.xlane.xlu0 %4410
        %4412 = vadd.xlane.f32.xlu0 %v4184
        %v4413 = vpop.xlane.xlu0 %4412
        %4414 = vadd.xlane.f32.xlu0 %v4185
        %v4415 = vpop.xlane.xlu0 %4414
        %4416 = vadd.xlane.f32.xlu0 %v4186
        %v4417 = vpop.xlane.xlu0 %4416
        %4418 = vadd.xlane.f32.xlu0 %v4187
        %v4419 = vpop.xlane.xlu0 %4418
        %4420 = vadd.xlane.f32.xlu0 %v4188
        %v4421 = vpop.xlane.xlu0 %4420
        %4422 = vadd.xlane.f32.xlu0 %v4189
        %v4423 = vpop.xlane.xlu0 %4422
        %4424 = vadd.xlane.f32.xlu0 %v4190
        %v4425 = vpop.xlane.xlu0 %4424
        %4426 = vadd.xlane.f32.xlu0 %v4191
        %v4427 = vpop.xlane.xlu0 %4426
        %4428 = vadd.xlane.f32.xlu0 %v4192
        %v4429 = vpop.xlane.xlu0 %4428
        %4430 = vadd.xlane.f32.xlu0 %v4193
        %v4431 = vpop.xlane.xlu0 %4430
        %4432 = vadd.xlane.f32.xlu0 %v4194
        %v4433 = vpop.xlane.xlu0 %4432
        %4434 = vadd.xlane.f32.xlu0 %v4195
        %v4435 = vpop.xlane.xlu0 %4434
        %4436 = vadd.xlane.f32.xlu0 %v4196
        %v4437 = vpop.xlane.xlu0 %4436
        %4438 = vadd.xlane.f32.xlu0 %v4197
        %v4439 = vpop.xlane.xlu0 %4438
        %4440 = vadd.xlane.f32.xlu0 %v4198
        %v4441 = vpop.xlane.xlu0 %4440
        %4442 = vadd.xlane.f32.xlu0 %v4199
        %v4443 = vpop.xlane.xlu0 %4442
        %4444 = vadd.xlane.f32.xlu0 %v4200
        %v4445 = vpop.xlane.xlu0 %4444
        %4446 = vadd.xlane.f32.xlu0 %v4201
        %v4447 = vpop.xlane.xlu0 %4446
        %4448 = vadd.xlane.f32.xlu0 %v4202
        %v4449 = vpop.xlane.xlu0 %4448
        %4450 = vadd.xlane.f32.xlu0 %v4203
        %v4451 = vpop.xlane.xlu0 %4450
        %4452 = vadd.xlane.f32.xlu0 %v4204
        %v4453 = vpop.xlane.xlu0 %4452
        %4454 = vadd.xlane.f32.xlu0 %v4205
        %v4455 = vpop.xlane.xlu0 %4454
        %4456 = vadd.xlane.f32.xlu0 %v4206
        %v4457 = vpop.xlane.xlu0 %4456
        %4458 = vadd.xlane.f32.xlu0 %v4207
        %v4459 = vpop.xlane.xlu0 %4458
        %4460 = vadd.xlane.f32.xlu0 %v4208
        %v4461 = vpop.xlane.xlu0 %4460
        %4462 = vadd.xlane.f32.xlu0 %v4209
        %v4463 = vpop.xlane.xlu0 %4462
        %4464 = vadd.xlane.f32.xlu0 %v4210
        %v4465 = vpop.xlane.xlu0 %4464
        %4466 = vadd.xlane.f32.xlu0 %v4211
        %v4467 = vpop.xlane.xlu0 %4466
        %v4596 = vperm.slane %v4213, %v1289
        %v4597 = vperm.slane %v4215, %v1291
        %v4598 = vsel %vm1293, %v4597, %v4596
        %v4599 = vperm.slane %v4217, %v1295
        %v4600 = vsel %vm1297, %v4599, %v4598
        %v4601 = vperm.slane %v4219, %v1299
        %v4602 = vsel %vm1301, %v4601, %v4600
        %v4603 = vperm.slane %v4221, %v1303
        %v4604 = vsel %vm1305, %v4603, %v4602
        %v4605 = vperm.slane %v4223, %v1307
        %v4606 = vsel %vm1309, %v4605, %v4604
        %v4607 = vperm.slane %v4225, %v1311
        %v4608 = vsel %vm1313, %v4607, %v4606
        %v4609 = vperm.slane %v4227, %v1315
        %v4610 = vsel %vm1317, %v4609, %v4608
        %v4611 = vperm.slane %v4229, %v1319
        %v4612 = vsel %vm1321, %v4611, %v4610
        %v4613 = vperm.slane %v4231, %v1323
        %v4614 = vsel %vm1325, %v4613, %v4612
        %v4615 = vperm.slane %v4233, %v1327
        %v4616 = vsel %vm1329, %v4615, %v4614
        %v4617 = vperm.slane %v4235, %v1331
        %v4618 = vsel %vm1333, %v4617, %v4616
        %v4619 = vperm.slane %v4237, %v1335
        %v4620 = vsel %vm1337, %v4619, %v4618
        %v4621 = vperm.slane %v4239, %v1339
        %v4622 = vsel %vm1341, %v4621, %v4620
        %v4623 = vperm.slane %v4241, %v1343
        %v4624 = vsel %vm1345, %v4623, %v4622
        %v4625 = vperm.slane %v4243, %v1347
        %v4626 = vsel %vm1349, %v4625, %v4624
        %v4627 = vperm.slane %v4245, %v1289
        %v4628 = vperm.slane %v4247, %v1291
        %v4629 = vsel %vm1293, %v4628, %v4627
        %v4630 = vperm.slane %v4249, %v1295
        %v4631 = vsel %vm1297, %v4630, %v4629
        %v4632 = vperm.slane %v4251, %v1299
        %v4633 = vsel %vm1301, %v4632, %v4631
        %v4634 = vperm.slane %v4253, %v1303
        %v4635 = vsel %vm1305, %v4634, %v4633
        %v4636 = vperm.slane %v4255, %v1307
        %v4637 = vsel %vm1309, %v4636, %v4635
        %v4638 = vperm.slane %v4257, %v1311
        %v4639 = vsel %vm1313, %v4638, %v4637
        %v4640 = vperm.slane %v4259, %v1315
        %v4641 = vsel %vm1317, %v4640, %v4639
        %v4642 = vperm.slane %v4261, %v1319
        %v4643 = vsel %vm1321, %v4642, %v4641
        %v4644 = vperm.slane %v4263, %v1323
        %v4645 = vsel %vm1325, %v4644, %v4643
        %v4646 = vperm.slane %v4265, %v1327
        %v4647 = vsel %vm1329, %v4646, %v4645
        %v4648 = vperm.slane %v4267, %v1331
        %v4649 = vsel %vm1333, %v4648, %v4647
        %v4650 = vperm.slane %v4269, %v1335
        %v4651 = vsel %vm1337, %v4650, %v4649
        %v4652 = vperm.slane %v4271, %v1339
        %v4653 = vsel %vm1341, %v4652, %v4651
        %v4654 = vperm.slane %v4273, %v1343
        %v4655 = vsel %vm1345, %v4654, %v4653
        %v4656 = vperm.slane %v4275, %v1347
        %v4657 = vsel %vm1349, %v4656, %v4655
        %v4658 = vperm.slane %v4277, %v1289
        %v4659 = vperm.slane %v4279, %v1291
        %v4660 = vsel %vm1293, %v4659, %v4658
        %v4661 = vperm.slane %v4281, %v1295
        %v4662 = vsel %vm1297, %v4661, %v4660
        %v4663 = vperm.slane %v4283, %v1299
        %v4664 = vsel %vm1301, %v4663, %v4662
        %v4665 = vperm.slane %v4285, %v1303
        %v4666 = vsel %vm1305, %v4665, %v4664
        %v4667 = vperm.slane %v4287, %v1307
        %v4668 = vsel %vm1309, %v4667, %v4666
        %v4669 = vperm.slane %v4289, %v1311
        %v4670 = vsel %vm1313, %v4669, %v4668
        %v4671 = vperm.slane %v4291, %v1315
        %v4672 = vsel %vm1317, %v4671, %v4670
        %v4673 = vperm.slane %v4293, %v1319
        %v4674 = vsel %vm1321, %v4673, %v4672
        %v4675 = vperm.slane %v4295, %v1323
        %v4676 = vsel %vm1325, %v4675, %v4674
        %v4677 = vperm.slane %v4297, %v1327
        %v4678 = vsel %vm1329, %v4677, %v4676
        %v4679 = vperm.slane %v4299, %v1331
        %v4680 = vsel %vm1333, %v4679, %v4678
        %v4681 = vperm.slane %v4301, %v1335
        %v4682 = vsel %vm1337, %v4681, %v4680
        %v4683 = vperm.slane %v4303, %v1339
        %v4684 = vsel %vm1341, %v4683, %v4682
        %v4685 = vperm.slane %v4305, %v1343
        %v4686 = vsel %vm1345, %v4685, %v4684
        %v4687 = vperm.slane %v4307, %v1347
        %v4688 = vsel %vm1349, %v4687, %v4686
        %v4689 = vperm.slane %v4309, %v1289
        %v4690 = vperm.slane %v4311, %v1291
        %v4691 = vsel %vm1293, %v4690, %v4689
        %v4692 = vperm.slane %v4313, %v1295
        %v4693 = vsel %vm1297, %v4692, %v4691
        %v4694 = vperm.slane %v4315, %v1299
        %v4695 = vsel %vm1301, %v4694, %v4693
        %v4696 = vperm.slane %v4317, %v1303
        %v4697 = vsel %vm1305, %v4696, %v4695
        %v4698 = vperm.slane %v4319, %v1307
        %v4699 = vsel %vm1309, %v4698, %v4697
        %v4700 = vperm.slane %v4321, %v1311
        %v4701 = vsel %vm1313, %v4700, %v4699
        %v4702 = vperm.slane %v4323, %v1315
        %v4703 = vsel %vm1317, %v4702, %v4701
        %v4704 = vperm.slane %v4325, %v1319
        %v4705 = vsel %vm1321, %v4704, %v4703
        %v4706 = vperm.slane %v4327, %v1323
        %v4707 = vsel %vm1325, %v4706, %v4705
        %v4708 = vperm.slane %v4329, %v1327
        %v4709 = vsel %vm1329, %v4708, %v4707
        %v4710 = vperm.slane %v4331, %v1331
        %v4711 = vsel %vm1333, %v4710, %v4709
        %v4712 = vperm.slane %v4333, %v1335
        %v4713 = vsel %vm1337, %v4712, %v4711
        %v4714 = vperm.slane %v4335, %v1339
        %v4715 = vsel %vm1341, %v4714, %v4713
        %v4716 = vperm.slane %v4337, %v1343
        %v4717 = vsel %vm1345, %v4716, %v4715
        %v4718 = vperm.slane %v4339, %v1347
        %v4719 = vsel %vm1349, %v4718, %v4717
        %v4720 = vperm.slane %v4341, %v1289
        %v4721 = vperm.slane %v4343, %v1291
        %v4722 = vsel %vm1293, %v4721, %v4720
        %v4723 = vperm.slane %v4345, %v1295
        %v4724 = vsel %vm1297, %v4723, %v4722
        %v4725 = vperm.slane %v4347, %v1299
        %v4726 = vsel %vm1301, %v4725, %v4724
        %v4727 = vperm.slane %v4349, %v1303
        %v4728 = vsel %vm1305, %v4727, %v4726
        %v4729 = vperm.slane %v4351, %v1307
        %v4730 = vsel %vm1309, %v4729, %v4728
        %v4731 = vperm.slane %v4353, %v1311
        %v4732 = vsel %vm1313, %v4731, %v4730
        %v4733 = vperm.slane %v4355, %v1315
        %v4734 = vsel %vm1317, %v4733, %v4732
        %v4735 = vperm.slane %v4357, %v1319
        %v4736 = vsel %vm1321, %v4735, %v4734
        %v4737 = vperm.slane %v4359, %v1323
        %v4738 = vsel %vm1325, %v4737, %v4736
        %v4739 = vperm.slane %v4361, %v1327
        %v4740 = vsel %vm1329, %v4739, %v4738
        %v4741 = vperm.slane %v4363, %v1331
        %v4742 = vsel %vm1333, %v4741, %v4740
        %v4743 = vperm.slane %v4365, %v1335
        %v4744 = vsel %vm1337, %v4743, %v4742
        %v4745 = vperm.slane %v4367, %v1339
        %v4746 = vsel %vm1341, %v4745, %v4744
        %v4747 = vperm.slane %v4369, %v1343
        %v4748 = vsel %vm1345, %v4747, %v4746
        %v4749 = vperm.slane %v4371, %v1347
        %v4750 = vsel %vm1349, %v4749, %v4748
        %v4751 = vperm.slane %v4373, %v1289
        %v4752 = vperm.slane %v4375, %v1291
        %v4753 = vsel %vm1293, %v4752, %v4751
        %v4754 = vperm.slane %v4377, %v1295
        %v4755 = vsel %vm1297, %v4754, %v4753
        %v4756 = vperm.slane %v4379, %v1299
        %v4757 = vsel %vm1301, %v4756, %v4755
        %v4758 = vperm.slane %v4381, %v1303
        %v4759 = vsel %vm1305, %v4758, %v4757
        %v4760 = vperm.slane %v4383, %v1307
        %v4761 = vsel %vm1309, %v4760, %v4759
        %v4762 = vperm.slane %v4385, %v1311
        %v4763 = vsel %vm1313, %v4762, %v4761
        %v4764 = vperm.slane %v4387, %v1315
        %v4765 = vsel %vm1317, %v4764, %v4763
        %v4766 = vperm.slane %v4389, %v1319
        %v4767 = vsel %vm1321, %v4766, %v4765
        %v4768 = vperm.slane %v4391, %v1323
        %v4769 = vsel %vm1325, %v4768, %v4767
        %v4770 = vperm.slane %v4393, %v1327
        %v4771 = vsel %vm1329, %v4770, %v4769
        %v4772 = vperm.slane %v4395, %v1331
        %v4773 = vsel %vm1333, %v4772, %v4771
        %v4774 = vperm.slane %v4397, %v1335
        %v4775 = vsel %vm1337, %v4774, %v4773
        %v4776 = vperm.slane %v4399, %v1339
        %v4777 = vsel %vm1341, %v4776, %v4775
        %v4778 = vperm.slane %v4401, %v1343
        %v4779 = vsel %vm1345, %v4778, %v4777
        %v4780 = vperm.slane %v4403, %v1347
        %v4781 = vsel %vm1349, %v4780, %v4779
        %v4782 = vperm.slane %v4405, %v1289
        %v4783 = vperm.slane %v4407, %v1291
        %v4784 = vsel %vm1293, %v4783, %v4782
        %v4785 = vperm.slane %v4409, %v1295
        %v4786 = vsel %vm1297, %v4785, %v4784
        %v4787 = vperm.slane %v4411, %v1299
        %v4788 = vsel %vm1301, %v4787, %v4786
        %v4789 = vperm.slane %v4413, %v1303
        %v4790 = vsel %vm1305, %v4789, %v4788
        %v4791 = vperm.slane %v4415, %v1307
        %v4792 = vsel %vm1309, %v4791, %v4790
        %v4793 = vperm.slane %v4417, %v1311
        %v4794 = vsel %vm1313, %v4793, %v4792
        %v4795 = vperm.slane %v4419, %v1315
        %v4796 = vsel %vm1317, %v4795, %v4794
        %v4797 = vperm.slane %v4421, %v1319
        %v4798 = vsel %vm1321, %v4797, %v4796
        %v4799 = vperm.slane %v4423, %v1323
        %v4800 = vsel %vm1325, %v4799, %v4798
        %v4801 = vperm.slane %v4425, %v1327
        %v4802 = vsel %vm1329, %v4801, %v4800
        %v4803 = vperm.slane %v4427, %v1331
        %v4804 = vsel %vm1333, %v4803, %v4802
        %v4805 = vperm.slane %v4429, %v1335
        %v4806 = vsel %vm1337, %v4805, %v4804
        %v4807 = vperm.slane %v4431, %v1339
        %v4808 = vsel %vm1341, %v4807, %v4806
        %v4809 = vperm.slane %v4433, %v1343
        %v4810 = vsel %vm1345, %v4809, %v4808
        %v4811 = vperm.slane %v4435, %v1347
        %v4812 = vsel %vm1349, %v4811, %v4810
        %v4813 = vperm.slane %v4437, %v1289
        %v4814 = vperm.slane %v4439, %v1291
        %v4815 = vsel %vm1293, %v4814, %v4813
        %v4816 = vperm.slane %v4441, %v1295
        %v4817 = vsel %vm1297, %v4816, %v4815
        %v4818 = vperm.slane %v4443, %v1299
        %v4819 = vsel %vm1301, %v4818, %v4817
        %v4820 = vperm.slane %v4445, %v1303
        %v4821 = vsel %vm1305, %v4820, %v4819
        %v4822 = vperm.slane %v4447, %v1307
        %v4823 = vsel %vm1309, %v4822, %v4821
        %v4824 = vperm.slane %v4449, %v1311
        %v4825 = vsel %vm1313, %v4824, %v4823
        %v4826 = vperm.slane %v4451, %v1315
        %v4827 = vsel %vm1317, %v4826, %v4825
        %v4828 = vperm.slane %v4453, %v1319
        %v4829 = vsel %vm1321, %v4828, %v4827
        %v4830 = vperm.slane %v4455, %v1323
        %v4831 = vsel %vm1325, %v4830, %v4829
        %v4832 = vperm.slane %v4457, %v1327
        %v4833 = vsel %vm1329, %v4832, %v4831
        %v4834 = vperm.slane %v4459, %v1331
        %v4835 = vsel %vm1333, %v4834, %v4833
        %v4836 = vperm.slane %v4461, %v1335
        %v4837 = vsel %vm1337, %v4836, %v4835
        %v4838 = vperm.slane %v4463, %v1339
        %v4839 = vsel %vm1341, %v4838, %v4837
        %v4840 = vperm.slane %v4465, %v1343
        %v4841 = vsel %vm1345, %v4840, %v4839
        %v4842 = vperm.slane %v4467, %v1347
        %v4843 = vsel %vm1349, %v4842, %v4841
        %v4844 = vsel %vm1568, %v4657, %v4626
        %v4845 = vsel %vm1570, %v4688, %v4844
        %v4846 = vsel %vm1572, %v4719, %v4845
        %v4847 = vsel %vm1574, %v4750, %v4846
        %v4848 = vsel %vm1576, %v4781, %v4847
        %v4849 = vsel %vm1578, %v4812, %v4848
        %v4850 = vsel %vm1580, %v4843, %v4849
        %4852 = vmax.xlane.f32.xlu0 %v4850
        %v4853 = vpop.xlane.xlu0 %4852
        %v4855 = vperm.slane %v4853, 0
        %v4856 = vperm.slane %v4853, 1
        %v4857 = vperm.slane %v4853, 2
        %v4858 = vperm.slane %v4853, 3
        %v4859 = vperm.slane %v4853, 4
        %v4860 = vperm.slane %v4853, 5
        %v4861 = vperm.slane %v4853, 6
        %v4862 = vperm.slane %v4853, 7
        %v4871 = vsub.f32 %v4213, %v4855
        %v4872 = vsub.f32 %v4215, %v4855
        %v4873 = vsub.f32 %v4217, %v4855
        %v4874 = vsub.f32 %v4219, %v4855
        %v4875 = vsub.f32 %v4221, %v4855
        %v4876 = vsub.f32 %v4223, %v4855
        %v4877 = vsub.f32 %v4225, %v4855
        %v4878 = vsub.f32 %v4227, %v4855
        %v4879 = vsub.f32 %v4229, %v4855
        %v4880 = vsub.f32 %v4231, %v4855
        %v4881 = vsub.f32 %v4233, %v4855
        %v4882 = vsub.f32 %v4235, %v4855
        %v4883 = vsub.f32 %v4237, %v4855
        %v4884 = vsub.f32 %v4239, %v4855
        %v4885 = vsub.f32 %v4241, %v4855
        %v4886 = vsub.f32 %v4243, %v4855
        %v4887 = vsub.f32 %v4245, %v4856
        %v4888 = vsub.f32 %v4247, %v4856
        %v4889 = vsub.f32 %v4249, %v4856
        %v4890 = vsub.f32 %v4251, %v4856
        %v4891 = vsub.f32 %v4253, %v4856
        %v4892 = vsub.f32 %v4255, %v4856
        %v4893 = vsub.f32 %v4257, %v4856
        %v4894 = vsub.f32 %v4259, %v4856
        %v4895 = vsub.f32 %v4261, %v4856
        %v4896 = vsub.f32 %v4263, %v4856
        %v4897 = vsub.f32 %v4265, %v4856
        %v4898 = vsub.f32 %v4267, %v4856
        %v4899 = vsub.f32 %v4269, %v4856
        %v4900 = vsub.f32 %v4271, %v4856
        %v4901 = vsub.f32 %v4273, %v4856
        %v4902 = vsub.f32 %v4275, %v4856
        %v4903 = vsub.f32 %v4277, %v4857
        %v4904 = vsub.f32 %v4279, %v4857
        %v4905 = vsub.f32 %v4281, %v4857
        %v4906 = vsub.f32 %v4283, %v4857
        %v4907 = vsub.f32 %v4285, %v4857
        %v4908 = vsub.f32 %v4287, %v4857
        %v4909 = vsub.f32 %v4289, %v4857
        %v4910 = vsub.f32 %v4291, %v4857
        %v4911 = vsub.f32 %v4293, %v4857
        %v4912 = vsub.f32 %v4295, %v4857
        %v4913 = vsub.f32 %v4297, %v4857
        %v4914 = vsub.f32 %v4299, %v4857
        %v4915 = vsub.f32 %v4301, %v4857
        %v4916 = vsub.f32 %v4303, %v4857
        %v4917 = vsub.f32 %v4305, %v4857
        %v4918 = vsub.f32 %v4307, %v4857
        %v4919 = vsub.f32 %v4309, %v4858
        %v4920 = vsub.f32 %v4311, %v4858
        %v4921 = vsub.f32 %v4313, %v4858
        %v4922 = vsub.f32 %v4315, %v4858
        %v4923 = vsub.f32 %v4317, %v4858
        %v4924 = vsub.f32 %v4319, %v4858
        %v4925 = vsub.f32 %v4321, %v4858
        %v4926 = vsub.f32 %v4323, %v4858
        %v4927 = vsub.f32 %v4325, %v4858
        %v4928 = vsub.f32 %v4327, %v4858
        %v4929 = vsub.f32 %v4329, %v4858
        %v4930 = vsub.f32 %v4331, %v4858
        %v4931 = vsub.f32 %v4333, %v4858
        %v4932 = vsub.f32 %v4335, %v4858
        %v4933 = vsub.f32 %v4337, %v4858
        %v4934 = vsub.f32 %v4339, %v4858
        %v4935 = vsub.f32 %v4341, %v4859
        %v4936 = vsub.f32 %v4343, %v4859
        %v4937 = vsub.f32 %v4345, %v4859
        %v4938 = vsub.f32 %v4347, %v4859
        %v4939 = vsub.f32 %v4349, %v4859
        %v4940 = vsub.f32 %v4351, %v4859
        %v4941 = vsub.f32 %v4353, %v4859
        %v4942 = vsub.f32 %v4355, %v4859
        %v4943 = vsub.f32 %v4357, %v4859
        %v4944 = vsub.f32 %v4359, %v4859
        %v4945 = vsub.f32 %v4361, %v4859
        %v4946 = vsub.f32 %v4363, %v4859
        %v4947 = vsub.f32 %v4365, %v4859
        %v4948 = vsub.f32 %v4367, %v4859
        %v4949 = vsub.f32 %v4369, %v4859
        %v4950 = vsub.f32 %v4371, %v4859
        %v4951 = vsub.f32 %v4373, %v4860
        %v4952 = vsub.f32 %v4375, %v4860
        %v4953 = vsub.f32 %v4377, %v4860
        %v4954 = vsub.f32 %v4379, %v4860
        %v4955 = vsub.f32 %v4381, %v4860
        %v4956 = vsub.f32 %v4383, %v4860
        %v4957 = vsub.f32 %v4385, %v4860
        %v4958 = vsub.f32 %v4387, %v4860
        %v4959 = vsub.f32 %v4389, %v4860
        %v4960 = vsub.f32 %v4391, %v4860
        %v4961 = vsub.f32 %v4393, %v4860
        %v4962 = vsub.f32 %v4395, %v4860
        %v4963 = vsub.f32 %v4397, %v4860
        %v4964 = vsub.f32 %v4399, %v4860
        %v4965 = vsub.f32 %v4401, %v4860
        %v4966 = vsub.f32 %v4403, %v4860
        %v4967 = vsub.f32 %v4405, %v4861
        %v4968 = vsub.f32 %v4407, %v4861
        %v4969 = vsub.f32 %v4409, %v4861
        %v4970 = vsub.f32 %v4411, %v4861
        %v4971 = vsub.f32 %v4413, %v4861
        %v4972 = vsub.f32 %v4415, %v4861
        %v4973 = vsub.f32 %v4417, %v4861
        %v4974 = vsub.f32 %v4419, %v4861
        %v4975 = vsub.f32 %v4421, %v4861
        %v4976 = vsub.f32 %v4423, %v4861
        %v4977 = vsub.f32 %v4425, %v4861
        %v4978 = vsub.f32 %v4427, %v4861
        %v4979 = vsub.f32 %v4429, %v4861
        %v4980 = vsub.f32 %v4431, %v4861
        %v4981 = vsub.f32 %v4433, %v4861
        %v4982 = vsub.f32 %v4435, %v4861
        %v4983 = vsub.f32 %v4437, %v4862
        %v4984 = vsub.f32 %v4439, %v4862
        %v4985 = vsub.f32 %v4441, %v4862
        %v4986 = vsub.f32 %v4443, %v4862
        %v4987 = vsub.f32 %v4445, %v4862
        %v4988 = vsub.f32 %v4447, %v4862
        %v4989 = vsub.f32 %v4449, %v4862
        %v4990 = vsub.f32 %v4451, %v4862
        %v4991 = vsub.f32 %v4453, %v4862
        %v4992 = vsub.f32 %v4455, %v4862
        %v4993 = vsub.f32 %v4457, %v4862
        %v4994 = vsub.f32 %v4459, %v4862
        %v4995 = vsub.f32 %v4461, %v4862
        %v4996 = vsub.f32 %v4463, %v4862
        %v4997 = vsub.f32 %v4465, %v4862
        %v4998 = vsub.f32 %v4467, %v4862
        %v4999 = vmul.f32 %v4871, 1.442695
        %v5000 = vpow.pop %v4999
        %v5001 = vmul.f32 %v4872, 1.442695
        %v5002 = vpow.pop %v5001
        %v5003 = vmul.f32 %v4873, 1.442695
        %v5004 = vpow.pop %v5003
        %v5005 = vmul.f32 %v4874, 1.442695
        %v5006 = vpow.pop %v5005
        %v5007 = vmul.f32 %v4875, 1.442695
        %v5008 = vpow.pop %v5007
        %v5009 = vmul.f32 %v4876, 1.442695
        %v5010 = vpow.pop %v5009
        %v5011 = vmul.f32 %v4877, 1.442695
        %v5012 = vpow.pop %v5011
        %v5013 = vmul.f32 %v4878, 1.442695
        %v5014 = vpow.pop %v5013
        %v5015 = vmul.f32 %v4879, 1.442695
        %v5016 = vpow.pop %v5015
        %v5017 = vmul.f32 %v4880, 1.442695
        %v5018 = vpow.pop %v5017
        %v5019 = vmul.f32 %v4881, 1.442695
        %v5020 = vpow.pop %v5019
        %v5021 = vmul.f32 %v4882, 1.442695
        %v5022 = vpow.pop %v5021
        %v5023 = vmul.f32 %v4883, 1.442695
        %v5024 = vpow.pop %v5023
        %v5025 = vmul.f32 %v4884, 1.442695
        %v5026 = vpow.pop %v5025
        %v5027 = vmul.f32 %v4885, 1.442695
        %v5028 = vpow.pop %v5027
        %v5029 = vmul.f32 %v4886, 1.442695
        %v5030 = vpow.pop %v5029
        %v5031 = vmul.f32 %v4887, 1.442695
        %v5032 = vpow.pop %v5031
        %v5033 = vmul.f32 %v4888, 1.442695
        %v5034 = vpow.pop %v5033
        %v5035 = vmul.f32 %v4889, 1.442695
        %v5036 = vpow.pop %v5035
        %v5037 = vmul.f32 %v4890, 1.442695
        %v5038 = vpow.pop %v5037
        %v5039 = vmul.f32 %v4891, 1.442695
        %v5040 = vpow.pop %v5039
        %v5041 = vmul.f32 %v4892, 1.442695
        %v5042 = vpow.pop %v5041
        %v5043 = vmul.f32 %v4893, 1.442695
        %v5044 = vpow.pop %v5043
        %v5045 = vmul.f32 %v4894, 1.442695
        %v5046 = vpow.pop %v5045
        %v5047 = vmul.f32 %v4895, 1.442695
        %v5048 = vpow.pop %v5047
        %v5049 = vmul.f32 %v4896, 1.442695
        %v5050 = vpow.pop %v5049
        %v5051 = vmul.f32 %v4897, 1.442695
        %v5052 = vpow.pop %v5051
        %v5053 = vmul.f32 %v4898, 1.442695
        %v5054 = vpow.pop %v5053
        %v5055 = vmul.f32 %v4899, 1.442695
        %v5056 = vpow.pop %v5055
        %v5057 = vmul.f32 %v4900, 1.442695
        %v5058 = vpow.pop %v5057
        %v5059 = vmul.f32 %v4901, 1.442695
        %v5060 = vpow.pop %v5059
        %v5061 = vmul.f32 %v4902, 1.442695
        %v5062 = vpow.pop %v5061
        %v5063 = vmul.f32 %v4903, 1.442695
        %v5064 = vpow.pop %v5063
        %v5065 = vmul.f32 %v4904, 1.442695
        %v5066 = vpow.pop %v5065
        %v5067 = vmul.f32 %v4905, 1.442695
        %v5068 = vpow.pop %v5067
        %v5069 = vmul.f32 %v4906, 1.442695
        %v5070 = vpow.pop %v5069
        %v5071 = vmul.f32 %v4907, 1.442695
        %v5072 = vpow.pop %v5071
        %v5073 = vmul.f32 %v4908, 1.442695
        %v5074 = vpow.pop %v5073
        %v5075 = vmul.f32 %v4909, 1.442695
        %v5076 = vpow.pop %v5075
        %v5077 = vmul.f32 %v4910, 1.442695
        %v5078 = vpow.pop %v5077
        %v5079 = vmul.f32 %v4911, 1.442695
        %v5080 = vpow.pop %v5079
        %v5081 = vmul.f32 %v4912, 1.442695
        %v5082 = vpow.pop %v5081
        %v5083 = vmul.f32 %v4913, 1.442695
        %v5084 = vpow.pop %v5083
        %v5085 = vmul.f32 %v4914, 1.442695
        %v5086 = vpow.pop %v5085
        %v5087 = vmul.f32 %v4915, 1.442695
        %v5088 = vpow.pop %v5087
        %v5089 = vmul.f32 %v4916, 1.442695
        %v5090 = vpow.pop %v5089
        %v5091 = vmul.f32 %v4917, 1.442695
        %v5092 = vpow.pop %v5091
        %v5093 = vmul.f32 %v4918, 1.442695
        %v5094 = vpow.pop %v5093
        %v5095 = vmul.f32 %v4919, 1.442695
        %v5096 = vpow.pop %v5095
        %v5097 = vmul.f32 %v4920, 1.442695
        %v5098 = vpow.pop %v5097
        %v5099 = vmul.f32 %v4921, 1.442695
        %v5100 = vpow.pop %v5099
        %v5101 = vmul.f32 %v4922, 1.442695
        %v5102 = vpow.pop %v5101
        %v5103 = vmul.f32 %v4923, 1.442695
        %v5104 = vpow.pop %v5103
        %v5105 = vmul.f32 %v4924, 1.442695
        %v5106 = vpow.pop %v5105
        %v5107 = vmul.f32 %v4925, 1.442695
        %v5108 = vpow.pop %v5107
        %v5109 = vmul.f32 %v4926, 1.442695
        %v5110 = vpow.pop %v5109
        %v5111 = vmul.f32 %v4927, 1.442695
        %v5112 = vpow.pop %v5111
        %v5113 = vmul.f32 %v4928, 1.442695
        %v5114 = vpow.pop %v5113
        %v5115 = vmul.f32 %v4929, 1.442695
        %v5116 = vpow.pop %v5115
        %v5117 = vmul.f32 %v4930, 1.442695
        %v5118 = vpow.pop %v5117
        %v5119 = vmul.f32 %v4931, 1.442695
        %v5120 = vpow.pop %v5119
        %v5121 = vmul.f32 %v4932, 1.442695
        %v5122 = vpow.pop %v5121
        %v5123 = vmul.f32 %v4933, 1.442695
        %v5124 = vpow.pop %v5123
        %v5125 = vmul.f32 %v4934, 1.442695
        %v5126 = vpow.pop %v5125
        %v5127 = vmul.f32 %v4935, 1.442695
        %v5128 = vpow.pop %v5127
        %v5129 = vmul.f32 %v4936, 1.442695
        %v5130 = vpow.pop %v5129
        %v5131 = vmul.f32 %v4937, 1.442695
        %v5132 = vpow.pop %v5131
        %v5133 = vmul.f32 %v4938, 1.442695
        %v5134 = vpow.pop %v5133
        %v5135 = vmul.f32 %v4939, 1.442695
        %v5136 = vpow.pop %v5135
        %v5137 = vmul.f32 %v4940, 1.442695
        %v5138 = vpow.pop %v5137
        %v5139 = vmul.f32 %v4941, 1.442695
        %v5140 = vpow.pop %v5139
        %v5141 = vmul.f32 %v4942, 1.442695
        %v5142 = vpow.pop %v5141
        %v5143 = vmul.f32 %v4943, 1.442695
        %v5144 = vpow.pop %v5143
        %v5145 = vmul.f32 %v4944, 1.442695
        %v5146 = vpow.pop %v5145
        %v5147 = vmul.f32 %v4945, 1.442695
        %v5148 = vpow.pop %v5147
        %v5149 = vmul.f32 %v4946, 1.442695
        %v5150 = vpow.pop %v5149
        %v5151 = vmul.f32 %v4947, 1.442695
        %v5152 = vpow.pop %v5151
        %v5153 = vmul.f32 %v4948, 1.442695
        %v5154 = vpow.pop %v5153
        %v5155 = vmul.f32 %v4949, 1.442695
        %v5156 = vpow.pop %v5155
        %v5157 = vmul.f32 %v4950, 1.442695
        %v5158 = vpow.pop %v5157
        %v5159 = vmul.f32 %v4951, 1.442695
        %v5160 = vpow.pop %v5159
        %v5161 = vmul.f32 %v4952, 1.442695
        %v5162 = vpow.pop %v5161
        %v5163 = vmul.f32 %v4953, 1.442695
        %v5164 = vpow.pop %v5163
        %v5165 = vmul.f32 %v4954, 1.442695
        %v5166 = vpow.pop %v5165
        %v5167 = vmul.f32 %v4955, 1.442695
        %v5168 = vpow.pop %v5167
        %v5169 = vmul.f32 %v4956, 1.442695
        %v5170 = vpow.pop %v5169
        %v5171 = vmul.f32 %v4957, 1.442695
        %v5172 = vpow.pop %v5171
        %v5173 = vmul.f32 %v4958, 1.442695
        %v5174 = vpow.pop %v5173
        %v5175 = vmul.f32 %v4959, 1.442695
        %v5176 = vpow.pop %v5175
        %v5177 = vmul.f32 %v4960, 1.442695
        %v5178 = vpow.pop %v5177
        %v5179 = vmul.f32 %v4961, 1.442695
        %v5180 = vpow.pop %v5179
        %v5181 = vmul.f32 %v4962, 1.442695
        %v5182 = vpow.pop %v5181
        %v5183 = vmul.f32 %v4963, 1.442695
        %v5184 = vpow.pop %v5183
        %v5185 = vmul.f32 %v4964, 1.442695
        %v5186 = vpow.pop %v5185
        %v5187 = vmul.f32 %v4965, 1.442695
        %v5188 = vpow.pop %v5187
        %v5189 = vmul.f32 %v4966, 1.442695
        %v5190 = vpow.pop %v5189
        %v5191 = vmul.f32 %v4967, 1.442695
        %v5192 = vpow.pop %v5191
        %v5193 = vmul.f32 %v4968, 1.442695
        %v5194 = vpow.pop %v5193
        %v5195 = vmul.f32 %v4969, 1.442695
        %v5196 = vpow.pop %v5195
        %v5197 = vmul.f32 %v4970, 1.442695
        %v5198 = vpow.pop %v5197
        %v5199 = vmul.f32 %v4971, 1.442695
        %v5200 = vpow.pop %v5199
        %v5201 = vmul.f32 %v4972, 1.442695
        %v5202 = vpow.pop %v5201
        %v5203 = vmul.f32 %v4973, 1.442695
        %v5204 = vpow.pop %v5203
        %v5205 = vmul.f32 %v4974, 1.442695
        %v5206 = vpow.pop %v5205
        %v5207 = vmul.f32 %v4975, 1.442695
        %v5208 = vpow.pop %v5207
        %v5209 = vmul.f32 %v4976, 1.442695
        %v5210 = vpow.pop %v5209
        %v5211 = vmul.f32 %v4977, 1.442695
        %v5212 = vpow.pop %v5211
        %v5213 = vmul.f32 %v4978, 1.442695
        %v5214 = vpow.pop %v5213
        %v5215 = vmul.f32 %v4979, 1.442695
        %v5216 = vpow.pop %v5215
        %v5217 = vmul.f32 %v4980, 1.442695
        %v5218 = vpow.pop %v5217
        %v5219 = vmul.f32 %v4981, 1.442695
        %v5220 = vpow.pop %v5219
        %v5221 = vmul.f32 %v4982, 1.442695
        %v5222 = vpow.pop %v5221
        %v5223 = vmul.f32 %v4983, 1.442695
        %v5224 = vpow.pop %v5223
        %v5225 = vmul.f32 %v4984, 1.442695
        %v5226 = vpow.pop %v5225
        %v5227 = vmul.f32 %v4985, 1.442695
        %v5228 = vpow.pop %v5227
        %v5229 = vmul.f32 %v4986, 1.442695
        %v5230 = vpow.pop %v5229
        %v5231 = vmul.f32 %v4987, 1.442695
        %v5232 = vpow.pop %v5231
        %v5233 = vmul.f32 %v4988, 1.442695
        %v5234 = vpow.pop %v5233
        %v5235 = vmul.f32 %v4989, 1.442695
        %v5236 = vpow.pop %v5235
        %v5237 = vmul.f32 %v4990, 1.442695
        %v5238 = vpow.pop %v5237
        %v5239 = vmul.f32 %v4991, 1.442695
        %v5240 = vpow.pop %v5239
        %v5241 = vmul.f32 %v4992, 1.442695
        %v5242 = vpow.pop %v5241
        %v5243 = vmul.f32 %v4993, 1.442695
        %v5244 = vpow.pop %v5243
        %v5245 = vmul.f32 %v4994, 1.442695
        %v5246 = vpow.pop %v5245
        %v5247 = vmul.f32 %v4995, 1.442695
        %v5248 = vpow.pop %v5247
        %v5249 = vmul.f32 %v4996, 1.442695
        %v5250 = vpow.pop %v5249
        %v5251 = vmul.f32 %v4997, 1.442695
        %v5252 = vpow.pop %v5251
        %v5253 = vmul.f32 %v4998, 1.442695
        %v5254 = vpow.pop %v5253
        %5383 = vset.pattern.permute.xlu0 0
        %5384 = vperm.xlu0 %5383, %v5000
        %v5385 = vpop.permute.xlu0 %5384
        %5386 = vset.pattern.permute.xlu0 0
        %5387 = vperm.xlu0 %5386, %v5002
        %v5388 = vpop.permute.xlu0 %5387
        %5389 = vset.pattern.permute.xlu0 0
        %5390 = vperm.xlu0 %5389, %v5004
        %v5391 = vpop.permute.xlu0 %5390
        %5392 = vset.pattern.permute.xlu0 0
        %5393 = vperm.xlu0 %5392, %v5006
        %v5394 = vpop.permute.xlu0 %5393
        %5395 = vset.pattern.permute.xlu0 0
        %5396 = vperm.xlu0 %5395, %v5008
        %v5397 = vpop.permute.xlu0 %5396
        %5398 = vset.pattern.permute.xlu0 0
        %5399 = vperm.xlu0 %5398, %v5010
        %v5400 = vpop.permute.xlu0 %5399
        %5401 = vset.pattern.permute.xlu0 0
        %5402 = vperm.xlu0 %5401, %v5012
        %v5403 = vpop.permute.xlu0 %5402
        %5404 = vset.pattern.permute.xlu0 0
        %5405 = vperm.xlu0 %5404, %v5014
        %v5406 = vpop.permute.xlu0 %5405
        %5407 = vset.pattern.permute.xlu0 0
        %5408 = vperm.xlu0 %5407, %v5016
        %v5409 = vpop.permute.xlu0 %5408
        %5410 = vset.pattern.permute.xlu0 0
        %5411 = vperm.xlu0 %5410, %v5018
        %v5412 = vpop.permute.xlu0 %5411
        %5413 = vset.pattern.permute.xlu0 0
        %5414 = vperm.xlu0 %5413, %v5020
        %v5415 = vpop.permute.xlu0 %5414
        %5416 = vset.pattern.permute.xlu0 0
        %5417 = vperm.xlu0 %5416, %v5022
        %v5418 = vpop.permute.xlu0 %5417
        %5419 = vset.pattern.permute.xlu0 0
        %5420 = vperm.xlu0 %5419, %v5024
        %v5421 = vpop.permute.xlu0 %5420
        %5422 = vset.pattern.permute.xlu0 0
        %5423 = vperm.xlu0 %5422, %v5026
        %v5424 = vpop.permute.xlu0 %5423
        %5425 = vset.pattern.permute.xlu0 0
        %5426 = vperm.xlu0 %5425, %v5028
        %v5427 = vpop.permute.xlu0 %5426
        %5428 = vset.pattern.permute.xlu0 0
        %5429 = vperm.xlu0 %5428, %v5030
        %v5430 = vpop.permute.xlu0 %5429
        %5431 = vset.pattern.permute.xlu0 0
        %5432 = vperm.xlu0 %5431, %v5032
        %v5433 = vpop.permute.xlu0 %5432
        %5434 = vset.pattern.permute.xlu0 0
        %5435 = vperm.xlu0 %5434, %v5034
        %v5436 = vpop.permute.xlu0 %5435
        %5437 = vset.pattern.permute.xlu0 0
        %5438 = vperm.xlu0 %5437, %v5036
        %v5439 = vpop.permute.xlu0 %5438
        %5440 = vset.pattern.permute.xlu0 0
        %5441 = vperm.xlu0 %5440, %v5038
        %v5442 = vpop.permute.xlu0 %5441
        %5443 = vset.pattern.permute.xlu0 0
        %5444 = vperm.xlu0 %5443, %v5040
        %v5445 = vpop.permute.xlu0 %5444
        %5446 = vset.pattern.permute.xlu0 0
        %5447 = vperm.xlu0 %5446, %v5042
        %v5448 = vpop.permute.xlu0 %5447
        %5449 = vset.pattern.permute.xlu0 0
        %5450 = vperm.xlu0 %5449, %v5044
        %v5451 = vpop.permute.xlu0 %5450
        %5452 = vset.pattern.permute.xlu0 0
        %5453 = vperm.xlu0 %5452, %v5046
        %v5454 = vpop.permute.xlu0 %5453
        %5455 = vset.pattern.permute.xlu0 0
        %5456 = vperm.xlu0 %5455, %v5048
        %v5457 = vpop.permute.xlu0 %5456
        %5458 = vset.pattern.permute.xlu0 0
        %5459 = vperm.xlu0 %5458, %v5050
        %v5460 = vpop.permute.xlu0 %5459
        %5461 = vset.pattern.permute.xlu0 0
        %5462 = vperm.xlu0 %5461, %v5052
        %v5463 = vpop.permute.xlu0 %5462
        %5464 = vset.pattern.permute.xlu0 0
        %5465 = vperm.xlu0 %5464, %v5054
        %v5466 = vpop.permute.xlu0 %5465
        %5467 = vset.pattern.permute.xlu0 0
        %5468 = vperm.xlu0 %5467, %v5056
        %v5469 = vpop.permute.xlu0 %5468
        %5470 = vset.pattern.permute.xlu0 0
        %5471 = vperm.xlu0 %5470, %v5058
        %v5472 = vpop.permute.xlu0 %5471
        %5473 = vset.pattern.permute.xlu0 0
        %5474 = vperm.xlu0 %5473, %v5060
        %v5475 = vpop.permute.xlu0 %5474
        %5476 = vset.pattern.permute.xlu0 0
        %5477 = vperm.xlu0 %5476, %v5062
        %v5478 = vpop.permute.xlu0 %5477
        %5479 = vset.pattern.permute.xlu0 0
        %5480 = vperm.xlu0 %5479, %v5064
        %v5481 = vpop.permute.xlu0 %5480
        %5482 = vset.pattern.permute.xlu0 0
        %5483 = vperm.xlu0 %5482, %v5066
        %v5484 = vpop.permute.xlu0 %5483
        %5485 = vset.pattern.permute.xlu0 0
        %5486 = vperm.xlu0 %5485, %v5068
        %v5487 = vpop.permute.xlu0 %5486
        %5488 = vset.pattern.permute.xlu0 0
        %5489 = vperm.xlu0 %5488, %v5070
        %v5490 = vpop.permute.xlu0 %5489
        %5491 = vset.pattern.permute.xlu0 0
        %5492 = vperm.xlu0 %5491, %v5072
        %v5493 = vpop.permute.xlu0 %5492
        %5494 = vset.pattern.permute.xlu0 0
        %5495 = vperm.xlu0 %5494, %v5074
        %v5496 = vpop.permute.xlu0 %5495
        %5497 = vset.pattern.permute.xlu0 0
        %5498 = vperm.xlu0 %5497, %v5076
        %v5499 = vpop.permute.xlu0 %5498
        %5500 = vset.pattern.permute.xlu0 0
        %5501 = vperm.xlu0 %5500, %v5078
        %v5502 = vpop.permute.xlu0 %5501
        %5503 = vset.pattern.permute.xlu0 0
        %5504 = vperm.xlu0 %5503, %v5080
        %v5505 = vpop.permute.xlu0 %5504
        %5506 = vset.pattern.permute.xlu0 0
        %5507 = vperm.xlu0 %5506, %v5082
        %v5508 = vpop.permute.xlu0 %5507
        %5509 = vset.pattern.permute.xlu0 0
        %5510 = vperm.xlu0 %5509, %v5084
        %v5511 = vpop.permute.xlu0 %5510
        %5512 = vset.pattern.permute.xlu0 0
        %5513 = vperm.xlu0 %5512, %v5086
        %v5514 = vpop.permute.xlu0 %5513
        %5515 = vset.pattern.permute.xlu0 0
        %5516 = vperm.xlu0 %5515, %v5088
        %v5517 = vpop.permute.xlu0 %5516
        %5518 = vset.pattern.permute.xlu0 0
        %5519 = vperm.xlu0 %5518, %v5090
        %v5520 = vpop.permute.xlu0 %5519
        %5521 = vset.pattern.permute.xlu0 0
        %5522 = vperm.xlu0 %5521, %v5092
        %v5523 = vpop.permute.xlu0 %5522
        %5524 = vset.pattern.permute.xlu0 0
        %5525 = vperm.xlu0 %5524, %v5094
        %v5526 = vpop.permute.xlu0 %5525
        %5527 = vset.pattern.permute.xlu0 0
        %5528 = vperm.xlu0 %5527, %v5096
        %v5529 = vpop.permute.xlu0 %5528
        %5530 = vset.pattern.permute.xlu0 0
        %5531 = vperm.xlu0 %5530, %v5098
        %v5532 = vpop.permute.xlu0 %5531
        %5533 = vset.pattern.permute.xlu0 0
        %5534 = vperm.xlu0 %5533, %v5100
        %v5535 = vpop.permute.xlu0 %5534
        %5536 = vset.pattern.permute.xlu0 0
        %5537 = vperm.xlu0 %5536, %v5102
        %v5538 = vpop.permute.xlu0 %5537
        %5539 = vset.pattern.permute.xlu0 0
        %5540 = vperm.xlu0 %5539, %v5104
        %v5541 = vpop.permute.xlu0 %5540
        %5542 = vset.pattern.permute.xlu0 0
        %5543 = vperm.xlu0 %5542, %v5106
        %v5544 = vpop.permute.xlu0 %5543
        %5545 = vset.pattern.permute.xlu0 0
        %5546 = vperm.xlu0 %5545, %v5108
        %v5547 = vpop.permute.xlu0 %5546
        %5548 = vset.pattern.permute.xlu0 0
        %5549 = vperm.xlu0 %5548, %v5110
        %v5550 = vpop.permute.xlu0 %5549
        %5551 = vset.pattern.permute.xlu0 0
        %5552 = vperm.xlu0 %5551, %v5112
        %v5553 = vpop.permute.xlu0 %5552
        %5554 = vset.pattern.permute.xlu0 0
        %5555 = vperm.xlu0 %5554, %v5114
        %v5556 = vpop.permute.xlu0 %5555
        %5557 = vset.pattern.permute.xlu0 0
        %5558 = vperm.xlu0 %5557, %v5116
        %v5559 = vpop.permute.xlu0 %5558
        %5560 = vset.pattern.permute.xlu0 0
        %5561 = vperm.xlu0 %5560, %v5118
        %v5562 = vpop.permute.xlu0 %5561
        %5563 = vset.pattern.permute.xlu0 0
        %5564 = vperm.xlu0 %5563, %v5120
        %v5565 = vpop.permute.xlu0 %5564
        %5566 = vset.pattern.permute.xlu0 0
        %5567 = vperm.xlu0 %5566, %v5122
        %v5568 = vpop.permute.xlu0 %5567
        %5569 = vset.pattern.permute.xlu0 0
        %5570 = vperm.xlu0 %5569, %v5124
        %v5571 = vpop.permute.xlu0 %5570
        %5572 = vset.pattern.permute.xlu0 0
        %5573 = vperm.xlu0 %5572, %v5126
        %v5574 = vpop.permute.xlu0 %5573
        %5575 = vset.pattern.permute.xlu0 0
        %5576 = vperm.xlu0 %5575, %v5128
        %v5577 = vpop.permute.xlu0 %5576
        %5578 = vset.pattern.permute.xlu0 0
        %5579 = vperm.xlu0 %5578, %v5130
        %v5580 = vpop.permute.xlu0 %5579
        %5581 = vset.pattern.permute.xlu0 0
        %5582 = vperm.xlu0 %5581, %v5132
        %v5583 = vpop.permute.xlu0 %5582
        %5584 = vset.pattern.permute.xlu0 0
        %5585 = vperm.xlu0 %5584, %v5134
        %v5586 = vpop.permute.xlu0 %5585
        %5587 = vset.pattern.permute.xlu0 0
        %5588 = vperm.xlu0 %5587, %v5136
        %v5589 = vpop.permute.xlu0 %5588
        %5590 = vset.pattern.permute.xlu0 0
        %5591 = vperm.xlu0 %5590, %v5138
        %v5592 = vpop.permute.xlu0 %5591
        %5593 = vset.pattern.permute.xlu0 0
        %5594 = vperm.xlu0 %5593, %v5140
        %v5595 = vpop.permute.xlu0 %5594
        %5596 = vset.pattern.permute.xlu0 0
        %5597 = vperm.xlu0 %5596, %v5142
        %v5598 = vpop.permute.xlu0 %5597
        %5599 = vset.pattern.permute.xlu0 0
        %5600 = vperm.xlu0 %5599, %v5144
        %v5601 = vpop.permute.xlu0 %5600
        %5602 = vset.pattern.permute.xlu0 0
        %5603 = vperm.xlu0 %5602, %v5146
        %v5604 = vpop.permute.xlu0 %5603
        %5605 = vset.pattern.permute.xlu0 0
        %5606 = vperm.xlu0 %5605, %v5148
        %v5607 = vpop.permute.xlu0 %5606
        %5608 = vset.pattern.permute.xlu0 0
        %5609 = vperm.xlu0 %5608, %v5150
        %v5610 = vpop.permute.xlu0 %5609
        %5611 = vset.pattern.permute.xlu0 0
        %5612 = vperm.xlu0 %5611, %v5152
        %v5613 = vpop.permute.xlu0 %5612
        %5614 = vset.pattern.permute.xlu0 0
        %5615 = vperm.xlu0 %5614, %v5154
        %v5616 = vpop.permute.xlu0 %5615
        %5617 = vset.pattern.permute.xlu0 0
        %5618 = vperm.xlu0 %5617, %v5156
        %v5619 = vpop.permute.xlu0 %5618
        %5620 = vset.pattern.permute.xlu0 0
        %5621 = vperm.xlu0 %5620, %v5158
        %v5622 = vpop.permute.xlu0 %5621
        %5623 = vset.pattern.permute.xlu0 0
        %5624 = vperm.xlu0 %5623, %v5160
        %v5625 = vpop.permute.xlu0 %5624
        %5626 = vset.pattern.permute.xlu0 0
        %5627 = vperm.xlu0 %5626, %v5162
        %v5628 = vpop.permute.xlu0 %5627
        %5629 = vset.pattern.permute.xlu0 0
        %5630 = vperm.xlu0 %5629, %v5164
        %v5631 = vpop.permute.xlu0 %5630
        %5632 = vset.pattern.permute.xlu0 0
        %5633 = vperm.xlu0 %5632, %v5166
        %v5634 = vpop.permute.xlu0 %5633
        %5635 = vset.pattern.permute.xlu0 0
        %5636 = vperm.xlu0 %5635, %v5168
        %v5637 = vpop.permute.xlu0 %5636
        %5638 = vset.pattern.permute.xlu0 0
        %5639 = vperm.xlu0 %5638, %v5170
        %v5640 = vpop.permute.xlu0 %5639
        %5641 = vset.pattern.permute.xlu0 0
        %5642 = vperm.xlu0 %5641, %v5172
        %v5643 = vpop.permute.xlu0 %5642
        %5644 = vset.pattern.permute.xlu0 0
        %5645 = vperm.xlu0 %5644, %v5174
        %v5646 = vpop.permute.xlu0 %5645
        %5647 = vset.pattern.permute.xlu0 0
        %5648 = vperm.xlu0 %5647, %v5176
        %v5649 = vpop.permute.xlu0 %5648
        %5650 = vset.pattern.permute.xlu0 0
        %5651 = vperm.xlu0 %5650, %v5178
        %v5652 = vpop.permute.xlu0 %5651
        %5653 = vset.pattern.permute.xlu0 0
        %5654 = vperm.xlu0 %5653, %v5180
        %v5655 = vpop.permute.xlu0 %5654
        %5656 = vset.pattern.permute.xlu0 0
        %5657 = vperm.xlu0 %5656, %v5182
        %v5658 = vpop.permute.xlu0 %5657
        %5659 = vset.pattern.permute.xlu0 0
        %5660 = vperm.xlu0 %5659, %v5184
        %v5661 = vpop.permute.xlu0 %5660
        %5662 = vset.pattern.permute.xlu0 0
        %5663 = vperm.xlu0 %5662, %v5186
        %v5664 = vpop.permute.xlu0 %5663
        %5665 = vset.pattern.permute.xlu0 0
        %5666 = vperm.xlu0 %5665, %v5188
        %v5667 = vpop.permute.xlu0 %5666
        %5668 = vset.pattern.permute.xlu0 0
        %5669 = vperm.xlu0 %5668, %v5190
        %v5670 = vpop.permute.xlu0 %5669
        %5671 = vset.pattern.permute.xlu0 0
        %5672 = vperm.xlu0 %5671, %v5192
        %v5673 = vpop.permute.xlu0 %5672
        %5674 = vset.pattern.permute.xlu0 0
        %5675 = vperm.xlu0 %5674, %v5194
        %v5676 = vpop.permute.xlu0 %5675
        %5677 = vset.pattern.permute.xlu0 0
        %5678 = vperm.xlu0 %5677, %v5196
        %v5679 = vpop.permute.xlu0 %5678
        %5680 = vset.pattern.permute.xlu0 0
        %5681 = vperm.xlu0 %5680, %v5198
        %v5682 = vpop.permute.xlu0 %5681
        %5683 = vset.pattern.permute.xlu0 0
        %5684 = vperm.xlu0 %5683, %v5200
        %v5685 = vpop.permute.xlu0 %5684
        %5686 = vset.pattern.permute.xlu0 0
        %5687 = vperm.xlu0 %5686, %v5202
        %v5688 = vpop.permute.xlu0 %5687
        %5689 = vset.pattern.permute.xlu0 0
        %5690 = vperm.xlu0 %5689, %v5204
        %v5691 = vpop.permute.xlu0 %5690
        %5692 = vset.pattern.permute.xlu0 0
        %5693 = vperm.xlu0 %5692, %v5206
        %v5694 = vpop.permute.xlu0 %5693
        %5695 = vset.pattern.permute.xlu0 0
        %5696 = vperm.xlu0 %5695, %v5208
        %v5697 = vpop.permute.xlu0 %5696
        %5698 = vset.pattern.permute.xlu0 0
        %5699 = vperm.xlu0 %5698, %v5210
        %v5700 = vpop.permute.xlu0 %5699
        %5701 = vset.pattern.permute.xlu0 0
        %5702 = vperm.xlu0 %5701, %v5212
        %v5703 = vpop.permute.xlu0 %5702
        %5704 = vset.pattern.permute.xlu0 0
        %5705 = vperm.xlu0 %5704, %v5214
        %v5706 = vpop.permute.xlu0 %5705
        %5707 = vset.pattern.permute.xlu0 0
        %5708 = vperm.xlu0 %5707, %v5216
        %v5709 = vpop.permute.xlu0 %5708
        %5710 = vset.pattern.permute.xlu0 0
        %5711 = vperm.xlu0 %5710, %v5218
        %v5712 = vpop.permute.xlu0 %5711
        %5713 = vset.pattern.permute.xlu0 0
        %5714 = vperm.xlu0 %5713, %v5220
        %v5715 = vpop.permute.xlu0 %5714
        %5716 = vset.pattern.permute.xlu0 0
        %5717 = vperm.xlu0 %5716, %v5222
        %v5718 = vpop.permute.xlu0 %5717
        %5719 = vset.pattern.permute.xlu0 0
        %5720 = vperm.xlu0 %5719, %v5224
        %v5721 = vpop.permute.xlu0 %5720
        %5722 = vset.pattern.permute.xlu0 0
        %5723 = vperm.xlu0 %5722, %v5226
        %v5724 = vpop.permute.xlu0 %5723
        %5725 = vset.pattern.permute.xlu0 0
        %5726 = vperm.xlu0 %5725, %v5228
        %v5727 = vpop.permute.xlu0 %5726
        %5728 = vset.pattern.permute.xlu0 0
        %5729 = vperm.xlu0 %5728, %v5230
        %v5730 = vpop.permute.xlu0 %5729
        %5731 = vset.pattern.permute.xlu0 0
        %5732 = vperm.xlu0 %5731, %v5232
        %v5733 = vpop.permute.xlu0 %5732
        %5734 = vset.pattern.permute.xlu0 0
        %5735 = vperm.xlu0 %5734, %v5234
        %v5736 = vpop.permute.xlu0 %5735
        %5737 = vset.pattern.permute.xlu0 0
        %5738 = vperm.xlu0 %5737, %v5236
        %v5739 = vpop.permute.xlu0 %5738
        %5740 = vset.pattern.permute.xlu0 0
        %5741 = vperm.xlu0 %5740, %v5238
        %v5742 = vpop.permute.xlu0 %5741
        %5743 = vset.pattern.permute.xlu0 0
        %5744 = vperm.xlu0 %5743, %v5240
        %v5745 = vpop.permute.xlu0 %5744
        %5746 = vset.pattern.permute.xlu0 0
        %5747 = vperm.xlu0 %5746, %v5242
        %v5748 = vpop.permute.xlu0 %5747
        %5749 = vset.pattern.permute.xlu0 0
        %5750 = vperm.xlu0 %5749, %v5244
        %v5751 = vpop.permute.xlu0 %5750
        %5752 = vset.pattern.permute.xlu0 0
        %5753 = vperm.xlu0 %5752, %v5246
        %v5754 = vpop.permute.xlu0 %5753
        %5755 = vset.pattern.permute.xlu0 0
        %5756 = vperm.xlu0 %5755, %v5248
        %v5757 = vpop.permute.xlu0 %5756
        %5758 = vset.pattern.permute.xlu0 0
        %5759 = vperm.xlu0 %5758, %v5250
        %v5760 = vpop.permute.xlu0 %5759
        %5761 = vset.pattern.permute.xlu0 0
        %5762 = vperm.xlu0 %5761, %v5252
        %v5763 = vpop.permute.xlu0 %5762
        %5764 = vset.pattern.permute.xlu0 0
        %5765 = vperm.xlu0 %5764, %v5254
        %v5766 = vpop.permute.xlu0 %5765
        %v5767 = vperm.slane %v5385, %v1289
        %v5768 = vperm.slane %v5388, %v1291
        %v5769 = vsel %vm1293, %v5768, %v5767
        %v5770 = vperm.slane %v5391, %v1295
        %v5771 = vsel %vm1297, %v5770, %v5769
        %v5772 = vperm.slane %v5394, %v1299
        %v5773 = vsel %vm1301, %v5772, %v5771
        %v5774 = vperm.slane %v5397, %v1303
        %v5775 = vsel %vm1305, %v5774, %v5773
        %v5776 = vperm.slane %v5400, %v1307
        %v5777 = vsel %vm1309, %v5776, %v5775
        %v5778 = vperm.slane %v5403, %v1311
        %v5779 = vsel %vm1313, %v5778, %v5777
        %v5780 = vperm.slane %v5406, %v1315
        %v5781 = vsel %vm1317, %v5780, %v5779
        %v5782 = vperm.slane %v5409, %v1319
        %v5783 = vsel %vm1321, %v5782, %v5781
        %v5784 = vperm.slane %v5412, %v1323
        %v5785 = vsel %vm1325, %v5784, %v5783
        %v5786 = vperm.slane %v5415, %v1327
        %v5787 = vsel %vm1329, %v5786, %v5785
        %v5788 = vperm.slane %v5418, %v1331
        %v5789 = vsel %vm1333, %v5788, %v5787
        %v5790 = vperm.slane %v5421, %v1335
        %v5791 = vsel %vm1337, %v5790, %v5789
        %v5792 = vperm.slane %v5424, %v1339
        %v5793 = vsel %vm1341, %v5792, %v5791
        %v5794 = vperm.slane %v5427, %v1343
        %v5795 = vsel %vm1345, %v5794, %v5793
        %v5796 = vperm.slane %v5430, %v1347
        %v5797 = vsel %vm1349, %v5796, %v5795
        %v5798 = vperm.slane %v5433, %v1289
        %v5799 = vperm.slane %v5436, %v1291
        %v5800 = vsel %vm1293, %v5799, %v5798
        %v5801 = vperm.slane %v5439, %v1295
        %v5802 = vsel %vm1297, %v5801, %v5800
        %v5803 = vperm.slane %v5442, %v1299
        %v5804 = vsel %vm1301, %v5803, %v5802
        %v5805 = vperm.slane %v5445, %v1303
        %v5806 = vsel %vm1305, %v5805, %v5804
        %v5807 = vperm.slane %v5448, %v1307
        %v5808 = vsel %vm1309, %v5807, %v5806
        %v5809 = vperm.slane %v5451, %v1311
        %v5810 = vsel %vm1313, %v5809, %v5808
        %v5811 = vperm.slane %v5454, %v1315
        %v5812 = vsel %vm1317, %v5811, %v5810
        %v5813 = vperm.slane %v5457, %v1319
        %v5814 = vsel %vm1321, %v5813, %v5812
        %v5815 = vperm.slane %v5460, %v1323
        %v5816 = vsel %vm1325, %v5815, %v5814
        %v5817 = vperm.slane %v5463, %v1327
        %v5818 = vsel %vm1329, %v5817, %v5816
        %v5819 = vperm.slane %v5466, %v1331
        %v5820 = vsel %vm1333, %v5819, %v5818
        %v5821 = vperm.slane %v5469, %v1335
        %v5822 = vsel %vm1337, %v5821, %v5820
        %v5823 = vperm.slane %v5472, %v1339
        %v5824 = vsel %vm1341, %v5823, %v5822
        %v5825 = vperm.slane %v5475, %v1343
        %v5826 = vsel %vm1345, %v5825, %v5824
        %v5827 = vperm.slane %v5478, %v1347
        %v5828 = vsel %vm1349, %v5827, %v5826
        %v5829 = vperm.slane %v5481, %v1289
        %v5830 = vperm.slane %v5484, %v1291
        %v5831 = vsel %vm1293, %v5830, %v5829
        %v5832 = vperm.slane %v5487, %v1295
        %v5833 = vsel %vm1297, %v5832, %v5831
        %v5834 = vperm.slane %v5490, %v1299
        %v5835 = vsel %vm1301, %v5834, %v5833
        %v5836 = vperm.slane %v5493, %v1303
        %v5837 = vsel %vm1305, %v5836, %v5835
        %v5838 = vperm.slane %v5496, %v1307
        %v5839 = vsel %vm1309, %v5838, %v5837
        %v5840 = vperm.slane %v5499, %v1311
        %v5841 = vsel %vm1313, %v5840, %v5839
        %v5842 = vperm.slane %v5502, %v1315
        %v5843 = vsel %vm1317, %v5842, %v5841
        %v5844 = vperm.slane %v5505, %v1319
        %v5845 = vsel %vm1321, %v5844, %v5843
        %v5846 = vperm.slane %v5508, %v1323
        %v5847 = vsel %vm1325, %v5846, %v5845
        %v5848 = vperm.slane %v5511, %v1327
        %v5849 = vsel %vm1329, %v5848, %v5847
        %v5850 = vperm.slane %v5514, %v1331
        %v5851 = vsel %vm1333, %v5850, %v5849
        %v5852 = vperm.slane %v5517, %v1335
        %v5853 = vsel %vm1337, %v5852, %v5851
        %v5854 = vperm.slane %v5520, %v1339
        %v5855 = vsel %vm1341, %v5854, %v5853
        %v5856 = vperm.slane %v5523, %v1343
        %v5857 = vsel %vm1345, %v5856, %v5855
        %v5858 = vperm.slane %v5526, %v1347
        %v5859 = vsel %vm1349, %v5858, %v5857
        %v5860 = vperm.slane %v5529, %v1289
        %v5861 = vperm.slane %v5532, %v1291
        %v5862 = vsel %vm1293, %v5861, %v5860
        %v5863 = vperm.slane %v5535, %v1295
        %v5864 = vsel %vm1297, %v5863, %v5862
        %v5865 = vperm.slane %v5538, %v1299
        %v5866 = vsel %vm1301, %v5865, %v5864
        %v5867 = vperm.slane %v5541, %v1303
        %v5868 = vsel %vm1305, %v5867, %v5866
        %v5869 = vperm.slane %v5544, %v1307
        %v5870 = vsel %vm1309, %v5869, %v5868
        %v5871 = vperm.slane %v5547, %v1311
        %v5872 = vsel %vm1313, %v5871, %v5870
        %v5873 = vperm.slane %v5550, %v1315
        %v5874 = vsel %vm1317, %v5873, %v5872
        %v5875 = vperm.slane %v5553, %v1319
        %v5876 = vsel %vm1321, %v5875, %v5874
        %v5877 = vperm.slane %v5556, %v1323
        %v5878 = vsel %vm1325, %v5877, %v5876
        %v5879 = vperm.slane %v5559, %v1327
        %v5880 = vsel %vm1329, %v5879, %v5878
        %v5881 = vperm.slane %v5562, %v1331
        %v5882 = vsel %vm1333, %v5881, %v5880
        %v5883 = vperm.slane %v5565, %v1335
        %v5884 = vsel %vm1337, %v5883, %v5882
        %v5885 = vperm.slane %v5568, %v1339
        %v5886 = vsel %vm1341, %v5885, %v5884
        %v5887 = vperm.slane %v5571, %v1343
        %v5888 = vsel %vm1345, %v5887, %v5886
        %v5889 = vperm.slane %v5574, %v1347
        %v5890 = vsel %vm1349, %v5889, %v5888
        %v5891 = vperm.slane %v5577, %v1289
        %v5892 = vperm.slane %v5580, %v1291
        %v5893 = vsel %vm1293, %v5892, %v5891
        %v5894 = vperm.slane %v5583, %v1295
        %v5895 = vsel %vm1297, %v5894, %v5893
        %v5896 = vperm.slane %v5586, %v1299
        %v5897 = vsel %vm1301, %v5896, %v5895
        %v5898 = vperm.slane %v5589, %v1303
        %v5899 = vsel %vm1305, %v5898, %v5897
        %v5900 = vperm.slane %v5592, %v1307
        %v5901 = vsel %vm1309, %v5900, %v5899
        %v5902 = vperm.slane %v5595, %v1311
        %v5903 = vsel %vm1313, %v5902, %v5901
        %v5904 = vperm.slane %v5598, %v1315
        %v5905 = vsel %vm1317, %v5904, %v5903
        %v5906 = vperm.slane %v5601, %v1319
        %v5907 = vsel %vm1321, %v5906, %v5905
        %v5908 = vperm.slane %v5604, %v1323
        %v5909 = vsel %vm1325, %v5908, %v5907
        %v5910 = vperm.slane %v5607, %v1327
        %v5911 = vsel %vm1329, %v5910, %v5909
        %v5912 = vperm.slane %v5610, %v1331
        %v5913 = vsel %vm1333, %v5912, %v5911
        %v5914 = vperm.slane %v5613, %v1335
        %v5915 = vsel %vm1337, %v5914, %v5913
        %v5916 = vperm.slane %v5616, %v1339
        %v5917 = vsel %vm1341, %v5916, %v5915
        %v5918 = vperm.slane %v5619, %v1343
        %v5919 = vsel %vm1345, %v5918, %v5917
        %v5920 = vperm.slane %v5622, %v1347
        %v5921 = vsel %vm1349, %v5920, %v5919
        %v5922 = vperm.slane %v5625, %v1289
        %v5923 = vperm.slane %v5628, %v1291
        %v5924 = vsel %vm1293, %v5923, %v5922
        %v5925 = vperm.slane %v5631, %v1295
        %v5926 = vsel %vm1297, %v5925, %v5924
        %v5927 = vperm.slane %v5634, %v1299
        %v5928 = vsel %vm1301, %v5927, %v5926
        %v5929 = vperm.slane %v5637, %v1303
        %v5930 = vsel %vm1305, %v5929, %v5928
        %v5931 = vperm.slane %v5640, %v1307
        %v5932 = vsel %vm1309, %v5931, %v5930
        %v5933 = vperm.slane %v5643, %v1311
        %v5934 = vsel %vm1313, %v5933, %v5932
        %v5935 = vperm.slane %v5646, %v1315
        %v5936 = vsel %vm1317, %v5935, %v5934
        %v5937 = vperm.slane %v5649, %v1319
        %v5938 = vsel %vm1321, %v5937, %v5936
        %v5939 = vperm.slane %v5652, %v1323
        %v5940 = vsel %vm1325, %v5939, %v5938
        %v5941 = vperm.slane %v5655, %v1327
        %v5942 = vsel %vm1329, %v5941, %v5940
        %v5943 = vperm.slane %v5658, %v1331
        %v5944 = vsel %vm1333, %v5943, %v5942
        %v5945 = vperm.slane %v5661, %v1335
        %v5946 = vsel %vm1337, %v5945, %v5944
        %v5947 = vperm.slane %v5664, %v1339
        %v5948 = vsel %vm1341, %v5947, %v5946
        %v5949 = vperm.slane %v5667, %v1343
        %v5950 = vsel %vm1345, %v5949, %v5948
        %v5951 = vperm.slane %v5670, %v1347
        %v5952 = vsel %vm1349, %v5951, %v5950
        %v5953 = vperm.slane %v5673, %v1289
        %v5954 = vperm.slane %v5676, %v1291
        %v5955 = vsel %vm1293, %v5954, %v5953
        %v5956 = vperm.slane %v5679, %v1295
        %v5957 = vsel %vm1297, %v5956, %v5955
        %v5958 = vperm.slane %v5682, %v1299
        %v5959 = vsel %vm1301, %v5958, %v5957
        %v5960 = vperm.slane %v5685, %v1303
        %v5961 = vsel %vm1305, %v5960, %v5959
        %v5962 = vperm.slane %v5688, %v1307
        %v5963 = vsel %vm1309, %v5962, %v5961
        %v5964 = vperm.slane %v5691, %v1311
        %v5965 = vsel %vm1313, %v5964, %v5963
        %v5966 = vperm.slane %v5694, %v1315
        %v5967 = vsel %vm1317, %v5966, %v5965
        %v5968 = vperm.slane %v5697, %v1319
        %v5969 = vsel %vm1321, %v5968, %v5967
        %v5970 = vperm.slane %v5700, %v1323
        %v5971 = vsel %vm1325, %v5970, %v5969
        %v5972 = vperm.slane %v5703, %v1327
        %v5973 = vsel %vm1329, %v5972, %v5971
        %v5974 = vperm.slane %v5706, %v1331
        %v5975 = vsel %vm1333, %v5974, %v5973
        %v5976 = vperm.slane %v5709, %v1335
        %v5977 = vsel %vm1337, %v5976, %v5975
        %v5978 = vperm.slane %v5712, %v1339
        %v5979 = vsel %vm1341, %v5978, %v5977
        %v5980 = vperm.slane %v5715, %v1343
        %v5981 = vsel %vm1345, %v5980, %v5979
        %v5982 = vperm.slane %v5718, %v1347
        %v5983 = vsel %vm1349, %v5982, %v5981
        %v5984 = vperm.slane %v5721, %v1289
        %v5985 = vperm.slane %v5724, %v1291
        %v5986 = vsel %vm1293, %v5985, %v5984
        %v5987 = vperm.slane %v5727, %v1295
        %v5988 = vsel %vm1297, %v5987, %v5986
        %v5989 = vperm.slane %v5730, %v1299
        %v5990 = vsel %vm1301, %v5989, %v5988
        %v5991 = vperm.slane %v5733, %v1303
        %v5992 = vsel %vm1305, %v5991, %v5990
        %v5993 = vperm.slane %v5736, %v1307
        %v5994 = vsel %vm1309, %v5993, %v5992
        %v5995 = vperm.slane %v5739, %v1311
        %v5996 = vsel %vm1313, %v5995, %v5994
        %v5997 = vperm.slane %v5742, %v1315
        %v5998 = vsel %vm1317, %v5997, %v5996
        %v5999 = vperm.slane %v5745, %v1319
        %v6000 = vsel %vm1321, %v5999, %v5998
        %v6001 = vperm.slane %v5748, %v1323
        %v6002 = vsel %vm1325, %v6001, %v6000
        %v6003 = vperm.slane %v5751, %v1327
        %v6004 = vsel %vm1329, %v6003, %v6002
        %v6005 = vperm.slane %v5754, %v1331
        %v6006 = vsel %vm1333, %v6005, %v6004
        %v6007 = vperm.slane %v5757, %v1335
        %v6008 = vsel %vm1337, %v6007, %v6006
        %v6009 = vperm.slane %v5760, %v1339
        %v6010 = vsel %vm1341, %v6009, %v6008
        %v6011 = vperm.slane %v5763, %v1343
        %v6012 = vsel %vm1345, %v6011, %v6010
        %v6013 = vperm.slane %v5766, %v1347
        %v6014 = vsel %vm1349, %v6013, %v6012
        %v6015 = vsel %vm1568, %v5828, %v5797
        %v6016 = vsel %vm1570, %v5859, %v6015
        %v6017 = vsel %vm1572, %v5890, %v6016
        %v6018 = vsel %vm1574, %v5921, %v6017
        %v6019 = vsel %vm1576, %v5952, %v6018
        %v6020 = vsel %vm1578, %v5983, %v6019
        %v6021 = vsel %vm1580, %v6014, %v6020
        %6023 = vadd.xlane.f32.xlu0 %v6021
        %v6024 = vpop.xlane.xlu0 %6023
        %v6026 = vperm.slane %v6024, 0
        %v6027 = vperm.slane %v6024, 1
        %v6028 = vperm.slane %v6024, 2
        %v6029 = vperm.slane %v6024, 3
        %v6030 = vperm.slane %v6024, 4
        %v6031 = vperm.slane %v6024, 5
        %v6032 = vperm.slane %v6024, 6
        %v6033 = vperm.slane %v6024, 7
        %v6042 = vrcp.pop %v6026
        %v6043 = vmul.f32 %v6026, %v6042
        %v6044 = vsub.f32 1.0, %v6043
        %v6045 = vmul.f32 %v6042, %v6044
        %v6046 = vadd.f32 %v6042, %v6045
        %vm6047 = vweird.f32 %v6026
        %vm6048 = vweird.f32 %v6042
        %vm6049 = vmor %vm6047, %vm6048
        %v6050 = vsel %vm6049, %v6042, %v6046
        %v6051 = vand.u32 2147483647, %v6026
        %vm6052 = vcmp.eq.f32.partialorder %v6051, 8.507059e+37
        %v6053 = vand.u32 %v6026, 2147483648
        %v6054 = vor.u32 1.1754944e-38, %v6053
        %v6055 = vsel %vm6052, %v6054, %v6050
        %v6056 = vmul.f32 %v5000, %v6055
        %v6057 = vmul.f32 %v5002, %v6055
        %v6058 = vmul.f32 %v5004, %v6055
        %v6059 = vmul.f32 %v5006, %v6055
        %v6060 = vmul.f32 %v5008, %v6055
        %v6061 = vmul.f32 %v5010, %v6055
        %v6062 = vmul.f32 %v5012, %v6055
        %v6063 = vmul.f32 %v5014, %v6055
        %v6064 = vmul.f32 %v5016, %v6055
        %v6065 = vmul.f32 %v5018, %v6055
        %v6066 = vmul.f32 %v5020, %v6055
        %v6067 = vmul.f32 %v5022, %v6055
        %v6068 = vmul.f32 %v5024, %v6055
        %v6069 = vmul.f32 %v5026, %v6055
        %v6070 = vmul.f32 %v5028, %v6055
        %v6071 = vmul.f32 %v5030, %v6055
        %v6072 = vrcp.pop %v6027
        %v6073 = vmul.f32 %v6027, %v6072
        %v6074 = vsub.f32 1.0, %v6073
        %v6075 = vmul.f32 %v6072, %v6074
        %v6076 = vadd.f32 %v6072, %v6075
        %vm6077 = vweird.f32 %v6027
        %vm6078 = vweird.f32 %v6072
        %vm6079 = vmor %vm6077, %vm6078
        %v6080 = vsel %vm6079, %v6072, %v6076
        %v6081 = vand.u32 2147483647, %v6027
        %vm6082 = vcmp.eq.f32.partialorder %v6081, 8.507059e+37
        %v6083 = vand.u32 %v6027, 2147483648
        %v6084 = vor.u32 1.1754944e-38, %v6083
        %v6085 = vsel %vm6082, %v6084, %v6080
        %v6086 = vmul.f32 %v5032, %v6085
        %v6087 = vmul.f32 %v5034, %v6085
        %v6088 = vmul.f32 %v5036, %v6085
        %v6089 = vmul.f32 %v5038, %v6085
        %v6090 = vmul.f32 %v5040, %v6085
        %v6091 = vmul.f32 %v5042, %v6085
        %v6092 = vmul.f32 %v5044, %v6085
        %v6093 = vmul.f32 %v5046, %v6085
        %v6094 = vmul.f32 %v5048, %v6085
        %v6095 = vmul.f32 %v5050, %v6085
        %v6096 = vmul.f32 %v5052, %v6085
        %v6097 = vmul.f32 %v5054, %v6085
        %v6098 = vmul.f32 %v5056, %v6085
        %v6099 = vmul.f32 %v5058, %v6085
        %v6100 = vmul.f32 %v5060, %v6085
        %v6101 = vmul.f32 %v5062, %v6085
        %v6102 = vrcp.pop %v6028
        %v6103 = vmul.f32 %v6028, %v6102
        %v6104 = vsub.f32 1.0, %v6103
        %v6105 = vmul.f32 %v6102, %v6104
        %v6106 = vadd.f32 %v6102, %v6105
        %vm6107 = vweird.f32 %v6028
        %vm6108 = vweird.f32 %v6102
        %vm6109 = vmor %vm6107, %vm6108
        %v6110 = vsel %vm6109, %v6102, %v6106
        %v6111 = vand.u32 2147483647, %v6028
        %vm6112 = vcmp.eq.f32.partialorder %v6111, 8.507059e+37
        %v6113 = vand.u32 %v6028, 2147483648
        %v6114 = vor.u32 1.1754944e-38, %v6113
        %v6115 = vsel %vm6112, %v6114, %v6110
        %v6116 = vmul.f32 %v5064, %v6115
        %v6117 = vmul.f32 %v5066, %v6115
        %v6118 = vmul.f32 %v5068, %v6115
        %v6119 = vmul.f32 %v5070, %v6115
        %v6120 = vmul.f32 %v5072, %v6115
        %v6121 = vmul.f32 %v5074, %v6115
        %v6122 = vmul.f32 %v5076, %v6115
        %v6123 = vmul.f32 %v5078, %v6115
        %v6124 = vmul.f32 %v5080, %v6115
        %v6125 = vmul.f32 %v5082, %v6115
        %v6126 = vmul.f32 %v5084, %v6115
        %v6127 = vmul.f32 %v5086, %v6115
        %v6128 = vmul.f32 %v5088, %v6115
        %v6129 = vmul.f32 %v5090, %v6115
        %v6130 = vmul.f32 %v5092, %v6115
        %v6131 = vmul.f32 %v5094, %v6115
        %v6132 = vrcp.pop %v6029
        %v6133 = vmul.f32 %v6029, %v6132
        %v6134 = vsub.f32 1.0, %v6133
        %v6135 = vmul.f32 %v6132, %v6134
        %v6136 = vadd.f32 %v6132, %v6135
        %vm6137 = vweird.f32 %v6029
        %vm6138 = vweird.f32 %v6132
        %vm6139 = vmor %vm6137, %vm6138
        %v6140 = vsel %vm6139, %v6132, %v6136
        %v6141 = vand.u32 2147483647, %v6029
        %vm6142 = vcmp.eq.f32.partialorder %v6141, 8.507059e+37
        %v6143 = vand.u32 %v6029, 2147483648
        %v6144 = vor.u32 1.1754944e-38, %v6143
        %v6145 = vsel %vm6142, %v6144, %v6140
        %v6146 = vmul.f32 %v5096, %v6145
        %v6147 = vmul.f32 %v5098, %v6145
        %v6148 = vmul.f32 %v5100, %v6145
        %v6149 = vmul.f32 %v5102, %v6145
        %v6150 = vmul.f32 %v5104, %v6145
        %v6151 = vmul.f32 %v5106, %v6145
        %v6152 = vmul.f32 %v5108, %v6145
        %v6153 = vmul.f32 %v5110, %v6145
        %v6154 = vmul.f32 %v5112, %v6145
        %v6155 = vmul.f32 %v5114, %v6145
        %v6156 = vmul.f32 %v5116, %v6145
        %v6157 = vmul.f32 %v5118, %v6145
        %v6158 = vmul.f32 %v5120, %v6145
        %v6159 = vmul.f32 %v5122, %v6145
        %v6160 = vmul.f32 %v5124, %v6145
        %v6161 = vmul.f32 %v5126, %v6145
        %v6162 = vrcp.pop %v6030
        %v6163 = vmul.f32 %v6030, %v6162
        %v6164 = vsub.f32 1.0, %v6163
        %v6165 = vmul.f32 %v6162, %v6164
        %v6166 = vadd.f32 %v6162, %v6165
        %vm6167 = vweird.f32 %v6030
        %vm6168 = vweird.f32 %v6162
        %vm6169 = vmor %vm6167, %vm6168
        %v6170 = vsel %vm6169, %v6162, %v6166
        %v6171 = vand.u32 2147483647, %v6030
        %vm6172 = vcmp.eq.f32.partialorder %v6171, 8.507059e+37
        %v6173 = vand.u32 %v6030, 2147483648
        %v6174 = vor.u32 1.1754944e-38, %v6173
        %v6175 = vsel %vm6172, %v6174, %v6170
        %v6176 = vmul.f32 %v5128, %v6175
        %v6177 = vmul.f32 %v5130, %v6175
        %v6178 = vmul.f32 %v5132, %v6175
        %v6179 = vmul.f32 %v5134, %v6175
        %v6180 = vmul.f32 %v5136, %v6175
        %v6181 = vmul.f32 %v5138, %v6175
        %v6182 = vmul.f32 %v5140, %v6175
        %v6183 = vmul.f32 %v5142, %v6175
        %v6184 = vmul.f32 %v5144, %v6175
        %v6185 = vmul.f32 %v5146, %v6175
        %v6186 = vmul.f32 %v5148, %v6175
        %v6187 = vmul.f32 %v5150, %v6175
        %v6188 = vmul.f32 %v5152, %v6175
        %v6189 = vmul.f32 %v5154, %v6175
        %v6190 = vmul.f32 %v5156, %v6175
        %v6191 = vmul.f32 %v5158, %v6175
        %v6192 = vrcp.pop %v6031
        %v6193 = vmul.f32 %v6031, %v6192
        %v6194 = vsub.f32 1.0, %v6193
        %v6195 = vmul.f32 %v6192, %v6194
        %v6196 = vadd.f32 %v6192, %v6195
        %vm6197 = vweird.f32 %v6031
        %vm6198 = vweird.f32 %v6192
        %vm6199 = vmor %vm6197, %vm6198
        %v6200 = vsel %vm6199, %v6192, %v6196
        %v6201 = vand.u32 2147483647, %v6031
        %vm6202 = vcmp.eq.f32.partialorder %v6201, 8.507059e+37
        %v6203 = vand.u32 %v6031, 2147483648
        %v6204 = vor.u32 1.1754944e-38, %v6203
        %v6205 = vsel %vm6202, %v6204, %v6200
        %v6206 = vmul.f32 %v5160, %v6205
        %v6207 = vmul.f32 %v5162, %v6205
        %v6208 = vmul.f32 %v5164, %v6205
        %v6209 = vmul.f32 %v5166, %v6205
        %v6210 = vmul.f32 %v5168, %v6205
        %v6211 = vmul.f32 %v5170, %v6205
        %v6212 = vmul.f32 %v5172, %v6205
        %v6213 = vmul.f32 %v5174, %v6205
        %v6214 = vmul.f32 %v5176, %v6205
        %v6215 = vmul.f32 %v5178, %v6205
        %v6216 = vmul.f32 %v5180, %v6205
        %v6217 = vmul.f32 %v5182, %v6205
        %v6218 = vmul.f32 %v5184, %v6205
        %v6219 = vmul.f32 %v5186, %v6205
        %v6220 = vmul.f32 %v5188, %v6205
        %v6221 = vmul.f32 %v5190, %v6205
        %v6222 = vrcp.pop %v6032
        %v6223 = vmul.f32 %v6032, %v6222
        %v6224 = vsub.f32 1.0, %v6223
        %v6225 = vmul.f32 %v6222, %v6224
        %v6226 = vadd.f32 %v6222, %v6225
        %vm6227 = vweird.f32 %v6032
        %vm6228 = vweird.f32 %v6222
        %vm6229 = vmor %vm6227, %vm6228
        %v6230 = vsel %vm6229, %v6222, %v6226
        %v6231 = vand.u32 2147483647, %v6032
        %vm6232 = vcmp.eq.f32.partialorder %v6231, 8.507059e+37
        %v6233 = vand.u32 %v6032, 2147483648
        %v6234 = vor.u32 1.1754944e-38, %v6233
        %v6235 = vsel %vm6232, %v6234, %v6230
        %v6236 = vmul.f32 %v5192, %v6235
        %v6237 = vmul.f32 %v5194, %v6235
        %v6238 = vmul.f32 %v5196, %v6235
        %v6239 = vmul.f32 %v5198, %v6235
        %v6240 = vmul.f32 %v5200, %v6235
        %v6241 = vmul.f32 %v5202, %v6235
        %v6242 = vmul.f32 %v5204, %v6235
        %v6243 = vmul.f32 %v5206, %v6235
        %v6244 = vmul.f32 %v5208, %v6235
        %v6245 = vmul.f32 %v5210, %v6235
        %v6246 = vmul.f32 %v5212, %v6235
        %v6247 = vmul.f32 %v5214, %v6235
        %v6248 = vmul.f32 %v5216, %v6235
        %v6249 = vmul.f32 %v5218, %v6235
        %v6250 = vmul.f32 %v5220, %v6235
        %v6251 = vmul.f32 %v5222, %v6235
        %v6252 = vrcp.pop %v6033
        %v6253 = vmul.f32 %v6033, %v6252
        %v6254 = vsub.f32 1.0, %v6253
        %v6255 = vmul.f32 %v6252, %v6254
        %v6256 = vadd.f32 %v6252, %v6255
        %vm6257 = vweird.f32 %v6033
        %vm6258 = vweird.f32 %v6252
        %vm6259 = vmor %vm6257, %vm6258
        %v6260 = vsel %vm6259, %v6252, %v6256
        %v6261 = vand.u32 2147483647, %v6033
        %vm6262 = vcmp.eq.f32.partialorder %v6261, 8.507059e+37
        %v6263 = vand.u32 %v6033, 2147483648
        %v6264 = vor.u32 1.1754944e-38, %v6263
        %v6265 = vsel %vm6262, %v6264, %v6260
        %v6266 = vmul.f32 %v5224, %v6265
        %v6267 = vmul.f32 %v5226, %v6265
        %v6268 = vmul.f32 %v5228, %v6265
        %v6269 = vmul.f32 %v5230, %v6265
        %v6270 = vmul.f32 %v5232, %v6265
        %v6271 = vmul.f32 %v5234, %v6265
        %v6272 = vmul.f32 %v5236, %v6265
        %v6273 = vmul.f32 %v5238, %v6265
        %v6274 = vmul.f32 %v5240, %v6265
        %v6275 = vmul.f32 %v5242, %v6265
        %v6276 = vmul.f32 %v5244, %v6265
        %v6277 = vmul.f32 %v5246, %v6265
        %v6278 = vmul.f32 %v5248, %v6265
        %v6279 = vmul.f32 %v5250, %v6265
        %v6280 = vmul.f32 %v5252, %v6265
        %v6281 = vmul.f32 %v5254, %v6265
        %6410 = vset.pattern.permute.xlu0 0
        %6411 = vperm.xlu0 %6410, %v6056
        %v6412 = vpop.permute.xlu0 %6411
        %6413 = vset.pattern.permute.xlu0 0
        %6414 = vperm.xlu0 %6413, %v6057
        %v6415 = vpop.permute.xlu0 %6414
        %6416 = vset.pattern.permute.xlu0 0
        %6417 = vperm.xlu0 %6416, %v6058
        %v6418 = vpop.permute.xlu0 %6417
        %6419 = vset.pattern.permute.xlu0 0
        %6420 = vperm.xlu0 %6419, %v6059
        %v6421 = vpop.permute.xlu0 %6420
        %6422 = vset.pattern.permute.xlu0 0
        %6423 = vperm.xlu0 %6422, %v6060
        %v6424 = vpop.permute.xlu0 %6423
        %6425 = vset.pattern.permute.xlu0 0
        %6426 = vperm.xlu0 %6425, %v6061
        %v6427 = vpop.permute.xlu0 %6426
        %6428 = vset.pattern.permute.xlu0 0
        %6429 = vperm.xlu0 %6428, %v6062
        %v6430 = vpop.permute.xlu0 %6429
        %6431 = vset.pattern.permute.xlu0 0
        %6432 = vperm.xlu0 %6431, %v6063
        %v6433 = vpop.permute.xlu0 %6432
        %6434 = vset.pattern.permute.xlu0 0
        %6435 = vperm.xlu0 %6434, %v6064
        %v6436 = vpop.permute.xlu0 %6435
        %6437 = vset.pattern.permute.xlu0 0
        %6438 = vperm.xlu0 %6437, %v6065
        %v6439 = vpop.permute.xlu0 %6438
        %6440 = vset.pattern.permute.xlu0 0
        %6441 = vperm.xlu0 %6440, %v6066
        %v6442 = vpop.permute.xlu0 %6441
        %6443 = vset.pattern.permute.xlu0 0
        %6444 = vperm.xlu0 %6443, %v6067
        %v6445 = vpop.permute.xlu0 %6444
        %6446 = vset.pattern.permute.xlu0 0
        %6447 = vperm.xlu0 %6446, %v6068
        %v6448 = vpop.permute.xlu0 %6447
        %6449 = vset.pattern.permute.xlu0 0
        %6450 = vperm.xlu0 %6449, %v6069
        %v6451 = vpop.permute.xlu0 %6450
        %6452 = vset.pattern.permute.xlu0 0
        %6453 = vperm.xlu0 %6452, %v6070
        %v6454 = vpop.permute.xlu0 %6453
        %6455 = vset.pattern.permute.xlu0 0
        %6456 = vperm.xlu0 %6455, %v6071
        %v6457 = vpop.permute.xlu0 %6456
        %6458 = vset.pattern.permute.xlu0 0
        %6459 = vperm.xlu0 %6458, %v6086
        %v6460 = vpop.permute.xlu0 %6459
        %6461 = vset.pattern.permute.xlu0 0
        %6462 = vperm.xlu0 %6461, %v6087
        %v6463 = vpop.permute.xlu0 %6462
        %6464 = vset.pattern.permute.xlu0 0
        %6465 = vperm.xlu0 %6464, %v6088
        %v6466 = vpop.permute.xlu0 %6465
        %6467 = vset.pattern.permute.xlu0 0
        %6468 = vperm.xlu0 %6467, %v6089
        %v6469 = vpop.permute.xlu0 %6468
        %6470 = vset.pattern.permute.xlu0 0
        %6471 = vperm.xlu0 %6470, %v6090
        %v6472 = vpop.permute.xlu0 %6471
        %6473 = vset.pattern.permute.xlu0 0
        %6474 = vperm.xlu0 %6473, %v6091
        %v6475 = vpop.permute.xlu0 %6474
        %6476 = vset.pattern.permute.xlu0 0
        %6477 = vperm.xlu0 %6476, %v6092
        %v6478 = vpop.permute.xlu0 %6477
        %6479 = vset.pattern.permute.xlu0 0
        %6480 = vperm.xlu0 %6479, %v6093
        %v6481 = vpop.permute.xlu0 %6480
        %6482 = vset.pattern.permute.xlu0 0
        %6483 = vperm.xlu0 %6482, %v6094
        %v6484 = vpop.permute.xlu0 %6483
        %6485 = vset.pattern.permute.xlu0 0
        %6486 = vperm.xlu0 %6485, %v6095
        %v6487 = vpop.permute.xlu0 %6486
        %6488 = vset.pattern.permute.xlu0 0
        %6489 = vperm.xlu0 %6488, %v6096
        %v6490 = vpop.permute.xlu0 %6489
        %6491 = vset.pattern.permute.xlu0 0
        %6492 = vperm.xlu0 %6491, %v6097
        %v6493 = vpop.permute.xlu0 %6492
        %6494 = vset.pattern.permute.xlu0 0
        %6495 = vperm.xlu0 %6494, %v6098
        %v6496 = vpop.permute.xlu0 %6495
        %6497 = vset.pattern.permute.xlu0 0
        %6498 = vperm.xlu0 %6497, %v6099
        %v6499 = vpop.permute.xlu0 %6498
        %6500 = vset.pattern.permute.xlu0 0
        %6501 = vperm.xlu0 %6500, %v6100
        %v6502 = vpop.permute.xlu0 %6501
        %6503 = vset.pattern.permute.xlu0 0
        %6504 = vperm.xlu0 %6503, %v6101
        %v6505 = vpop.permute.xlu0 %6504
        %6506 = vset.pattern.permute.xlu0 0
        %6507 = vperm.xlu0 %6506, %v6116
        %v6508 = vpop.permute.xlu0 %6507
        %6509 = vset.pattern.permute.xlu0 0
        %6510 = vperm.xlu0 %6509, %v6117
        %v6511 = vpop.permute.xlu0 %6510
        %6512 = vset.pattern.permute.xlu0 0
        %6513 = vperm.xlu0 %6512, %v6118
        %v6514 = vpop.permute.xlu0 %6513
        %6515 = vset.pattern.permute.xlu0 0
        %6516 = vperm.xlu0 %6515, %v6119
        %v6517 = vpop.permute.xlu0 %6516
        %6518 = vset.pattern.permute.xlu0 0
        %6519 = vperm.xlu0 %6518, %v6120
        %v6520 = vpop.permute.xlu0 %6519
        %6521 = vset.pattern.permute.xlu0 0
        %6522 = vperm.xlu0 %6521, %v6121
        %v6523 = vpop.permute.xlu0 %6522
        %6524 = vset.pattern.permute.xlu0 0
        %6525 = vperm.xlu0 %6524, %v6122
        %v6526 = vpop.permute.xlu0 %6525
        %6527 = vset.pattern.permute.xlu0 0
        %6528 = vperm.xlu0 %6527, %v6123
        %v6529 = vpop.permute.xlu0 %6528
        %6530 = vset.pattern.permute.xlu0 0
        %6531 = vperm.xlu0 %6530, %v6124
        %v6532 = vpop.permute.xlu0 %6531
        %6533 = vset.pattern.permute.xlu0 0
        %6534 = vperm.xlu0 %6533, %v6125
        %v6535 = vpop.permute.xlu0 %6534
        %6536 = vset.pattern.permute.xlu0 0
        %6537 = vperm.xlu0 %6536, %v6126
        %v6538 = vpop.permute.xlu0 %6537
        %6539 = vset.pattern.permute.xlu0 0
        %6540 = vperm.xlu0 %6539, %v6127
        %v6541 = vpop.permute.xlu0 %6540
        %6542 = vset.pattern.permute.xlu0 0
        %6543 = vperm.xlu0 %6542, %v6128
        %v6544 = vpop.permute.xlu0 %6543
        %6545 = vset.pattern.permute.xlu0 0
        %6546 = vperm.xlu0 %6545, %v6129
        %v6547 = vpop.permute.xlu0 %6546
        %6548 = vset.pattern.permute.xlu0 0
        %6549 = vperm.xlu0 %6548, %v6130
        %v6550 = vpop.permute.xlu0 %6549
        %6551 = vset.pattern.permute.xlu0 0
        %6552 = vperm.xlu0 %6551, %v6131
        %v6553 = vpop.permute.xlu0 %6552
        %6554 = vset.pattern.permute.xlu0 0
        %6555 = vperm.xlu0 %6554, %v6146
        %v6556 = vpop.permute.xlu0 %6555
        %6557 = vset.pattern.permute.xlu0 0
        %6558 = vperm.xlu0 %6557, %v6147
        %v6559 = vpop.permute.xlu0 %6558
        %6560 = vset.pattern.permute.xlu0 0
        %6561 = vperm.xlu0 %6560, %v6148
        %v6562 = vpop.permute.xlu0 %6561
        %6563 = vset.pattern.permute.xlu0 0
        %6564 = vperm.xlu0 %6563, %v6149
        %v6565 = vpop.permute.xlu0 %6564
        %6566 = vset.pattern.permute.xlu0 0
        %6567 = vperm.xlu0 %6566, %v6150
        %v6568 = vpop.permute.xlu0 %6567
        %6569 = vset.pattern.permute.xlu0 0
        %6570 = vperm.xlu0 %6569, %v6151
        %v6571 = vpop.permute.xlu0 %6570
        %6572 = vset.pattern.permute.xlu0 0
        %6573 = vperm.xlu0 %6572, %v6152
        %v6574 = vpop.permute.xlu0 %6573
        %6575 = vset.pattern.permute.xlu0 0
        %6576 = vperm.xlu0 %6575, %v6153
        %v6577 = vpop.permute.xlu0 %6576
        %6578 = vset.pattern.permute.xlu0 0
        %6579 = vperm.xlu0 %6578, %v6154
        %v6580 = vpop.permute.xlu0 %6579
        %6581 = vset.pattern.permute.xlu0 0
        %6582 = vperm.xlu0 %6581, %v6155
        %v6583 = vpop.permute.xlu0 %6582
        %6584 = vset.pattern.permute.xlu0 0
        %6585 = vperm.xlu0 %6584, %v6156
        %v6586 = vpop.permute.xlu0 %6585
        %6587 = vset.pattern.permute.xlu0 0
        %6588 = vperm.xlu0 %6587, %v6157
        %v6589 = vpop.permute.xlu0 %6588
        %6590 = vset.pattern.permute.xlu0 0
        %6591 = vperm.xlu0 %6590, %v6158
        %v6592 = vpop.permute.xlu0 %6591
        %6593 = vset.pattern.permute.xlu0 0
        %6594 = vperm.xlu0 %6593, %v6159
        %v6595 = vpop.permute.xlu0 %6594
        %6596 = vset.pattern.permute.xlu0 0
        %6597 = vperm.xlu0 %6596, %v6160
        %v6598 = vpop.permute.xlu0 %6597
        %6599 = vset.pattern.permute.xlu0 0
        %6600 = vperm.xlu0 %6599, %v6161
        %v6601 = vpop.permute.xlu0 %6600
        %6602 = vset.pattern.permute.xlu0 0
        %6603 = vperm.xlu0 %6602, %v6176
        %v6604 = vpop.permute.xlu0 %6603
        %6605 = vset.pattern.permute.xlu0 0
        %6606 = vperm.xlu0 %6605, %v6177
        %v6607 = vpop.permute.xlu0 %6606
        %6608 = vset.pattern.permute.xlu0 0
        %6609 = vperm.xlu0 %6608, %v6178
        %v6610 = vpop.permute.xlu0 %6609
        %6611 = vset.pattern.permute.xlu0 0
        %6612 = vperm.xlu0 %6611, %v6179
        %v6613 = vpop.permute.xlu0 %6612
        %6614 = vset.pattern.permute.xlu0 0
        %6615 = vperm.xlu0 %6614, %v6180
        %v6616 = vpop.permute.xlu0 %6615
        %6617 = vset.pattern.permute.xlu0 0
        %6618 = vperm.xlu0 %6617, %v6181
        %v6619 = vpop.permute.xlu0 %6618
        %6620 = vset.pattern.permute.xlu0 0
        %6621 = vperm.xlu0 %6620, %v6182
        %v6622 = vpop.permute.xlu0 %6621
        %6623 = vset.pattern.permute.xlu0 0
        %6624 = vperm.xlu0 %6623, %v6183
        %v6625 = vpop.permute.xlu0 %6624
        %6626 = vset.pattern.permute.xlu0 0
        %6627 = vperm.xlu0 %6626, %v6184
        %v6628 = vpop.permute.xlu0 %6627
        %6629 = vset.pattern.permute.xlu0 0
        %6630 = vperm.xlu0 %6629, %v6185
        %v6631 = vpop.permute.xlu0 %6630
        %6632 = vset.pattern.permute.xlu0 0
        %6633 = vperm.xlu0 %6632, %v6186
        %v6634 = vpop.permute.xlu0 %6633
        %6635 = vset.pattern.permute.xlu0 0
        %6636 = vperm.xlu0 %6635, %v6187
        %v6637 = vpop.permute.xlu0 %6636
        %6638 = vset.pattern.permute.xlu0 0
        %6639 = vperm.xlu0 %6638, %v6188
        %v6640 = vpop.permute.xlu0 %6639
        %6641 = vset.pattern.permute.xlu0 0
        %6642 = vperm.xlu0 %6641, %v6189
        %v6643 = vpop.permute.xlu0 %6642
        %6644 = vset.pattern.permute.xlu0 0
        %6645 = vperm.xlu0 %6644, %v6190
        %v6646 = vpop.permute.xlu0 %6645
        %6647 = vset.pattern.permute.xlu0 0
        %6648 = vperm.xlu0 %6647, %v6191
        %v6649 = vpop.permute.xlu0 %6648
        %6650 = vset.pattern.permute.xlu0 0
        %6651 = vperm.xlu0 %6650, %v6206
        %v6652 = vpop.permute.xlu0 %6651
        %6653 = vset.pattern.permute.xlu0 0
        %6654 = vperm.xlu0 %6653, %v6207
        %v6655 = vpop.permute.xlu0 %6654
        %6656 = vset.pattern.permute.xlu0 0
        %6657 = vperm.xlu0 %6656, %v6208
        %v6658 = vpop.permute.xlu0 %6657
        %6659 = vset.pattern.permute.xlu0 0
        %6660 = vperm.xlu0 %6659, %v6209
        %v6661 = vpop.permute.xlu0 %6660
        %6662 = vset.pattern.permute.xlu0 0
        %6663 = vperm.xlu0 %6662, %v6210
        %v6664 = vpop.permute.xlu0 %6663
        %6665 = vset.pattern.permute.xlu0 0
        %6666 = vperm.xlu0 %6665, %v6211
        %v6667 = vpop.permute.xlu0 %6666
        %6668 = vset.pattern.permute.xlu0 0
        %6669 = vperm.xlu0 %6668, %v6212
        %v6670 = vpop.permute.xlu0 %6669
        %6671 = vset.pattern.permute.xlu0 0
        %6672 = vperm.xlu0 %6671, %v6213
        %v6673 = vpop.permute.xlu0 %6672
        %6674 = vset.pattern.permute.xlu0 0
        %6675 = vperm.xlu0 %6674, %v6214
        %v6676 = vpop.permute.xlu0 %6675
        %6677 = vset.pattern.permute.xlu0 0
        %6678 = vperm.xlu0 %6677, %v6215
        %v6679 = vpop.permute.xlu0 %6678
        %6680 = vset.pattern.permute.xlu0 0
        %6681 = vperm.xlu0 %6680, %v6216
        %v6682 = vpop.permute.xlu0 %6681
        %6683 = vset.pattern.permute.xlu0 0
        %6684 = vperm.xlu0 %6683, %v6217
        %v6685 = vpop.permute.xlu0 %6684
        %6686 = vset.pattern.permute.xlu0 0
        %6687 = vperm.xlu0 %6686, %v6218
        %v6688 = vpop.permute.xlu0 %6687
        %6689 = vset.pattern.permute.xlu0 0
        %6690 = vperm.xlu0 %6689, %v6219
        %v6691 = vpop.permute.xlu0 %6690
        %6692 = vset.pattern.permute.xlu0 0
        %6693 = vperm.xlu0 %6692, %v6220
        %v6694 = vpop.permute.xlu0 %6693
        %6695 = vset.pattern.permute.xlu0 0
        %6696 = vperm.xlu0 %6695, %v6221
        %v6697 = vpop.permute.xlu0 %6696
        %6698 = vset.pattern.permute.xlu0 0
        %6699 = vperm.xlu0 %6698, %v6236
        %v6700 = vpop.permute.xlu0 %6699
        %6701 = vset.pattern.permute.xlu0 0
        %6702 = vperm.xlu0 %6701, %v6237
        %v6703 = vpop.permute.xlu0 %6702
        %6704 = vset.pattern.permute.xlu0 0
        %6705 = vperm.xlu0 %6704, %v6238
        %v6706 = vpop.permute.xlu0 %6705
        %6707 = vset.pattern.permute.xlu0 0
        %6708 = vperm.xlu0 %6707, %v6239
        %v6709 = vpop.permute.xlu0 %6708
        %6710 = vset.pattern.permute.xlu0 0
        %6711 = vperm.xlu0 %6710, %v6240
        %v6712 = vpop.permute.xlu0 %6711
        %6713 = vset.pattern.permute.xlu0 0
        %6714 = vperm.xlu0 %6713, %v6241
        %v6715 = vpop.permute.xlu0 %6714
        %6716 = vset.pattern.permute.xlu0 0
        %6717 = vperm.xlu0 %6716, %v6242
        %v6718 = vpop.permute.xlu0 %6717
        %6719 = vset.pattern.permute.xlu0 0
        %6720 = vperm.xlu0 %6719, %v6243
        %v6721 = vpop.permute.xlu0 %6720
        %6722 = vset.pattern.permute.xlu0 0
        %6723 = vperm.xlu0 %6722, %v6244
        %v6724 = vpop.permute.xlu0 %6723
        %6725 = vset.pattern.permute.xlu0 0
        %6726 = vperm.xlu0 %6725, %v6245
        %v6727 = vpop.permute.xlu0 %6726
        %6728 = vset.pattern.permute.xlu0 0
        %6729 = vperm.xlu0 %6728, %v6246
        %v6730 = vpop.permute.xlu0 %6729
        %6731 = vset.pattern.permute.xlu0 0
        %6732 = vperm.xlu0 %6731, %v6247
        %v6733 = vpop.permute.xlu0 %6732
        %6734 = vset.pattern.permute.xlu0 0
        %6735 = vperm.xlu0 %6734, %v6248
        %v6736 = vpop.permute.xlu0 %6735
        %6737 = vset.pattern.permute.xlu0 0
        %6738 = vperm.xlu0 %6737, %v6249
        %v6739 = vpop.permute.xlu0 %6738
        %6740 = vset.pattern.permute.xlu0 0
        %6741 = vperm.xlu0 %6740, %v6250
        %v6742 = vpop.permute.xlu0 %6741
        %6743 = vset.pattern.permute.xlu0 0
        %6744 = vperm.xlu0 %6743, %v6251
        %v6745 = vpop.permute.xlu0 %6744
        %6746 = vset.pattern.permute.xlu0 0
        %6747 = vperm.xlu0 %6746, %v6266
        %v6748 = vpop.permute.xlu0 %6747
        %6749 = vset.pattern.permute.xlu0 0
        %6750 = vperm.xlu0 %6749, %v6267
        %v6751 = vpop.permute.xlu0 %6750
        %6752 = vset.pattern.permute.xlu0 0
        %6753 = vperm.xlu0 %6752, %v6268
        %v6754 = vpop.permute.xlu0 %6753
        %6755 = vset.pattern.permute.xlu0 0
        %6756 = vperm.xlu0 %6755, %v6269
        %v6757 = vpop.permute.xlu0 %6756
        %6758 = vset.pattern.permute.xlu0 0
        %6759 = vperm.xlu0 %6758, %v6270
        %v6760 = vpop.permute.xlu0 %6759
        %6761 = vset.pattern.permute.xlu0 0
        %6762 = vperm.xlu0 %6761, %v6271
        %v6763 = vpop.permute.xlu0 %6762
        %6764 = vset.pattern.permute.xlu0 0
        %6765 = vperm.xlu0 %6764, %v6272
        %v6766 = vpop.permute.xlu0 %6765
        %6767 = vset.pattern.permute.xlu0 0
        %6768 = vperm.xlu0 %6767, %v6273
        %v6769 = vpop.permute.xlu0 %6768
        %6770 = vset.pattern.permute.xlu0 0
        %6771 = vperm.xlu0 %6770, %v6274
        %v6772 = vpop.permute.xlu0 %6771
        %6773 = vset.pattern.permute.xlu0 0
        %6774 = vperm.xlu0 %6773, %v6275
        %v6775 = vpop.permute.xlu0 %6774
        %6776 = vset.pattern.permute.xlu0 0
        %6777 = vperm.xlu0 %6776, %v6276
        %v6778 = vpop.permute.xlu0 %6777
        %6779 = vset.pattern.permute.xlu0 0
        %6780 = vperm.xlu0 %6779, %v6277
        %v6781 = vpop.permute.xlu0 %6780
        %6782 = vset.pattern.permute.xlu0 0
        %6783 = vperm.xlu0 %6782, %v6278
        %v6784 = vpop.permute.xlu0 %6783
        %6785 = vset.pattern.permute.xlu0 0
        %6786 = vperm.xlu0 %6785, %v6279
        %v6787 = vpop.permute.xlu0 %6786
        %6788 = vset.pattern.permute.xlu0 0
        %6789 = vperm.xlu0 %6788, %v6280
        %v6790 = vpop.permute.xlu0 %6789
        %6791 = vset.pattern.permute.xlu0 0
        %6792 = vperm.xlu0 %6791, %v6281
        %v6793 = vpop.permute.xlu0 %6792
        %v6794 = vperm.slane %v6412, %v1289
        %v6795 = vperm.slane %v6415, %v1291
        %v6796 = vsel %vm1293, %v6795, %v6794
        %v6797 = vperm.slane %v6418, %v1295
        %v6798 = vsel %vm1297, %v6797, %v6796
        %v6799 = vperm.slane %v6421, %v1299
        %v6800 = vsel %vm1301, %v6799, %v6798
        %v6801 = vperm.slane %v6424, %v1303
        %v6802 = vsel %vm1305, %v6801, %v6800
        %v6803 = vperm.slane %v6427, %v1307
        %v6804 = vsel %vm1309, %v6803, %v6802
        %v6805 = vperm.slane %v6430, %v1311
        %v6806 = vsel %vm1313, %v6805, %v6804
        %v6807 = vperm.slane %v6433, %v1315
        %v6808 = vsel %vm1317, %v6807, %v6806
        %v6809 = vperm.slane %v6436, %v1319
        %v6810 = vsel %vm1321, %v6809, %v6808
        %v6811 = vperm.slane %v6439, %v1323
        %v6812 = vsel %vm1325, %v6811, %v6810
        %v6813 = vperm.slane %v6442, %v1327
        %v6814 = vsel %vm1329, %v6813, %v6812
        %v6815 = vperm.slane %v6445, %v1331
        %v6816 = vsel %vm1333, %v6815, %v6814
        %v6817 = vperm.slane %v6448, %v1335
        %v6818 = vsel %vm1337, %v6817, %v6816
        %v6819 = vperm.slane %v6451, %v1339
        %v6820 = vsel %vm1341, %v6819, %v6818
        %v6821 = vperm.slane %v6454, %v1343
        %v6822 = vsel %vm1345, %v6821, %v6820
        %v6823 = vperm.slane %v6457, %v1347
        %v6824 = vsel %vm1349, %v6823, %v6822
        %v6825 = vperm.slane %v6460, %v1289
        %v6826 = vperm.slane %v6463, %v1291
        %v6827 = vsel %vm1293, %v6826, %v6825
        %v6828 = vperm.slane %v6466, %v1295
        %v6829 = vsel %vm1297, %v6828, %v6827
        %v6830 = vperm.slane %v6469, %v1299
        %v6831 = vsel %vm1301, %v6830, %v6829
        %v6832 = vperm.slane %v6472, %v1303
        %v6833 = vsel %vm1305, %v6832, %v6831
        %v6834 = vperm.slane %v6475, %v1307
        %v6835 = vsel %vm1309, %v6834, %v6833
        %v6836 = vperm.slane %v6478, %v1311
        %v6837 = vsel %vm1313, %v6836, %v6835
        %v6838 = vperm.slane %v6481, %v1315
        %v6839 = vsel %vm1317, %v6838, %v6837
        %v6840 = vperm.slane %v6484, %v1319
        %v6841 = vsel %vm1321, %v6840, %v6839
        %v6842 = vperm.slane %v6487, %v1323
        %v6843 = vsel %vm1325, %v6842, %v6841
        %v6844 = vperm.slane %v6490, %v1327
        %v6845 = vsel %vm1329, %v6844, %v6843
        %v6846 = vperm.slane %v6493, %v1331
        %v6847 = vsel %vm1333, %v6846, %v6845
        %v6848 = vperm.slane %v6496, %v1335
        %v6849 = vsel %vm1337, %v6848, %v6847
        %v6850 = vperm.slane %v6499, %v1339
        %v6851 = vsel %vm1341, %v6850, %v6849
        %v6852 = vperm.slane %v6502, %v1343
        %v6853 = vsel %vm1345, %v6852, %v6851
        %v6854 = vperm.slane %v6505, %v1347
        %v6855 = vsel %vm1349, %v6854, %v6853
        %v6856 = vperm.slane %v6508, %v1289
        %v6857 = vperm.slane %v6511, %v1291
        %v6858 = vsel %vm1293, %v6857, %v6856
        %v6859 = vperm.slane %v6514, %v1295
        %v6860 = vsel %vm1297, %v6859, %v6858
        %v6861 = vperm.slane %v6517, %v1299
        %v6862 = vsel %vm1301, %v6861, %v6860
        %v6863 = vperm.slane %v6520, %v1303
        %v6864 = vsel %vm1305, %v6863, %v6862
        %v6865 = vperm.slane %v6523, %v1307
        %v6866 = vsel %vm1309, %v6865, %v6864
        %v6867 = vperm.slane %v6526, %v1311
        %v6868 = vsel %vm1313, %v6867, %v6866
        %v6869 = vperm.slane %v6529, %v1315
        %v6870 = vsel %vm1317, %v6869, %v6868
        %v6871 = vperm.slane %v6532, %v1319
        %v6872 = vsel %vm1321, %v6871, %v6870
        %v6873 = vperm.slane %v6535, %v1323
        %v6874 = vsel %vm1325, %v6873, %v6872
        %v6875 = vperm.slane %v6538, %v1327
        %v6876 = vsel %vm1329, %v6875, %v6874
        %v6877 = vperm.slane %v6541, %v1331
        %v6878 = vsel %vm1333, %v6877, %v6876
        %v6879 = vperm.slane %v6544, %v1335
        %v6880 = vsel %vm1337, %v6879, %v6878
        %v6881 = vperm.slane %v6547, %v1339
        %v6882 = vsel %vm1341, %v6881, %v6880
        %v6883 = vperm.slane %v6550, %v1343
        %v6884 = vsel %vm1345, %v6883, %v6882
        %v6885 = vperm.slane %v6553, %v1347
        %v6886 = vsel %vm1349, %v6885, %v6884
        %v6887 = vperm.slane %v6556, %v1289
        %v6888 = vperm.slane %v6559, %v1291
        %v6889 = vsel %vm1293, %v6888, %v6887
        %v6890 = vperm.slane %v6562, %v1295
        %v6891 = vsel %vm1297, %v6890, %v6889
        %v6892 = vperm.slane %v6565, %v1299
        %v6893 = vsel %vm1301, %v6892, %v6891
        %v6894 = vperm.slane %v6568, %v1303
        %v6895 = vsel %vm1305, %v6894, %v6893
        %v6896 = vperm.slane %v6571, %v1307
        %v6897 = vsel %vm1309, %v6896, %v6895
        %v6898 = vperm.slane %v6574, %v1311
        %v6899 = vsel %vm1313, %v6898, %v6897
        %v6900 = vperm.slane %v6577, %v1315
        %v6901 = vsel %vm1317, %v6900, %v6899
        %v6902 = vperm.slane %v6580, %v1319
        %v6903 = vsel %vm1321, %v6902, %v6901
        %v6904 = vperm.slane %v6583, %v1323
        %v6905 = vsel %vm1325, %v6904, %v6903
        %v6906 = vperm.slane %v6586, %v1327
        %v6907 = vsel %vm1329, %v6906, %v6905
        %v6908 = vperm.slane %v6589, %v1331
        %v6909 = vsel %vm1333, %v6908, %v6907
        %v6910 = vperm.slane %v6592, %v1335
        %v6911 = vsel %vm1337, %v6910, %v6909
        %v6912 = vperm.slane %v6595, %v1339
        %v6913 = vsel %vm1341, %v6912, %v6911
        %v6914 = vperm.slane %v6598, %v1343
        %v6915 = vsel %vm1345, %v6914, %v6913
        %v6916 = vperm.slane %v6601, %v1347
        %v6917 = vsel %vm1349, %v6916, %v6915
        %v6918 = vperm.slane %v6604, %v1289
        %v6919 = vperm.slane %v6607, %v1291
        %v6920 = vsel %vm1293, %v6919, %v6918
        %v6921 = vperm.slane %v6610, %v1295
        %v6922 = vsel %vm1297, %v6921, %v6920
        %v6923 = vperm.slane %v6613, %v1299
        %v6924 = vsel %vm1301, %v6923, %v6922
        %v6925 = vperm.slane %v6616, %v1303
        %v6926 = vsel %vm1305, %v6925, %v6924
        %v6927 = vperm.slane %v6619, %v1307
        %v6928 = vsel %vm1309, %v6927, %v6926
        %v6929 = vperm.slane %v6622, %v1311
        %v6930 = vsel %vm1313, %v6929, %v6928
        %v6931 = vperm.slane %v6625, %v1315
        %v6932 = vsel %vm1317, %v6931, %v6930
        %v6933 = vperm.slane %v6628, %v1319
        %v6934 = vsel %vm1321, %v6933, %v6932
        %v6935 = vperm.slane %v6631, %v1323
        %v6936 = vsel %vm1325, %v6935, %v6934
        %v6937 = vperm.slane %v6634, %v1327
        %v6938 = vsel %vm1329, %v6937, %v6936
        %v6939 = vperm.slane %v6637, %v1331
        %v6940 = vsel %vm1333, %v6939, %v6938
        %v6941 = vperm.slane %v6640, %v1335
        %v6942 = vsel %vm1337, %v6941, %v6940
        %v6943 = vperm.slane %v6643, %v1339
        %v6944 = vsel %vm1341, %v6943, %v6942
        %v6945 = vperm.slane %v6646, %v1343
        %v6946 = vsel %vm1345, %v6945, %v6944
        %v6947 = vperm.slane %v6649, %v1347
        %v6948 = vsel %vm1349, %v6947, %v6946
        %v6949 = vperm.slane %v6652, %v1289
        %v6950 = vperm.slane %v6655, %v1291
        %v6951 = vsel %vm1293, %v6950, %v6949
        %v6952 = vperm.slane %v6658, %v1295
        %v6953 = vsel %vm1297, %v6952, %v6951
        %v6954 = vperm.slane %v6661, %v1299
        %v6955 = vsel %vm1301, %v6954, %v6953
        %v6956 = vperm.slane %v6664, %v1303
        %v6957 = vsel %vm1305, %v6956, %v6955
        %v6958 = vperm.slane %v6667, %v1307
        %v6959 = vsel %vm1309, %v6958, %v6957
        %v6960 = vperm.slane %v6670, %v1311
        %v6961 = vsel %vm1313, %v6960, %v6959
        %v6962 = vperm.slane %v6673, %v1315
        %v6963 = vsel %vm1317, %v6962, %v6961
        %v6964 = vperm.slane %v6676, %v1319
        %v6965 = vsel %vm1321, %v6964, %v6963
        %v6966 = vperm.slane %v6679, %v1323
        %v6967 = vsel %vm1325, %v6966, %v6965
        %v6968 = vperm.slane %v6682, %v1327
        %v6969 = vsel %vm1329, %v6968, %v6967
        %v6970 = vperm.slane %v6685, %v1331
        %v6971 = vsel %vm1333, %v6970, %v6969
        %v6972 = vperm.slane %v6688, %v1335
        %v6973 = vsel %vm1337, %v6972, %v6971
        %v6974 = vperm.slane %v6691, %v1339
        %v6975 = vsel %vm1341, %v6974, %v6973
        %v6976 = vperm.slane %v6694, %v1343
        %v6977 = vsel %vm1345, %v6976, %v6975
        %v6978 = vperm.slane %v6697, %v1347
        %v6979 = vsel %vm1349, %v6978, %v6977
        %v6980 = vperm.slane %v6700, %v1289
        %v6981 = vperm.slane %v6703, %v1291
        %v6982 = vsel %vm1293, %v6981, %v6980
        %v6983 = vperm.slane %v6706, %v1295
        %v6984 = vsel %vm1297, %v6983, %v6982
        %v6985 = vperm.slane %v6709, %v1299
        %v6986 = vsel %vm1301, %v6985, %v6984
        %v6987 = vperm.slane %v6712, %v1303
        %v6988 = vsel %vm1305, %v6987, %v6986
        %v6989 = vperm.slane %v6715, %v1307
        %v6990 = vsel %vm1309, %v6989, %v6988
        %v6991 = vperm.slane %v6718, %v1311
        %v6992 = vsel %vm1313, %v6991, %v6990
        %v6993 = vperm.slane %v6721, %v1315
        %v6994 = vsel %vm1317, %v6993, %v6992
        %v6995 = vperm.slane %v6724, %v1319
        %v6996 = vsel %vm1321, %v6995, %v6994
        %v6997 = vperm.slane %v6727, %v1323
        %v6998 = vsel %vm1325, %v6997, %v6996
        %v6999 = vperm.slane %v6730, %v1327
        %v7000 = vsel %vm1329, %v6999, %v6998
        %v7001 = vperm.slane %v6733, %v1331
        %v7002 = vsel %vm1333, %v7001, %v7000
        %v7003 = vperm.slane %v6736, %v1335
        %v7004 = vsel %vm1337, %v7003, %v7002
        %v7005 = vperm.slane %v6739, %v1339
        %v7006 = vsel %vm1341, %v7005, %v7004
        %v7007 = vperm.slane %v6742, %v1343
        %v7008 = vsel %vm1345, %v7007, %v7006
        %v7009 = vperm.slane %v6745, %v1347
        %v7010 = vsel %vm1349, %v7009, %v7008
        %v7011 = vperm.slane %v6748, %v1289
        %v7012 = vperm.slane %v6751, %v1291
        %v7013 = vsel %vm1293, %v7012, %v7011
        %v7014 = vperm.slane %v6754, %v1295
        %v7015 = vsel %vm1297, %v7014, %v7013
        %v7016 = vperm.slane %v6757, %v1299
        %v7017 = vsel %vm1301, %v7016, %v7015
        %v7018 = vperm.slane %v6760, %v1303
        %v7019 = vsel %vm1305, %v7018, %v7017
        %v7020 = vperm.slane %v6763, %v1307
        %v7021 = vsel %vm1309, %v7020, %v7019
        %v7022 = vperm.slane %v6766, %v1311
        %v7023 = vsel %vm1313, %v7022, %v7021
        %v7024 = vperm.slane %v6769, %v1315
        %v7025 = vsel %vm1317, %v7024, %v7023
        %v7026 = vperm.slane %v6772, %v1319
        %v7027 = vsel %vm1321, %v7026, %v7025
        %v7028 = vperm.slane %v6775, %v1323
        %v7029 = vsel %vm1325, %v7028, %v7027
        %v7030 = vperm.slane %v6778, %v1327
        %v7031 = vsel %vm1329, %v7030, %v7029
        %v7032 = vperm.slane %v6781, %v1331
        %v7033 = vsel %vm1333, %v7032, %v7031
        %v7034 = vperm.slane %v6784, %v1335
        %v7035 = vsel %vm1337, %v7034, %v7033
        %v7036 = vperm.slane %v6787, %v1339
        %v7037 = vsel %vm1341, %v7036, %v7035
        %v7038 = vperm.slane %v6790, %v1343
        %v7039 = vsel %vm1345, %v7038, %v7037
        %v7040 = vperm.slane %v6793, %v1347
        %v7041 = vsel %vm1349, %v7040, %v7039
        %v7042 = vsel %vm1568, %v6855, %v6824
        %v7043 = vsel %vm1570, %v6886, %v7042
        %v7044 = vsel %vm1572, %v6917, %v7043
        %v7045 = vsel %vm1574, %v6948, %v7044
        %v7046 = vsel %vm1576, %v6979, %v7045
        %v7047 = vsel %vm1578, %v7010, %v7046
        %v7048 = vsel %vm1580, %v7041, %v7047
        %s7050 = scalar_lea.vmem %s290, 8 [#allocation4]
        %7051 = vst [vmem:[%s7050] sm:$0xff] %v7048
        %v7052 = vld [vmem:[%s290] sm:$0xff]
        %v7053 = vld [vmem:[%s290 + $0x8] sm:$0xff]
        %v7054 = vld [vmem:[%s302] sm:$0xff]
        %v7055 = vld [vmem:[%s302 + $0x8] sm:$0xff]
        %v7056 = vld [vmem:[%s302 + $0x10] sm:$0xff]
        %v7057 = vld [vmem:[%s302 + $0x18] sm:$0xff]
        %v7058 = vld [vmem:[%s302 + $0x20] sm:$0xff]
        %v7059 = vld [vmem:[%s302 + $0x28] sm:$0xff]
        %v7060 = vld [vmem:[%s302 + $0x30] sm:$0xff]
        %v7061 = vld [vmem:[%s302 + $0x38] sm:$0xff]
        %v7062 = vld [vmem:[%s302 + $0x40] sm:$0xff]
        %v7063 = vld [vmem:[%s302 + $0x48] sm:$0xff]
        %v7064 = vld [vmem:[%s302 + $0x50] sm:$0xff]
        %v7065 = vld [vmem:[%s302 + $0x58] sm:$0xff]
        %v7066 = vld [vmem:[%s302 + $0x60] sm:$0xff]
        %v7067 = vld [vmem:[%s302 + $0x68] sm:$0xff]
        %v7068 = vld [vmem:[%s302 + $0x70] sm:$0xff]
        %v7069 = vld [vmem:[%s302 + $0x78] sm:$0xff]
        %7070 = vmatpush.msra.mxu0 %v7069
        %7071 = vmatpush.msra.mxu0 %v7068
        %7072 = vmatpush.msra.mxu0 %v7067
        %7073 = vmatpush.msra.mxu0 %v7066
        %7074 = vmatpush.msra.mxu0 %v7065
        %7075 = vmatpush.msra.mxu0 %v7064
        %7076 = vmatpush.msra.mxu0 %v7063
        %7077 = vmatpush.msra.mxu0 %v7062
        %7078 = vmatpush.msra.mxu0 %v7061
        %7079 = vmatpush.msra.mxu0 %v7060
        %7080 = vmatpush.msra.mxu0 %v7059
        %7081 = vmatpush.msra.mxu0 %v7058
        %7082 = vmatpush.msra.mxu0 %v7057
        %7083 = vmatpush.msra.mxu0 %v7056
        %7084 = vmatpush.msra.mxu0 %v7055
        %7085 = vmatpush.msra.mxu0 %v7054
        %7086 = vmatmul.f32.gmra.mxu0 %v7052
        %v7087 = vpop.f32.mrf.mxu0
        %v7088 = vadd.f32 0.0, %v7087
        %7089 = vmatmul.f32.gmra.mxu0 %v7053
        %v7090 = vpop.f32.mrf.mxu0
        %v7091 = vadd.f32 0.0, %v7090
        %7092 = vdwg.mxu0
        %7093 = vst [vmem:[%s297] sm:$0xff] %v7088
        %7094 = vst [vmem:[%s297 + $0x8] sm:$0xff] %v7091
        %s7095 = sand.u32 %s163, 1
        %s7096 = scalar_lea.sflag [#allocation5], %s7095
        %s7097 = sand.u32 %s163, 1
        %s7098 = smul.addr %s7097, 16
        %s7099 = scalar_lea.vmem [#allocation4], %s7098
        %s7100 = sand.u32 %s191, 1
        %s7101 = scalar_lea.sflag [#allocation7], %s7100
        %s7102 = sand.u32 %s191, 1
        %s7103 = smul.addr %s7102, 16
        %s7104 = scalar_lea.vmem [#allocation6], %s7103
        // Predicated region
        $region45: #{low_rank_bilinear_attention.1} parent=39 // pred_check
          %p7105 = pneg %p173
        $region46: #{low_rank_bilinear_attention.1} parent=39 // pred_check_branch
          %7107 = sbr.rel (%p7105) target = $region48
        $region47: #{low_rank_bilinear_attention.1} parent=39 // pred_region
          %s7108 = smul.u32 2, %s29
          %7110 = vsyncadd %s7096, 0
          %s7111 = smul.addr %s28, 2
          %s7112 = sadd.s32 %s7108, %s7111
          %s7113 = smul.addr %s7112, 8
          %s7114 = scalar_lea.hbm %s5, %s7113
          %s7115 = sshll.u32 %s7099, 4
          %s7116 = int_to_ptr.vmem [resolvable:$true] %s7115
          %s7117 = sshll.u32 %s7114, 4
          %s7118 = int_to_ptr.hbm [resolvable:$true] %s7117
          %7123 = dma.vmem_to_hbm [thread:$0]  %s7116, 256, %s7118, %s7096, 128, 128, 8
        $region48: #{low_rank_bilinear_attention.1} parent=39 // pred_fallthru
          _
        // Predicated region
        $region49: #{low_rank_bilinear_attention.1} parent=39 // pred_check
          %p7124 = pneg %p201
        $region50: #{low_rank_bilinear_attention.1} parent=39 // pred_check_branch
          %7126 = sbr.rel (%p7124) target = $region52
        $region51: #{low_rank_bilinear_attention.1} parent=39 // pred_region
          %s7127 = smul.u32 2, %s29
          %7129 = vsyncadd %s7101, 0
          %s7130 = smul.addr %s28, 2
          %s7131 = sadd.s32 %s7127, %s7130
          %s7132 = smul.addr %s7131, 8
          %s7133 = scalar_lea.hbm %s6, %s7132
          %s7134 = sshll.u32 %s7104, 4
          %s7135 = int_to_ptr.vmem [resolvable:$true] %s7134
          %s7136 = sshll.u32 %s7133, 4
          %s7137 = int_to_ptr.hbm [resolvable:$true] %s7136
          %7142 = dma.vmem_to_hbm [thread:$0]  %s7135, 256, %s7137, %s7101, 128, 128, 8
        $region52: #{low_rank_bilinear_attention.1} parent=39 // pred_fallthru
          _
      $region40: #{low_rank_bilinear_attention.1} parent=5 // pred_fallthru
        _
      %p7143 = scmp.le.s32.totalorder 2, %s19
      // Predicated region
      $region53: #{low_rank_bilinear_attention.1} parent=5 // pred_check
        %p7144 = pneg %p7143
      $region54: #{low_rank_bilinear_attention.1} parent=5 // pred_check_branch
        %7146 = sbr.rel (%p7144) target = $region56
      $region55: #{low_rank_bilinear_attention.1} parent=5 // pred_region
        %s7147 = ssub.s32 %s19, 2
        // Predicated region
        $region57: #{low_rank_bilinear_attention.1} parent=55 // pred_check
          %p7148 = pneg %p179
        $region58: #{low_rank_bilinear_attention.1} parent=55 // pred_check_branch
          %7150 = sbr.rel (%p7148) target = $region60
        $region59: #{low_rank_bilinear_attention.1} parent=55 // pred_region
          %s7151 = sand.u32 %s164, 1
          %s7152 = scalar_lea.sflag [#allocation5], %s7151
          %s7153 = sand.u32 %s164, 1
          %s7154 = smul.addr %s7153, 16
          %s7155 = scalar_lea.vmem [#allocation4], %s7154
          %7157 = dma.done %s7152, 256
        $region60: #{low_rank_bilinear_attention.1} parent=55 // pred_fallthru
          _
        // Predicated region
        $region61: #{low_rank_bilinear_attention.1} parent=55 // pred_check
          %p7158 = pneg %p207
        $region62: #{low_rank_bilinear_attention.1} parent=55 // pred_check_branch
          %7160 = sbr.rel (%p7158) target = $region64
        $region63: #{low_rank_bilinear_attention.1} parent=55 // pred_region
          %s7161 = sand.u32 %s192, 1
          %s7162 = scalar_lea.sflag [#allocation7], %s7161
          %s7163 = sand.u32 %s192, 1
          %s7164 = smul.addr %s7163, 16
          %s7165 = scalar_lea.vmem [#allocation6], %s7164
          %7167 = dma.done %s7162, 256
        $region64: #{low_rank_bilinear_attention.1} parent=55 // pred_fallthru
          _
      $region56: #{low_rank_bilinear_attention.1} parent=5 // pred_fallthru
        _
    $region6: #{low_rank_bilinear_attention.1} parent=1 // loop_footer
      %s23 = sadd.s32 1, %s19
    $region7: #{low_rank_bilinear_attention.1} parent=1 // loop_footer_branch
      %18 = sbr.rel target = $region3
    $region8: #{low_rank_bilinear_attention.1} parent=1 // loop_exit
      _
    %7168 = vsyncpa [#allocation5], 1
    %s7169 = scalar_lea.sflag [#allocation5], 1
    %7170 = vsyncpa %s7169, 1
    %7171 = vsyncpa [#allocation7], 1
    %s7172 = scalar_lea.sflag [#allocation7], 1
    %7173 = vsyncpa %s7172, 1

</llo_original>
